<compile_context>
chip_gen: v7x
topology: tpu7x:2x2x1
jax: 0.10.0
libtpu: 0.0.40
codegen_flags: <defaults>
</compile_context>

<pallas_src>
import functools

import jax
import jax.numpy as jnp
from jax import lax
from jax.experimental import pallas as pl
from jax.experimental.pallas import tpu as pltpu


# ------------------------------ fused kernel ------------------------------- #

def _lstm_cell(g, c_prev, H):
    """PyTorch gate order (i, f, g, o); all elementwise math in f32."""
    i_g = jax.nn.sigmoid(g[:, 0 * H:1 * H])
    f_g = jax.nn.sigmoid(g[:, 1 * H:2 * H])
    g_g = jnp.tanh(g[:, 2 * H:3 * H])
    o_g = jax.nn.sigmoid(g[:, 3 * H:4 * H])
    c_new = f_g * c_prev + i_g * g_g
    h_new = o_g * jnp.tanh(c_new)
    return h_new, c_new


def emojifier_kernel(*refs, seq_len, batch, hidden_dim, num_layers):
    """Fused embedding + stacked-LSTM wavefront + FC.

    refs (in order):
      tok_ref:  (T*B, V_pad)            i32  token ids, lane-broadcast
      emb_ref:  (V_pad, E_pad)          bf16 embedding table (zero padded)
      wih0_ref: (E_pad, 4H)             bf16 layer-0 input->gates (pre-transposed)
      wihL_ref: (L-1, H, 4H)            bf16 layers 1..L-1 input->gates  [L > 1]
      whh_ref:  (L, H, 4H)              bf16 hidden->gates
      b_ref:    (L, 1, 4H)              f32  combined bias (b_ih + b_hh)
      fcw_ref:  (H, O_pad)              bf16 FC weights (zero padded)
      fcb_ref:  (1, O_pad)              f32  FC bias
      out_ref:  (B, O_pad)              f32  logits (lane-dense store)
      gx_ref:   (T*B, 4H)               f32  VMEM scratch, layer-0 input proj
    """
    refs = list(refs)
    tok_ref = refs.pop(0)
    emb_ref = refs.pop(0)
    wih0_ref = refs.pop(0)
    wihL_ref = refs.pop(0) if num_layers > 1 else None
    whh_ref, b_ref, fcw_ref, fcb_ref, out_ref, gx_ref = refs

    T, B, H, L = seq_len, batch, hidden_dim, num_layers
    V = tok_ref.shape[1]

    # --- embedding gather as one-hot MXU matmul (lane-dense i32 compare) ----
    vidx = lax.broadcasted_iota(jnp.int32, (T * B, V), 1)
    onehot = (vidx == tok_ref[...]).astype(jnp.bfloat16)          # (T*B, V)
    x = jnp.dot(onehot, emb_ref[...],
                preferred_element_type=jnp.float32
                ).astype(jnp.bfloat16)                            # (T*B, E_pad)

    # --- layer-0 input projection: off the recurrent path, into VMEM scratch -
    gx_ref[...] = jnp.dot(x, wih0_ref[...],
                          preferred_element_type=jnp.float32) + b_ref[0]

    h = [jnp.zeros((B, H), jnp.float32) for _ in range(L)]
    c = [jnp.zeros((B, H), jnp.float32) for _ in range(L)]

    # --- wavefront over (t, layer); T and L are static -> fully unrolled -----
    for t in range(T):
        # Layer 0: accumulate-form gate math (dot result added to gx slice).
        g0 = gx_ref[pl.ds(t * B, B), :] + jnp.dot(
            h[0].astype(jnp.bfloat16), whh_ref[0],
            preferred_element_type=jnp.float32)
        h[0], c[0] = _lstm_cell(g0, c[0], H)

        # Layers 1..L-1 consume h_{l-1,t} immediately (per-step input proj).
        for l in range(1, L):
            g = (jnp.dot(h[l - 1].astype(jnp.bfloat16), wihL_ref[l - 1],
                         preferred_element_type=jnp.float32)
                 + jnp.dot(h[l].astype(jnp.bfloat16), whh_ref[l],
                           preferred_element_type=jnp.float32)
                 + b_ref[l])
            h[l], c[l] = _lstm_cell(g, c[l], H)

    # --- FC on last timestep of top layer; single lane-dense HBM store ------
    out_ref[...] = jnp.dot(h[L - 1].astype(jnp.bfloat16), fcw_ref[...],
                           preferred_element_type=jnp.float32) + fcb_ref[...]


# -------------------------------- wrapper ----------------------------------- #

def _round_up(x, m):
    return ((x + m - 1) // m) * m


@functools.partial(jax.jit, static_argnames=("hidden_dim", "output_dim"))
def emojifier_forward(tokens, params, *, hidden_dim, output_dim):
    B, T = tokens.shape
    emb = params["embedding"]
    V, E = emb.shape
    L = len(params["lstm"])
    H = hidden_dim
    O = output_dim

    B_pad = _round_up(B, 8)
    V_pad = _round_up(V, 128)
    E_pad = _round_up(E, 128)
    O_pad = _round_up(O, 128)

    # Time-major padded token ids, broadcast across lanes (lane-dense block).
    tok_p = jnp.zeros((B_pad, T), jnp.int32).at[:B].set(tokens.astype(jnp.int32))
    tok_tm = jnp.transpose(tok_p, (1, 0)).reshape(T * B_pad, 1)
    tok_b = jnp.broadcast_to(tok_tm, (T * B_pad, V_pad))

    # bf16 matmul operands (MXU-native on v5e/v6e/v7x); biases stay f32.
    emb_p = jnp.zeros((V_pad, E_pad), jnp.bfloat16).at[:V, :E].set(
        emb.astype(jnp.bfloat16))
    wih0 = jnp.zeros((E_pad, 4 * H), jnp.bfloat16).at[:E].set(
        params["lstm"][0]["w_ih"].astype(jnp.bfloat16))
    whh = jnp.stack([params["lstm"][l]["w_hh"] for l in range(L)]
                    ).astype(jnp.bfloat16)                            # (L,H,4H)
    bias = jnp.stack([params["lstm"][l]["b"] for l in range(L)])      # (L,1,4H)
    fcw = jnp.zeros((H, O_pad), jnp.bfloat16).at[:, :O].set(
        params["fc_w"].astype(jnp.bfloat16))
    fcb = jnp.zeros((1, O_pad), jnp.float32).at[:, :O].set(params["fc_b"])

    inputs = [tok_b, emb_p, wih0]
    if L > 1:
        wihL = jnp.stack([params["lstm"][l]["w_ih"] for l in range(1, L)]
                         ).astype(jnp.bfloat16)                       # (L-1,H,4H)
        inputs.append(wihL)
    inputs += [whh, bias, fcw, fcb]

    kernel = functools.partial(
        emojifier_kernel, seq_len=T, batch=B_pad, hidden_dim=H, num_layers=L)

    out = pl.pallas_call(
        kernel,
        out_shape=jax.ShapeDtypeStruct((B_pad, O_pad), jnp.float32),
        in_specs=[pl.BlockSpec(memory_space=pltpu.MemorySpace.VMEM)] * len(inputs),
        out_specs=pl.BlockSpec(memory_space=pltpu.MemorySpace.VMEM),
        scratch_shapes=[pltpu.VMEM((T * B_pad, 4 * H), jnp.float32)],
    )(*inputs)

    return out[:B, :O]


# ------------------------- deterministic parameters ------------------------ #

def init_params(key, vocab_len, emb_dim, hidden_dim, layer_dim, output_dim):
    keys = jax.random.split(key, 3 + 4 * layer_dim)
    k_iter = iter(keys)

    # Frozen embedding "emb_matrix" (synthetic, deterministic).
    embedding = jax.random.normal(next(k_iter), (vocab_len, emb_dim),
                                  dtype=jnp.float32)

    bound = 1.0 / jnp.sqrt(jnp.float32(hidden_dim))
    lstm_layers = []
    for layer in range(layer_dim):
        in_dim = emb_dim if layer == 0 else hidden_dim
        # PyTorch stores (4H, in) / (4H, H); pre-transposed here for x @ W.
        w_ih = jax.random.uniform(next(k_iter), (in_dim, 4 * hidden_dim),
                                  minval=-bound, maxval=bound, dtype=jnp.float32)
        w_hh = jax.random.uniform(next(k_iter), (hidden_dim, 4 * hidden_dim),
                                  minval=-bound, maxval=bound, dtype=jnp.float32)
        b_ih = jax.random.uniform(next(k_iter), (1, 4 * hidden_dim),
                                  minval=-bound, maxval=bound, dtype=jnp.float32)
        b_hh = jax.random.uniform(next(k_iter), (1, 4 * hidden_dim),
                                  minval=-bound, maxval=bound, dtype=jnp.float32)
        lstm_layers.append({"w_ih": w_ih, "w_hh": w_hh, "b": b_ih + b_hh})

    fc_w = jax.random.uniform(next(k_iter), (hidden_dim, output_dim),
                              minval=-bound, maxval=bound, dtype=jnp.float32)
    fc_b = jax.random.uniform(next(k_iter), (1, output_dim),
                              minval=-bound, maxval=bound, dtype=jnp.float32)

    return {"embedding": embedding, "lstm": lstm_layers,
            "fc_w": fc_w, "fc_b": fc_b}


# ---------------------------------- main ----------------------------------- #

if __name__ == "__main__":
    BATCH = 2
    SEQ = 8
    VOCAB_LEN = 50
    EMB_DIM = 32
    HIDDEN_DIM = 128       # module default; lane-aligned gate slices
    LAYER_DIM = 2
    OUTPUT_DIM = 5

    key = jax.random.PRNGKey(0)
    k_tok, k_par = jax.random.split(key)

    tokens = jax.random.randint(k_tok, (BATCH, SEQ), 0, VOCAB_LEN,
                                dtype=jnp.int32)
    params = init_params(k_par, VOCAB_LEN, EMB_DIM, HIDDEN_DIM,
                         LAYER_DIM, OUTPUT_DIM)

    logits = emojifier_forward(tokens, params,
                               hidden_dim=HIDDEN_DIM, output_dim=OUTPUT_DIM)
    logits = jax.block_until_ready(logits)

    assert logits.shape == (BATCH, OUTPUT_DIM)
    assert logits.dtype == jnp.float32
    assert bool(jnp.all(jnp.isfinite(logits)))
    print("KERNEL_OK")
</pallas_src>

<mosaic_0001>
module attributes {stable_mosaic.version = 11 : i64} {
  func.func @emojifier_kernel(%arg0: memref<64x128xi32, #tpu.memory_space<vmem>>, %arg1: memref<128x128xbf16, #tpu.memory_space<vmem>>, %arg2: memref<128x512xbf16, #tpu.memory_space<vmem>>, %arg3: memref<1x128x512xbf16, #tpu.memory_space<vmem>>, %arg4: memref<2x128x512xbf16, #tpu.memory_space<vmem>>, %arg5: memref<2x1x512xf32, #tpu.memory_space<vmem>>, %arg6: memref<128x128xbf16, #tpu.memory_space<vmem>>, %arg7: memref<1x128xf32, #tpu.memory_space<vmem>>, %arg8: memref<8x128xf32, #tpu.memory_space<vmem>>, %arg9: memref<64x512xf32, #tpu.memory_space<vmem>>) attributes {dimension_semantics = [], scalar_prefetch = 0 : i64, scratch_operands = 1 : i64, tpu.core_type = #tpu.core_type<tc>} {
    %0 = tpu.iota {dimensions = array<i32: 1>} : vector<64x128xi32>
    %c0 = arith.constant 0 : index
    %c0_0 = arith.constant 0 : index
    %1 = vector.load %arg0[%c0, %c0_0] : memref<64x128xi32, #tpu.memory_space<vmem>>, vector<64x128xi32>
    %2 = arith.cmpi eq, %0, %1 : vector<64x128xi32>
    %3 = arith.extui %2 : vector<64x128xi1> to vector<64x128xi32>
    %4 = arith.sitofp %3 : vector<64x128xi32> to vector<64x128xf32>
    %5 = arith.truncf %4 : vector<64x128xf32> to vector<64x128xbf16>
    %c0_1 = arith.constant 0 : index
    %c0_2 = arith.constant 0 : index
    %6 = vector.load %arg1[%c0_1, %c0_2] : memref<128x128xbf16, #tpu.memory_space<vmem>>, vector<128x128xbf16>
    %cst = arith.constant dense<0.000000e+00> : vector<64x128xf32>
    %7 = tpu.matmul %5, %6, %cst {dimension_numbers = #tpu.dot_dimension_numbers<[1], [0], [0], [1], [0, 0, 1, 1], [], []>} : vector<64x128xbf16>, vector<128x128xbf16>, vector<64x128xf32> -> vector<64x128xf32>
    %8 = arith.truncf %7 : vector<64x128xf32> to vector<64x128xbf16>
    %c0_3 = arith.constant 0 : index
    %c0_4 = arith.constant 0 : index
    %9 = vector.load %arg2[%c0_3, %c0_4] : memref<128x512xbf16, #tpu.memory_space<vmem>>, vector<128x512xbf16>
    %cst_5 = arith.constant dense<0.000000e+00> : vector<64x512xf32>
    %10 = tpu.matmul %8, %9, %cst_5 {dimension_numbers = #tpu.dot_dimension_numbers<[1], [0], [0], [1], [0, 0, 1, 1], [], []>} : vector<64x128xbf16>, vector<128x512xbf16>, vector<64x512xf32> -> vector<64x512xf32>
    %c0_6 = arith.constant 0 : index
    %c0_7 = arith.constant 0 : index
    %c0_8 = arith.constant 0 : index
    %11 = vector.load %arg5[%c0_6, %c0_7, %c0_8] : memref<2x1x512xf32, #tpu.memory_space<vmem>>, vector<1x1x512xf32>
    %12 = vector.shape_cast %11 : vector<1x1x512xf32> to vector<1x512xf32>
    %13 = vector.broadcast %12 : vector<1x512xf32> to vector<64x512xf32>
    %14 = arith.addf %10, %13 : vector<64x512xf32>
    %c0_9 = arith.constant 0 : index
    %c0_10 = arith.constant 0 : index
    %15 = vector.load %arg9[%c0_9, %c0_10] : memref<64x512xf32, #tpu.memory_space<vmem>>, vector<64x512xf32>
    tpu.vector_store %arg9[%c0_9, %c0_10], %14 {strides = array<i32>} : memref<64x512xf32, #tpu.memory_space<vmem>>, vector<64x512xf32>,
    %cst_11 = arith.constant 0.000000e+00 : f32
    %16 = vector.broadcast %cst_11 : f32 to vector<8x128xf32>
    %cst_12 = arith.constant 0.000000e+00 : f32
    %17 = vector.broadcast %cst_12 : f32 to vector<8x128xf32>
    %cst_13 = arith.constant 0.000000e+00 : f32
    %18 = vector.broadcast %cst_13 : f32 to vector<8x128xf32>
    %cst_14 = arith.constant 0.000000e+00 : f32
    %19 = vector.broadcast %cst_14 : f32 to vector<8x128xf32>
    %c0_15 = arith.constant 0 : index
    %c0_16 = arith.constant 0 : index
    %20 = vector.load %arg9[%c0_15, %c0_16] : memref<64x512xf32, #tpu.memory_space<vmem>>, vector<8x512xf32>
    %21 = arith.truncf %16 : vector<8x128xf32> to vector<8x128xbf16>
    %c0_17 = arith.constant 0 : index
    %c0_18 = arith.constant 0 : index
    %c0_19 = arith.constant 0 : index
    %22 = vector.load %arg4[%c0_17, %c0_18, %c0_19] : memref<2x128x512xbf16, #tpu.memory_space<vmem>>, vector<1x128x512xbf16>
    %23 = vector.shape_cast %22 : vector<1x128x512xbf16> to vector<128x512xbf16>
    %cst_20 = arith.constant dense<0.000000e+00> : vector<8x512xf32>
    %24 = tpu.matmul %21, %23, %cst_20 {dimension_numbers = #tpu.dot_dimension_numbers<[1], [0], [0], [1], [0, 0, 1, 1], [], []>} : vector<8x128xbf16>, vector<128x512xbf16>, vector<8x512xf32> -> vector<8x512xf32>
    %25 = arith.addf %20, %24 : vector<8x512xf32>
    %26 = vector.extract_strided_slice %25 {offsets = [0, 0], sizes = [8, 128], strides = [1, 1]} : vector<8x512xf32> to vector<8x128xf32>
    %27 = arith.negf %26 : vector<8x128xf32>
    %28 = math.exp %27 : vector<8x128xf32>
    %cst_21 = arith.constant 1.000000e+00 : f32
    %29 = vector.broadcast %cst_21 : f32 to vector<8x128xf32>
    %30 = arith.addf %29, %28 : vector<8x128xf32>
    %31 = arith.divf %29, %30 : vector<8x128xf32>
    %32 = vector.extract_strided_slice %25 {offsets = [0, 128], sizes = [8, 128], strides = [1, 1]} : vector<8x512xf32> to vector<8x128xf32>
    %33 = arith.negf %32 : vector<8x128xf32>
    %34 = math.exp %33 : vector<8x128xf32>
    %cst_22 = arith.constant 1.000000e+00 : f32
    %35 = vector.broadcast %cst_22 : f32 to vector<8x128xf32>
    %36 = arith.addf %35, %34 : vector<8x128xf32>
    %37 = arith.divf %35, %36 : vector<8x128xf32>
    %38 = vector.extract_strided_slice %25 {offsets = [0, 256], sizes = [8, 128], strides = [1, 1]} : vector<8x512xf32> to vector<8x128xf32>
    %39 = math.tanh %38 : vector<8x128xf32>
    %40 = vector.extract_strided_slice %25 {offsets = [0, 384], sizes = [8, 128], strides = [1, 1]} : vector<8x512xf32> to vector<8x128xf32>
    %41 = arith.negf %40 : vector<8x128xf32>
    %42 = math.exp %41 : vector<8x128xf32>
    %cst_23 = arith.constant 1.000000e+00 : f32
    %43 = vector.broadcast %cst_23 : f32 to vector<8x128xf32>
    %44 = arith.addf %43, %42 : vector<8x128xf32>
    %45 = arith.divf %43, %44 : vector<8x128xf32>
    %46 = arith.mulf %37, %18 : vector<8x128xf32>
    %47 = arith.mulf %31, %39 : vector<8x128xf32>
    %48 = arith.addf %46, %47 : vector<8x128xf32>
    %49 = math.tanh %48 : vector<8x128xf32>
    %50 = arith.mulf %45, %49 : vector<8x128xf32>
    %51 = arith.truncf %50 : vector<8x128xf32> to vector<8x128xbf16>
    %c0_24 = arith.constant 0 : index
    %c0_25 = arith.constant 0 : index
    %c0_26 = arith.constant 0 : index
    %52 = vector.load %arg3[%c0_24, %c0_25, %c0_26] : memref<1x128x512xbf16, #tpu.memory_space<vmem>>, vector<1x128x512xbf16>
    %53 = vector.shape_cast %52 : vector<1x128x512xbf16> to vector<128x512xbf16>
    %cst_27 = arith.constant dense<0.000000e+00> : vector<8x512xf32>
    %54 = tpu.matmul %51, %53, %cst_27 {dimension_numbers = #tpu.dot_dimension_numbers<[1], [0], [0], [1], [0, 0, 1, 1], [], []>} : vector<8x128xbf16>, vector<128x512xbf16>, vector<8x512xf32> -> vector<8x512xf32>
    %55 = arith.truncf %17 : vector<8x128xf32> to vector<8x128xbf16>
    %c1 = arith.constant 1 : index
    %c0_28 = arith.constant 0 : index
    %c0_29 = arith.constant 0 : index
    %56 = vector.load %arg4[%c1, %c0_28, %c0_29] : memref<2x128x512xbf16, #tpu.memory_space<vmem>>, vector<1x128x512xbf16>
    %57 = vector.shape_cast %56 : vector<1x128x512xbf16> to vector<128x512xbf16>
    %cst_30 = arith.constant dense<0.000000e+00> : vector<8x512xf32>
    %58 = tpu.matmul %55, %57, %cst_30 {dimension_numbers = #tpu.dot_dimension_numbers<[1], [0], [0], [1], [0, 0, 1, 1], [], []>} : vector<8x128xbf16>, vector<128x512xbf16>, vector<8x512xf32> -> vector<8x512xf32>
    %59 = arith.addf %54, %58 : vector<8x512xf32>
    %c1_31 = arith.constant 1 : index
    %c0_32 = arith.constant 0 : index
    %c0_33 = arith.constant 0 : index
    %60 = vector.load %arg5[%c1_31, %c0_32, %c0_33] : memref<2x1x512xf32, #tpu.memory_space<vmem>>, vector<1x1x512xf32>
    %61 = vector.shape_cast %60 : vector<1x1x512xf32> to vector<1x512xf32>
    %62 = vector.broadcast %61 : vector<1x512xf32> to vector<8x512xf32>
    %63 = arith.addf %59, %62 : vector<8x512xf32>
    %64 = vector.extract_strided_slice %63 {offsets = [0, 0], sizes = [8, 128], strides = [1, 1]} : vector<8x512xf32> to vector<8x128xf32>
    %65 = arith.negf %64 : vector<8x128xf32>
    %66 = math.exp %65 : vector<8x128xf32>
    %cst_34 = arith.constant 1.000000e+00 : f32
    %67 = vector.broadcast %cst_34 : f32 to vector<8x128xf32>
    %68 = arith.addf %67, %66 : vector<8x128xf32>
    %69 = arith.divf %67, %68 : vector<8x128xf32>
    %70 = vector.extract_strided_slice %63 {offsets = [0, 128], sizes = [8, 128], strides = [1, 1]} : vector<8x512xf32> to vector<8x128xf32>
    %71 = arith.negf %70 : vector<8x128xf32>
    %72 = math.exp %71 : vector<8x128xf32>
    %cst_35 = arith.constant 1.000000e+00 : f32
    %73 = vector.broadcast %cst_35 : f32 to vector<8x128xf32>
    %74 = arith.addf %73, %72 : vector<8x128xf32>
    %75 = arith.divf %73, %74 : vector<8x128xf32>
    %76 = vector.extract_strided_slice %63 {offsets = [0, 256], sizes = [8, 128], strides = [1, 1]} : vector<8x512xf32> to vector<8x128xf32>
    %77 = math.tanh %76 : vector<8x128xf32>
    %78 = vector.extract_strided_slice %63 {offsets = [0, 384], sizes = [8, 128], strides = [1, 1]} : vector<8x512xf32> to vector<8x128xf32>
    %79 = arith.negf %78 : vector<8x128xf32>
    %80 = math.exp %79 : vector<8x128xf32>
    %cst_36 = arith.constant 1.000000e+00 : f32
    %81 = vector.broadcast %cst_36 : f32 to vector<8x128xf32>
    %82 = arith.addf %81, %80 : vector<8x128xf32>
    %83 = arith.divf %81, %82 : vector<8x128xf32>
    %84 = arith.mulf %75, %19 : vector<8x128xf32>
    %85 = arith.mulf %69, %77 : vector<8x128xf32>
    %86 = arith.addf %84, %85 : vector<8x128xf32>
    %87 = math.tanh %86 : vector<8x128xf32>
    %88 = arith.mulf %83, %87 : vector<8x128xf32>
    %c8 = arith.constant 8 : index
    %c0_37 = arith.constant 0 : index
    %89 = vector.load %arg9[%c8, %c0_37] : memref<64x512xf32, #tpu.memory_space<vmem>>, vector<8x512xf32>
    %90 = arith.truncf %50 : vector<8x128xf32> to vector<8x128xbf16>
    %c0_38 = arith.constant 0 : index
    %c0_39 = arith.constant 0 : index
    %c0_40 = arith.constant 0 : index
    %91 = vector.load %arg4[%c0_38, %c0_39, %c0_40] : memref<2x128x512xbf16, #tpu.memory_space<vmem>>, vector<1x128x512xbf16>
    %92 = vector.shape_cast %91 : vector<1x128x512xbf16> to vector<128x512xbf16>
    %cst_41 = arith.constant dense<0.000000e+00> : vector<8x512xf32>
    %93 = tpu.matmul %90, %92, %cst_41 {dimension_numbers = #tpu.dot_dimension_numbers<[1], [0], [0], [1], [0, 0, 1, 1], [], []>} : vector<8x128xbf16>, vector<128x512xbf16>, vector<8x512xf32> -> vector<8x512xf32>
    %94 = arith.addf %89, %93 : vector<8x512xf32>
    %95 = vector.extract_strided_slice %94 {offsets = [0, 0], sizes = [8, 128], strides = [1, 1]} : vector<8x512xf32> to vector<8x128xf32>
    %96 = arith.negf %95 : vector<8x128xf32>
    %97 = math.exp %96 : vector<8x128xf32>
    %cst_42 = arith.constant 1.000000e+00 : f32
    %98 = vector.broadcast %cst_42 : f32 to vector<8x128xf32>
    %99 = arith.addf %98, %97 : vector<8x128xf32>
    %100 = arith.divf %98, %99 : vector<8x128xf32>
    %101 = vector.extract_strided_slice %94 {offsets = [0, 128], sizes = [8, 128], strides = [1, 1]} : vector<8x512xf32> to vector<8x128xf32>
    %102 = arith.negf %101 : vector<8x128xf32>
    %103 = math.exp %102 : vector<8x128xf32>
    %cst_43 = arith.constant 1.000000e+00 : f32
    %104 = vector.broadcast %cst_43 : f32 to vector<8x128xf32>
    %105 = arith.addf %104, %103 : vector<8x128xf32>
    %106 = arith.divf %104, %105 : vector<8x128xf32>
    %107 = vector.extract_strided_slice %94 {offsets = [0, 256], sizes = [8, 128], strides = [1, 1]} : vector<8x512xf32> to vector<8x128xf32>
    %108 = math.tanh %107 : vector<8x128xf32>
    %109 = vector.extract_strided_slice %94 {offsets = [0, 384], sizes = [8, 128], strides = [1, 1]} : vector<8x512xf32> to vector<8x128xf32>
    %110 = arith.negf %109 : vector<8x128xf32>
    %111 = math.exp %110 : vector<8x128xf32>
    %cst_44 = arith.constant 1.000000e+00 : f32
    %112 = vector.broadcast %cst_44 : f32 to vector<8x128xf32>
    %113 = arith.addf %112, %111 : vector<8x128xf32>
    %114 = arith.divf %112, %113 : vector<8x128xf32>
    %115 = arith.mulf %106, %48 : vector<8x128xf32>
    %116 = arith.mulf %100, %108 : vector<8x128xf32>
    %117 = arith.addf %115, %116 : vector<8x128xf32>
    %118 = math.tanh %117 : vector<8x128xf32>
    %119 = arith.mulf %114, %118 : vector<8x128xf32>
    %120 = arith.truncf %119 : vector<8x128xf32> to vector<8x128xbf16>
    %c0_45 = arith.constant 0 : index
    %c0_46 = arith.constant 0 : index
    %c0_47 = arith.constant 0 : index
    %121 = vector.load %arg3[%c0_45, %c0_46, %c0_47] : memref<1x128x512xbf16, #tpu.memory_space<vmem>>, vector<1x128x512xbf16>
    %122 = vector.shape_cast %121 : vector<1x128x512xbf16> to vector<128x512xbf16>
    %cst_48 = arith.constant dense<0.000000e+00> : vector<8x512xf32>
    %123 = tpu.matmul %120, %122, %cst_48 {dimension_numbers = #tpu.dot_dimension_numbers<[1], [0], [0], [1], [0, 0, 1, 1], [], []>} : vector<8x128xbf16>, vector<128x512xbf16>, vector<8x512xf32> -> vector<8x512xf32>
    %124 = arith.truncf %88 : vector<8x128xf32> to vector<8x128xbf16>
    %c1_49 = arith.constant 1 : index
    %c0_50 = arith.constant 0 : index
    %c0_51 = arith.constant 0 : index
    %125 = vector.load %arg4[%c1_49, %c0_50, %c0_51] : memref<2x128x512xbf16, #tpu.memory_space<vmem>>, vector<1x128x512xbf16>
    %126 = vector.shape_cast %125 : vector<1x128x512xbf16> to vector<128x512xbf16>
    %cst_52 = arith.constant dense<0.000000e+00> : vector<8x512xf32>
    %127 = tpu.matmul %124, %126, %cst_52 {dimension_numbers = #tpu.dot_dimension_numbers<[1], [0], [0], [1], [0, 0, 1, 1], [], []>} : vector<8x128xbf16>, vector<128x512xbf16>, vector<8x512xf32> -> vector<8x512xf32>
    %128 = arith.addf %123, %127 : vector<8x512xf32>
    %c1_53 = arith.constant 1 : index
    %c0_54 = arith.constant 0 : index
    %c0_55 = arith.constant 0 : index
    %129 = vector.load %arg5[%c1_53, %c0_54, %c0_55] : memref<2x1x512xf32, #tpu.memory_space<vmem>>, vector<1x1x512xf32>
    %130 = vector.shape_cast %129 : vector<1x1x512xf32> to vector<1x512xf32>
    %131 = vector.broadcast %130 : vector<1x512xf32> to vector<8x512xf32>
    %132 = arith.addf %128, %131 : vector<8x512xf32>
    %133 = vector.extract_strided_slice %132 {offsets = [0, 0], sizes = [8, 128], strides = [1, 1]} : vector<8x512xf32> to vector<8x128xf32>
    %134 = arith.negf %133 : vector<8x128xf32>
    %135 = math.exp %134 : vector<8x128xf32>
    %cst_56 = arith.constant 1.000000e+00 : f32
    %136 = vector.broadcast %cst_56 : f32 to vector<8x128xf32>
    %137 = arith.addf %136, %135 : vector<8x128xf32>
    %138 = arith.divf %136, %137 : vector<8x128xf32>
    %139 = vector.extract_strided_slice %132 {offsets = [0, 128], sizes = [8, 128], strides = [1, 1]} : vector<8x512xf32> to vector<8x128xf32>
    %140 = arith.negf %139 : vector<8x128xf32>
    %141 = math.exp %140 : vector<8x128xf32>
    %cst_57 = arith.constant 1.000000e+00 : f32
    %142 = vector.broadcast %cst_57 : f32 to vector<8x128xf32>
    %143 = arith.addf %142, %141 : vector<8x128xf32>
    %144 = arith.divf %142, %143 : vector<8x128xf32>
    %145 = vector.extract_strided_slice %132 {offsets = [0, 256], sizes = [8, 128], strides = [1, 1]} : vector<8x512xf32> to vector<8x128xf32>
    %146 = math.tanh %145 : vector<8x128xf32>
    %147 = vector.extract_strided_slice %132 {offsets = [0, 384], sizes = [8, 128], strides = [1, 1]} : vector<8x512xf32> to vector<8x128xf32>
    %148 = arith.negf %147 : vector<8x128xf32>
    %149 = math.exp %148 : vector<8x128xf32>
    %cst_58 = arith.constant 1.000000e+00 : f32
    %150 = vector.broadcast %cst_58 : f32 to vector<8x128xf32>
    %151 = arith.addf %150, %149 : vector<8x128xf32>
    %152 = arith.divf %150, %151 : vector<8x128xf32>
    %153 = arith.mulf %144, %86 : vector<8x128xf32>
    %154 = arith.mulf %138, %146 : vector<8x128xf32>
    %155 = arith.addf %153, %154 : vector<8x128xf32>
    %156 = math.tanh %155 : vector<8x128xf32>
    %157 = arith.mulf %152, %156 : vector<8x128xf32>
    %c16 = arith.constant 16 : index
    %c0_59 = arith.constant 0 : index
    %158 = vector.load %arg9[%c16, %c0_59] : memref<64x512xf32, #tpu.memory_space<vmem>>, vector<8x512xf32>
    %159 = arith.truncf %119 : vector<8x128xf32> to vector<8x128xbf16>
    %c0_60 = arith.constant 0 : index
    %c0_61 = arith.constant 0 : index
    %c0_62 = arith.constant 0 : index
    %160 = vector.load %arg4[%c0_60, %c0_61, %c0_62] : memref<2x128x512xbf16, #tpu.memory_space<vmem>>, vector<1x128x512xbf16>
    %161 = vector.shape_cast %160 : vector<1x128x512xbf16> to vector<128x512xbf16>
    %cst_63 = arith.constant dense<0.000000e+00> : vector<8x512xf32>
    %162 = tpu.matmul %159, %161, %cst_63 {dimension_numbers = #tpu.dot_dimension_numbers<[1], [0], [0], [1], [0, 0, 1, 1], [], []>} : vector<8x128xbf16>, vector<128x512xbf16>, vector<8x512xf32> -> vector<8x512xf32>
    %163 = arith.addf %158, %162 : vector<8x512xf32>
    %164 = vector.extract_strided_slice %163 {offsets = [0, 0], sizes = [8, 128], strides = [1, 1]} : vector<8x512xf32> to vector<8x128xf32>
    %165 = arith.negf %164 : vector<8x128xf32>
    %166 = math.exp %165 : vector<8x128xf32>
    %cst_64 = arith.constant 1.000000e+00 : f32
    %167 = vector.broadcast %cst_64 : f32 to vector<8x128xf32>
    %168 = arith.addf %167, %166 : vector<8x128xf32>
    %169 = arith.divf %167, %168 : vector<8x128xf32>
    %170 = vector.extract_strided_slice %163 {offsets = [0, 128], sizes = [8, 128], strides = [1, 1]} : vector<8x512xf32> to vector<8x128xf32>
    %171 = arith.negf %170 : vector<8x128xf32>
    %172 = math.exp %171 : vector<8x128xf32>
    %cst_65 = arith.constant 1.000000e+00 : f32
    %173 = vector.broadcast %cst_65 : f32 to vector<8x128xf32>
    %174 = arith.addf %173, %172 : vector<8x128xf32>
    %175 = arith.divf %173, %174 : vector<8x128xf32>
    %176 = vector.extract_strided_slice %163 {offsets = [0, 256], sizes = [8, 128], strides = [1, 1]} : vector<8x512xf32> to vector<8x128xf32>
    %177 = math.tanh %176 : vector<8x128xf32>
    %178 = vector.extract_strided_slice %163 {offsets = [0, 384], sizes = [8, 128], strides = [1, 1]} : vector<8x512xf32> to vector<8x128xf32>
    %179 = arith.negf %178 : vector<8x128xf32>
    %180 = math.exp %179 : vector<8x128xf32>
    %cst_66 = arith.constant 1.000000e+00 : f32
    %181 = vector.broadcast %cst_66 : f32 to vector<8x128xf32>
    %182 = arith.addf %181, %180 : vector<8x128xf32>
    %183 = arith.divf %181, %182 : vector<8x128xf32>
    %184 = arith.mulf %175, %117 : vector<8x128xf32>
    %185 = arith.mulf %169, %177 : vector<8x128xf32>
    %186 = arith.addf %184, %185 : vector<8x128xf32>
    %187 = math.tanh %186 : vector<8x128xf32>
    %188 = arith.mulf %183, %187 : vector<8x128xf32>
    %189 = arith.truncf %188 : vector<8x128xf32> to vector<8x128xbf16>
    %c0_67 = arith.constant 0 : index
    %c0_68 = arith.constant 0 : index
    %c0_69 = arith.constant 0 : index
    %190 = vector.load %arg3[%c0_67, %c0_68, %c0_69] : memref<1x128x512xbf16, #tpu.memory_space<vmem>>, vector<1x128x512xbf16>
    %191 = vector.shape_cast %190 : vector<1x128x512xbf16> to vector<128x512xbf16>
    %cst_70 = arith.constant dense<0.000000e+00> : vector<8x512xf32>
    %192 = tpu.matmul %189, %191, %cst_70 {dimension_numbers = #tpu.dot_dimension_numbers<[1], [0], [0], [1], [0, 0, 1, 1], [], []>} : vector<8x128xbf16>, vector<128x512xbf16>, vector<8x512xf32> -> vector<8x512xf32>
    %193 = arith.truncf %157 : vector<8x128xf32> to vector<8x128xbf16>
    %c1_71 = arith.constant 1 : index
    %c0_72 = arith.constant 0 : index
    %c0_73 = arith.constant 0 : index
    %194 = vector.load %arg4[%c1_71, %c0_72, %c0_73] : memref<2x128x512xbf16, #tpu.memory_space<vmem>>, vector<1x128x512xbf16>
    %195 = vector.shape_cast %194 : vector<1x128x512xbf16> to vector<128x512xbf16>
    %cst_74 = arith.constant dense<0.000000e+00> : vector<8x512xf32>
    %196 = tpu.matmul %193, %195, %cst_74 {dimension_numbers = #tpu.dot_dimension_numbers<[1], [0], [0], [1], [0, 0, 1, 1], [], []>} : vector<8x128xbf16>, vector<128x512xbf16>, vector<8x512xf32> -> vector<8x512xf32>
    %197 = arith.addf %192, %196 : vector<8x512xf32>
    %c1_75 = arith.constant 1 : index
    %c0_76 = arith.constant 0 : index
    %c0_77 = arith.constant 0 : index
    %198 = vector.load %arg5[%c1_75, %c0_76, %c0_77] : memref<2x1x512xf32, #tpu.memory_space<vmem>>, vector<1x1x512xf32>
    %199 = vector.shape_cast %198 : vector<1x1x512xf32> to vector<1x512xf32>
    %200 = vector.broadcast %199 : vector<1x512xf32> to vector<8x512xf32>
    %201 = arith.addf %197, %200 : vector<8x512xf32>
    %202 = vector.extract_strided_slice %201 {offsets = [0, 0], sizes = [8, 128], strides = [1, 1]} : vector<8x512xf32> to vector<8x128xf32>
    %203 = arith.negf %202 : vector<8x128xf32>
    %204 = math.exp %203 : vector<8x128xf32>
    %cst_78 = arith.constant 1.000000e+00 : f32
    %205 = vector.broadcast %cst_78 : f32 to vector<8x128xf32>
    %206 = arith.addf %205, %204 : vector<8x128xf32>
    %207 = arith.divf %205, %206 : vector<8x128xf32>
    %208 = vector.extract_strided_slice %201 {offsets = [0, 128], sizes = [8, 128], strides = [1, 1]} : vector<8x512xf32> to vector<8x128xf32>
    %209 = arith.negf %208 : vector<8x128xf32>
    %210 = math.exp %209 : vector<8x128xf32>
    %cst_79 = arith.constant 1.000000e+00 : f32
    %211 = vector.broadcast %cst_79 : f32 to vector<8x128xf32>
    %212 = arith.addf %211, %210 : vector<8x128xf32>
    %213 = arith.divf %211, %212 : vector<8x128xf32>
    %214 = vector.extract_strided_slice %201 {offsets = [0, 256], sizes = [8, 128], strides = [1, 1]} : vector<8x512xf32> to vector<8x128xf32>
    %215 = math.tanh %214 : vector<8x128xf32>
    %216 = vector.extract_strided_slice %201 {offsets = [0, 384], sizes = [8, 128], strides = [1, 1]} : vector<8x512xf32> to vector<8x128xf32>
    %217 = arith.negf %216 : vector<8x128xf32>
    %218 = math.exp %217 : vector<8x128xf32>
    %cst_80 = arith.constant 1.000000e+00 : f32
    %219 = vector.broadcast %cst_80 : f32 to vector<8x128xf32>
    %220 = arith.addf %219, %218 : vector<8x128xf32>
    %221 = arith.divf %219, %220 : vector<8x128xf32>
    %222 = arith.mulf %213, %155 : vector<8x128xf32>
    %223 = arith.mulf %207, %215 : vector<8x128xf32>
    %224 = arith.addf %222, %223 : vector<8x128xf32>
    %225 = math.tanh %224 : vector<8x128xf32>
    %226 = arith.mulf %221, %225 : vector<8x128xf32>
    %c24 = arith.constant 24 : index
    %c0_81 = arith.constant 0 : index
    %227 = vector.load %arg9[%c24, %c0_81] : memref<64x512xf32, #tpu.memory_space<vmem>>, vector<8x512xf32>
    %228 = arith.truncf %188 : vector<8x128xf32> to vector<8x128xbf16>
    %c0_82 = arith.constant 0 : index
    %c0_83 = arith.constant 0 : index
    %c0_84 = arith.constant 0 : index
    %229 = vector.load %arg4[%c0_82, %c0_83, %c0_84] : memref<2x128x512xbf16, #tpu.memory_space<vmem>>, vector<1x128x512xbf16>
    %230 = vector.shape_cast %229 : vector<1x128x512xbf16> to vector<128x512xbf16>
    %cst_85 = arith.constant dense<0.000000e+00> : vector<8x512xf32>
    %231 = tpu.matmul %228, %230, %cst_85 {dimension_numbers = #tpu.dot_dimension_numbers<[1], [0], [0], [1], [0, 0, 1, 1], [], []>} : vector<8x128xbf16>, vector<128x512xbf16>, vector<8x512xf32> -> vector<8x512xf32>
    %232 = arith.addf %227, %231 : vector<8x512xf32>
    %233 = vector.extract_strided_slice %232 {offsets = [0, 0], sizes = [8, 128], strides = [1, 1]} : vector<8x512xf32> to vector<8x128xf32>
    %234 = arith.negf %233 : vector<8x128xf32>
    %235 = math.exp %234 : vector<8x128xf32>
    %cst_86 = arith.constant 1.000000e+00 : f32
    %236 = vector.broadcast %cst_86 : f32 to vector<8x128xf32>
    %237 = arith.addf %236, %235 : vector<8x128xf32>
    %238 = arith.divf %236, %237 : vector<8x128xf32>
    %239 = vector.extract_strided_slice %232 {offsets = [0, 128], sizes = [8, 128], strides = [1, 1]} : vector<8x512xf32> to vector<8x128xf32>
    %240 = arith.negf %239 : vector<8x128xf32>
    %241 = math.exp %240 : vector<8x128xf32>
    %cst_87 = arith.constant 1.000000e+00 : f32
    %242 = vector.broadcast %cst_87 : f32 to vector<8x128xf32>
    %243 = arith.addf %242, %241 : vector<8x128xf32>
    %244 = arith.divf %242, %243 : vector<8x128xf32>
    %245 = vector.extract_strided_slice %232 {offsets = [0, 256], sizes = [8, 128], strides = [1, 1]} : vector<8x512xf32> to vector<8x128xf32>
    %246 = math.tanh %245 : vector<8x128xf32>
    %247 = vector.extract_strided_slice %232 {offsets = [0, 384], sizes = [8, 128], strides = [1, 1]} : vector<8x512xf32> to vector<8x128xf32>
    %248 = arith.negf %247 : vector<8x128xf32>
    %249 = math.exp %248 : vector<8x128xf32>
    %cst_88 = arith.constant 1.000000e+00 : f32
    %250 = vector.broadcast %cst_88 : f32 to vector<8x128xf32>
    %251 = arith.addf %250, %249 : vector<8x128xf32>
    %252 = arith.divf %250, %251 : vector<8x128xf32>
    %253 = arith.mulf %244, %186 : vector<8x128xf32>
    %254 = arith.mulf %238, %246 : vector<8x128xf32>
    %255 = arith.addf %253, %254 : vector<8x128xf32>
    %256 = math.tanh %255 : vector<8x128xf32>
    %257 = arith.mulf %252, %256 : vector<8x128xf32>
    %258 = arith.truncf %257 : vector<8x128xf32> to vector<8x128xbf16>
    %c0_89 = arith.constant 0 : index
    %c0_90 = arith.constant 0 : index
    %c0_91 = arith.constant 0 : index
    %259 = vector.load %arg3[%c0_89, %c0_90, %c0_91] : memref<1x128x512xbf16, #tpu.memory_space<vmem>>, vector<1x128x512xbf16>
    %260 = vector.shape_cast %259 : vector<1x128x512xbf16> to vector<128x512xbf16>
    %cst_92 = arith.constant dense<0.000000e+00> : vector<8x512xf32>
    %261 = tpu.matmul %258, %260, %cst_92 {dimension_numbers = #tpu.dot_dimension_numbers<[1], [0], [0], [1], [0, 0, 1, 1], [], []>} : vector<8x128xbf16>, vector<128x512xbf16>, vector<8x512xf32> -> vector<8x512xf32>
    %262 = arith.truncf %226 : vector<8x128xf32> to vector<8x128xbf16>
    %c1_93 = arith.constant 1 : index
    %c0_94 = arith.constant 0 : index
    %c0_95 = arith.constant 0 : index
    %263 = vector.load %arg4[%c1_93, %c0_94, %c0_95] : memref<2x128x512xbf16, #tpu.memory_space<vmem>>, vector<1x128x512xbf16>
    %264 = vector.shape_cast %263 : vector<1x128x512xbf16> to vector<128x512xbf16>
    %cst_96 = arith.constant dense<0.000000e+00> : vector<8x512xf32>
    %265 = tpu.matmul %262, %264, %cst_96 {dimension_numbers = #tpu.dot_dimension_numbers<[1], [0], [0], [1], [0, 0, 1, 1], [], []>} : vector<8x128xbf16>, vector<128x512xbf16>, vector<8x512xf32> -> vector<8x512xf32>
    %266 = arith.addf %261, %265 : vector<8x512xf32>
    %c1_97 = arith.constant 1 : index
    %c0_98 = arith.constant 0 : index
    %c0_99 = arith.constant 0 : index
    %267 = vector.load %arg5[%c1_97, %c0_98, %c0_99] : memref<2x1x512xf32, #tpu.memory_space<vmem>>, vector<1x1x512xf32>
    %268 = vector.shape_cast %267 : vector<1x1x512xf32> to vector<1x512xf32>
    %269 = vector.broadcast %268 : vector<1x512xf32> to vector<8x512xf32>
    %270 = arith.addf %266, %269 : vector<8x512xf32>
    %271 = vector.extract_strided_slice %270 {offsets = [0, 0], sizes = [8, 128], strides = [1, 1]} : vector<8x512xf32> to vector<8x128xf32>
    %272 = arith.negf %271 : vector<8x128xf32>
    %273 = math.exp %272 : vector<8x128xf32>
    %cst_100 = arith.constant 1.000000e+00 : f32
    %274 = vector.broadcast %cst_100 : f32 to vector<8x128xf32>
    %275 = arith.addf %274, %273 : vector<8x128xf32>
    %276 = arith.divf %274, %275 : vector<8x128xf32>
    %277 = vector.extract_strided_slice %270 {offsets = [0, 128], sizes = [8, 128], strides = [1, 1]} : vector<8x512xf32> to vector<8x128xf32>
    %278 = arith.negf %277 : vector<8x128xf32>
    %279 = math.exp %278 : vector<8x128xf32>
    %cst_101 = arith.constant 1.000000e+00 : f32
    %280 = vector.broadcast %cst_101 : f32 to vector<8x128xf32>
    %281 = arith.addf %280, %279 : vector<8x128xf32>
    %282 = arith.divf %280, %281 : vector<8x128xf32>
    %283 = vector.extract_strided_slice %270 {offsets = [0, 256], sizes = [8, 128], strides = [1, 1]} : vector<8x512xf32> to vector<8x128xf32>
    %284 = math.tanh %283 : vector<8x128xf32>
    %285 = vector.extract_strided_slice %270 {offsets = [0, 384], sizes = [8, 128], strides = [1, 1]} : vector<8x512xf32> to vector<8x128xf32>
    %286 = arith.negf %285 : vector<8x128xf32>
    %287 = math.exp %286 : vector<8x128xf32>
    %cst_102 = arith.constant 1.000000e+00 : f32
    %288 = vector.broadcast %cst_102 : f32 to vector<8x128xf32>
    %289 = arith.addf %288, %287 : vector<8x128xf32>
    %290 = arith.divf %288, %289 : vector<8x128xf32>
    %291 = arith.mulf %282, %224 : vector<8x128xf32>
    %292 = arith.mulf %276, %284 : vector<8x128xf32>
    %293 = arith.addf %291, %292 : vector<8x128xf32>
    %294 = math.tanh %293 : vector<8x128xf32>
    %295 = arith.mulf %290, %294 : vector<8x128xf32>
    %c32 = arith.constant 32 : index
    %c0_103 = arith.constant 0 : index
    %296 = vector.load %arg9[%c32, %c0_103] : memref<64x512xf32, #tpu.memory_space<vmem>>, vector<8x512xf32>
    %297 = arith.truncf %257 : vector<8x128xf32> to vector<8x128xbf16>
    %c0_104 = arith.constant 0 : index
    %c0_105 = arith.constant 0 : index
    %c0_106 = arith.constant 0 : index
    %298 = vector.load %arg4[%c0_104, %c0_105, %c0_106] : memref<2x128x512xbf16, #tpu.memory_space<vmem>>, vector<1x128x512xbf16>
    %299 = vector.shape_cast %298 : vector<1x128x512xbf16> to vector<128x512xbf16>
    %cst_107 = arith.constant dense<0.000000e+00> : vector<8x512xf32>
    %300 = tpu.matmul %297, %299, %cst_107 {dimension_numbers = #tpu.dot_dimension_numbers<[1], [0], [0], [1], [0, 0, 1, 1], [], []>} : vector<8x128xbf16>, vector<128x512xbf16>, vector<8x512xf32> -> vector<8x512xf32>
    %301 = arith.addf %296, %300 : vector<8x512xf32>
    %302 = vector.extract_strided_slice %301 {offsets = [0, 0], sizes = [8, 128], strides = [1, 1]} : vector<8x512xf32> to vector<8x128xf32>
    %303 = arith.negf %302 : vector<8x128xf32>
    %304 = math.exp %303 : vector<8x128xf32>
    %cst_108 = arith.constant 1.000000e+00 : f32
    %305 = vector.broadcast %cst_108 : f32 to vector<8x128xf32>
    %306 = arith.addf %305, %304 : vector<8x128xf32>
    %307 = arith.divf %305, %306 : vector<8x128xf32>
    %308 = vector.extract_strided_slice %301 {offsets = [0, 128], sizes = [8, 128], strides = [1, 1]} : vector<8x512xf32> to vector<8x128xf32>
    %309 = arith.negf %308 : vector<8x128xf32>
    %310 = math.exp %309 : vector<8x128xf32>
    %cst_109 = arith.constant 1.000000e+00 : f32
    %311 = vector.broadcast %cst_109 : f32 to vector<8x128xf32>
    %312 = arith.addf %311, %310 : vector<8x128xf32>
    %313 = arith.divf %311, %312 : vector<8x128xf32>
    %314 = vector.extract_strided_slice %301 {offsets = [0, 256], sizes = [8, 128], strides = [1, 1]} : vector<8x512xf32> to vector<8x128xf32>
    %315 = math.tanh %314 : vector<8x128xf32>
    %316 = vector.extract_strided_slice %301 {offsets = [0, 384], sizes = [8, 128], strides = [1, 1]} : vector<8x512xf32> to vector<8x128xf32>
    %317 = arith.negf %316 : vector<8x128xf32>
    %318 = math.exp %317 : vector<8x128xf32>
    %cst_110 = arith.constant 1.000000e+00 : f32
    %319 = vector.broadcast %cst_110 : f32 to vector<8x128xf32>
    %320 = arith.addf %319, %318 : vector<8x128xf32>
    %321 = arith.divf %319, %320 : vector<8x128xf32>
    %322 = arith.mulf %313, %255 : vector<8x128xf32>
    %323 = arith.mulf %307, %315 : vector<8x128xf32>
    %324 = arith.addf %322, %323 : vector<8x128xf32>
    %325 = math.tanh %324 : vector<8x128xf32>
    %326 = arith.mulf %321, %325 : vector<8x128xf32>
    %327 = arith.truncf %326 : vector<8x128xf32> to vector<8x128xbf16>
    %c0_111 = arith.constant 0 : index
    %c0_112 = arith.constant 0 : index
    %c0_113 = arith.constant 0 : index
    %328 = vector.load %arg3[%c0_111, %c0_112, %c0_113] : memref<1x128x512xbf16, #tpu.memory_space<vmem>>, vector<1x128x512xbf16>
    %329 = vector.shape_cast %328 : vector<1x128x512xbf16> to vector<128x512xbf16>
    %cst_114 = arith.constant dense<0.000000e+00> : vector<8x512xf32>
    %330 = tpu.matmul %327, %329, %cst_114 {dimension_numbers = #tpu.dot_dimension_numbers<[1], [0], [0], [1], [0, 0, 1, 1], [], []>} : vector<8x128xbf16>, vector<128x512xbf16>, vector<8x512xf32> -> vector<8x512xf32>
    %331 = arith.truncf %295 : vector<8x128xf32> to vector<8x128xbf16>
    %c1_115 = arith.constant 1 : index
    %c0_116 = arith.constant 0 : index
    %c0_117 = arith.constant 0 : index
    %332 = vector.load %arg4[%c1_115, %c0_116, %c0_117] : memref<2x128x512xbf16, #tpu.memory_space<vmem>>, vector<1x128x512xbf16>
    %333 = vector.shape_cast %332 : vector<1x128x512xbf16> to vector<128x512xbf16>
    %cst_118 = arith.constant dense<0.000000e+00> : vector<8x512xf32>
    %334 = tpu.matmul %331, %333, %cst_118 {dimension_numbers = #tpu.dot_dimension_numbers<[1], [0], [0], [1], [0, 0, 1, 1], [], []>} : vector<8x128xbf16>, vector<128x512xbf16>, vector<8x512xf32> -> vector<8x512xf32>
    %335 = arith.addf %330, %334 : vector<8x512xf32>
    %c1_119 = arith.constant 1 : index
    %c0_120 = arith.constant 0 : index
    %c0_121 = arith.constant 0 : index
    %336 = vector.load %arg5[%c1_119, %c0_120, %c0_121] : memref<2x1x512xf32, #tpu.memory_space<vmem>>, vector<1x1x512xf32>
    %337 = vector.shape_cast %336 : vector<1x1x512xf32> to vector<1x512xf32>
    %338 = vector.broadcast %337 : vector<1x512xf32> to vector<8x512xf32>
    %339 = arith.addf %335, %338 : vector<8x512xf32>
    %340 = vector.extract_strided_slice %339 {offsets = [0, 0], sizes = [8, 128], strides = [1, 1]} : vector<8x512xf32> to vector<8x128xf32>
    %341 = arith.negf %340 : vector<8x128xf32>
    %342 = math.exp %341 : vector<8x128xf32>
    %cst_122 = arith.constant 1.000000e+00 : f32
    %343 = vector.broadcast %cst_122 : f32 to vector<8x128xf32>
    %344 = arith.addf %343, %342 : vector<8x128xf32>
    %345 = arith.divf %343, %344 : vector<8x128xf32>
    %346 = vector.extract_strided_slice %339 {offsets = [0, 128], sizes = [8, 128], strides = [1, 1]} : vector<8x512xf32> to vector<8x128xf32>
    %347 = arith.negf %346 : vector<8x128xf32>
    %348 = math.exp %347 : vector<8x128xf32>
    %cst_123 = arith.constant 1.000000e+00 : f32
    %349 = vector.broadcast %cst_123 : f32 to vector<8x128xf32>
    %350 = arith.addf %349, %348 : vector<8x128xf32>
    %351 = arith.divf %349, %350 : vector<8x128xf32>
    %352 = vector.extract_strided_slice %339 {offsets = [0, 256], sizes = [8, 128], strides = [1, 1]} : vector<8x512xf32> to vector<8x128xf32>
    %353 = math.tanh %352 : vector<8x128xf32>
    %354 = vector.extract_strided_slice %339 {offsets = [0, 384], sizes = [8, 128], strides = [1, 1]} : vector<8x512xf32> to vector<8x128xf32>
    %355 = arith.negf %354 : vector<8x128xf32>
    %356 = math.exp %355 : vector<8x128xf32>
    %cst_124 = arith.constant 1.000000e+00 : f32
    %357 = vector.broadcast %cst_124 : f32 to vector<8x128xf32>
    %358 = arith.addf %357, %356 : vector<8x128xf32>
    %359 = arith.divf %357, %358 : vector<8x128xf32>
    %360 = arith.mulf %351, %293 : vector<8x128xf32>
    %361 = arith.mulf %345, %353 : vector<8x128xf32>
    %362 = arith.addf %360, %361 : vector<8x128xf32>
    %363 = math.tanh %362 : vector<8x128xf32>
    %364 = arith.mulf %359, %363 : vector<8x128xf32>
    %c40 = arith.constant 40 : index
    %c0_125 = arith.constant 0 : index
    %365 = vector.load %arg9[%c40, %c0_125] : memref<64x512xf32, #tpu.memory_space<vmem>>, vector<8x512xf32>
    %366 = arith.truncf %326 : vector<8x128xf32> to vector<8x128xbf16>
    %c0_126 = arith.constant 0 : index
    %c0_127 = arith.constant 0 : index
    %c0_128 = arith.constant 0 : index
    %367 = vector.load %arg4[%c0_126, %c0_127, %c0_128] : memref<2x128x512xbf16, #tpu.memory_space<vmem>>, vector<1x128x512xbf16>
    %368 = vector.shape_cast %367 : vector<1x128x512xbf16> to vector<128x512xbf16>
    %cst_129 = arith.constant dense<0.000000e+00> : vector<8x512xf32>
    %369 = tpu.matmul %366, %368, %cst_129 {dimension_numbers = #tpu.dot_dimension_numbers<[1], [0], [0], [1], [0, 0, 1, 1], [], []>} : vector<8x128xbf16>, vector<128x512xbf16>, vector<8x512xf32> -> vector<8x512xf32>
    %370 = arith.addf %365, %369 : vector<8x512xf32>
    %371 = vector.extract_strided_slice %370 {offsets = [0, 0], sizes = [8, 128], strides = [1, 1]} : vector<8x512xf32> to vector<8x128xf32>
    %372 = arith.negf %371 : vector<8x128xf32>
    %373 = math.exp %372 : vector<8x128xf32>
    %cst_130 = arith.constant 1.000000e+00 : f32
    %374 = vector.broadcast %cst_130 : f32 to vector<8x128xf32>
    %375 = arith.addf %374, %373 : vector<8x128xf32>
    %376 = arith.divf %374, %375 : vector<8x128xf32>
    %377 = vector.extract_strided_slice %370 {offsets = [0, 128], sizes = [8, 128], strides = [1, 1]} : vector<8x512xf32> to vector<8x128xf32>
    %378 = arith.negf %377 : vector<8x128xf32>
    %379 = math.exp %378 : vector<8x128xf32>
    %cst_131 = arith.constant 1.000000e+00 : f32
    %380 = vector.broadcast %cst_131 : f32 to vector<8x128xf32>
    %381 = arith.addf %380, %379 : vector<8x128xf32>
    %382 = arith.divf %380, %381 : vector<8x128xf32>
    %383 = vector.extract_strided_slice %370 {offsets = [0, 256], sizes = [8, 128], strides = [1, 1]} : vector<8x512xf32> to vector<8x128xf32>
    %384 = math.tanh %383 : vector<8x128xf32>
    %385 = vector.extract_strided_slice %370 {offsets = [0, 384], sizes = [8, 128], strides = [1, 1]} : vector<8x512xf32> to vector<8x128xf32>
    %386 = arith.negf %385 : vector<8x128xf32>
    %387 = math.exp %386 : vector<8x128xf32>
    %cst_132 = arith.constant 1.000000e+00 : f32
    %388 = vector.broadcast %cst_132 : f32 to vector<8x128xf32>
    %389 = arith.addf %388, %387 : vector<8x128xf32>
    %390 = arith.divf %388, %389 : vector<8x128xf32>
    %391 = arith.mulf %382, %324 : vector<8x128xf32>
    %392 = arith.mulf %376, %384 : vector<8x128xf32>
    %393 = arith.addf %391, %392 : vector<8x128xf32>
    %394 = math.tanh %393 : vector<8x128xf32>
    %395 = arith.mulf %390, %394 : vector<8x128xf32>
    %396 = arith.truncf %395 : vector<8x128xf32> to vector<8x128xbf16>
    %c0_133 = arith.constant 0 : index
    %c0_134 = arith.constant 0 : index
    %c0_135 = arith.constant 0 : index
    %397 = vector.load %arg3[%c0_133, %c0_134, %c0_135] : memref<1x128x512xbf16, #tpu.memory_space<vmem>>, vector<1x128x512xbf16>
    %398 = vector.shape_cast %397 : vector<1x128x512xbf16> to vector<128x512xbf16>
    %cst_136 = arith.constant dense<0.000000e+00> : vector<8x512xf32>
    %399 = tpu.matmul %396, %398, %cst_136 {dimension_numbers = #tpu.dot_dimension_numbers<[1], [0], [0], [1], [0, 0, 1, 1], [], []>} : vector<8x128xbf16>, vector<128x512xbf16>, vector<8x512xf32> -> vector<8x512xf32>
    %400 = arith.truncf %364 : vector<8x128xf32> to vector<8x128xbf16>
    %c1_137 = arith.constant 1 : index
    %c0_138 = arith.constant 0 : index
    %c0_139 = arith.constant 0 : index
    %401 = vector.load %arg4[%c1_137, %c0_138, %c0_139] : memref<2x128x512xbf16, #tpu.memory_space<vmem>>, vector<1x128x512xbf16>
    %402 = vector.shape_cast %401 : vector<1x128x512xbf16> to vector<128x512xbf16>
    %cst_140 = arith.constant dense<0.000000e+00> : vector<8x512xf32>
    %403 = tpu.matmul %400, %402, %cst_140 {dimension_numbers = #tpu.dot_dimension_numbers<[1], [0], [0], [1], [0, 0, 1, 1], [], []>} : vector<8x128xbf16>, vector<128x512xbf16>, vector<8x512xf32> -> vector<8x512xf32>
    %404 = arith.addf %399, %403 : vector<8x512xf32>
    %c1_141 = arith.constant 1 : index
    %c0_142 = arith.constant 0 : index
    %c0_143 = arith.constant 0 : index
    %405 = vector.load %arg5[%c1_141, %c0_142, %c0_143] : memref<2x1x512xf32, #tpu.memory_space<vmem>>, vector<1x1x512xf32>
    %406 = vector.shape_cast %405 : vector<1x1x512xf32> to vector<1x512xf32>
    %407 = vector.broadcast %406 : vector<1x512xf32> to vector<8x512xf32>
    %408 = arith.addf %404, %407 : vector<8x512xf32>
    %409 = vector.extract_strided_slice %408 {offsets = [0, 0], sizes = [8, 128], strides = [1, 1]} : vector<8x512xf32> to vector<8x128xf32>
    %410 = arith.negf %409 : vector<8x128xf32>
    %411 = math.exp %410 : vector<8x128xf32>
    %cst_144 = arith.constant 1.000000e+00 : f32
    %412 = vector.broadcast %cst_144 : f32 to vector<8x128xf32>
    %413 = arith.addf %412, %411 : vector<8x128xf32>
    %414 = arith.divf %412, %413 : vector<8x128xf32>
    %415 = vector.extract_strided_slice %408 {offsets = [0, 128], sizes = [8, 128], strides = [1, 1]} : vector<8x512xf32> to vector<8x128xf32>
    %416 = arith.negf %415 : vector<8x128xf32>
    %417 = math.exp %416 : vector<8x128xf32>
    %cst_145 = arith.constant 1.000000e+00 : f32
    %418 = vector.broadcast %cst_145 : f32 to vector<8x128xf32>
    %419 = arith.addf %418, %417 : vector<8x128xf32>
    %420 = arith.divf %418, %419 : vector<8x128xf32>
    %421 = vector.extract_strided_slice %408 {offsets = [0, 256], sizes = [8, 128], strides = [1, 1]} : vector<8x512xf32> to vector<8x128xf32>
    %422 = math.tanh %421 : vector<8x128xf32>
    %423 = vector.extract_strided_slice %408 {offsets = [0, 384], sizes = [8, 128], strides = [1, 1]} : vector<8x512xf32> to vector<8x128xf32>
    %424 = arith.negf %423 : vector<8x128xf32>
    %425 = math.exp %424 : vector<8x128xf32>
    %cst_146 = arith.constant 1.000000e+00 : f32
    %426 = vector.broadcast %cst_146 : f32 to vector<8x128xf32>
    %427 = arith.addf %426, %425 : vector<8x128xf32>
    %428 = arith.divf %426, %427 : vector<8x128xf32>
    %429 = arith.mulf %420, %362 : vector<8x128xf32>
    %430 = arith.mulf %414, %422 : vector<8x128xf32>
    %431 = arith.addf %429, %430 : vector<8x128xf32>
    %432 = math.tanh %431 : vector<8x128xf32>
    %433 = arith.mulf %428, %432 : vector<8x128xf32>
    %c48 = arith.constant 48 : index
    %c0_147 = arith.constant 0 : index
    %434 = vector.load %arg9[%c48, %c0_147] : memref<64x512xf32, #tpu.memory_space<vmem>>, vector<8x512xf32>
    %435 = arith.truncf %395 : vector<8x128xf32> to vector<8x128xbf16>
    %c0_148 = arith.constant 0 : index
    %c0_149 = arith.constant 0 : index
    %c0_150 = arith.constant 0 : index
    %436 = vector.load %arg4[%c0_148, %c0_149, %c0_150] : memref<2x128x512xbf16, #tpu.memory_space<vmem>>, vector<1x128x512xbf16>
    %437 = vector.shape_cast %436 : vector<1x128x512xbf16> to vector<128x512xbf16>
    %cst_151 = arith.constant dense<0.000000e+00> : vector<8x512xf32>
    %438 = tpu.matmul %435, %437, %cst_151 {dimension_numbers = #tpu.dot_dimension_numbers<[1], [0], [0], [1], [0, 0, 1, 1], [], []>} : vector<8x128xbf16>, vector<128x512xbf16>, vector<8x512xf32> -> vector<8x512xf32>
    %439 = arith.addf %434, %438 : vector<8x512xf32>
    %440 = vector.extract_strided_slice %439 {offsets = [0, 0], sizes = [8, 128], strides = [1, 1]} : vector<8x512xf32> to vector<8x128xf32>
    %441 = arith.negf %440 : vector<8x128xf32>
    %442 = math.exp %441 : vector<8x128xf32>
    %cst_152 = arith.constant 1.000000e+00 : f32
    %443 = vector.broadcast %cst_152 : f32 to vector<8x128xf32>
    %444 = arith.addf %443, %442 : vector<8x128xf32>
    %445 = arith.divf %443, %444 : vector<8x128xf32>
    %446 = vector.extract_strided_slice %439 {offsets = [0, 128], sizes = [8, 128], strides = [1, 1]} : vector<8x512xf32> to vector<8x128xf32>
    %447 = arith.negf %446 : vector<8x128xf32>
    %448 = math.exp %447 : vector<8x128xf32>
    %cst_153 = arith.constant 1.000000e+00 : f32
    %449 = vector.broadcast %cst_153 : f32 to vector<8x128xf32>
    %450 = arith.addf %449, %448 : vector<8x128xf32>
    %451 = arith.divf %449, %450 : vector<8x128xf32>
    %452 = vector.extract_strided_slice %439 {offsets = [0, 256], sizes = [8, 128], strides = [1, 1]} : vector<8x512xf32> to vector<8x128xf32>
    %453 = math.tanh %452 : vector<8x128xf32>
    %454 = vector.extract_strided_slice %439 {offsets = [0, 384], sizes = [8, 128], strides = [1, 1]} : vector<8x512xf32> to vector<8x128xf32>
    %455 = arith.negf %454 : vector<8x128xf32>
    %456 = math.exp %455 : vector<8x128xf32>
    %cst_154 = arith.constant 1.000000e+00 : f32
    %457 = vector.broadcast %cst_154 : f32 to vector<8x128xf32>
    %458 = arith.addf %457, %456 : vector<8x128xf32>
    %459 = arith.divf %457, %458 : vector<8x128xf32>
    %460 = arith.mulf %451, %393 : vector<8x128xf32>
    %461 = arith.mulf %445, %453 : vector<8x128xf32>
    %462 = arith.addf %460, %461 : vector<8x128xf32>
    %463 = math.tanh %462 : vector<8x128xf32>
    %464 = arith.mulf %459, %463 : vector<8x128xf32>
    %465 = arith.truncf %464 : vector<8x128xf32> to vector<8x128xbf16>
    %c0_155 = arith.constant 0 : index
    %c0_156 = arith.constant 0 : index
    %c0_157 = arith.constant 0 : index
    %466 = vector.load %arg3[%c0_155, %c0_156, %c0_157] : memref<1x128x512xbf16, #tpu.memory_space<vmem>>, vector<1x128x512xbf16>
    %467 = vector.shape_cast %466 : vector<1x128x512xbf16> to vector<128x512xbf16>
    %cst_158 = arith.constant dense<0.000000e+00> : vector<8x512xf32>
    %468 = tpu.matmul %465, %467, %cst_158 {dimension_numbers = #tpu.dot_dimension_numbers<[1], [0], [0], [1], [0, 0, 1, 1], [], []>} : vector<8x128xbf16>, vector<128x512xbf16>, vector<8x512xf32> -> vector<8x512xf32>
    %469 = arith.truncf %433 : vector<8x128xf32> to vector<8x128xbf16>
    %c1_159 = arith.constant 1 : index
    %c0_160 = arith.constant 0 : index
    %c0_161 = arith.constant 0 : index
    %470 = vector.load %arg4[%c1_159, %c0_160, %c0_161] : memref<2x128x512xbf16, #tpu.memory_space<vmem>>, vector<1x128x512xbf16>
    %471 = vector.shape_cast %470 : vector<1x128x512xbf16> to vector<128x512xbf16>
    %cst_162 = arith.constant dense<0.000000e+00> : vector<8x512xf32>
    %472 = tpu.matmul %469, %471, %cst_162 {dimension_numbers = #tpu.dot_dimension_numbers<[1], [0], [0], [1], [0, 0, 1, 1], [], []>} : vector<8x128xbf16>, vector<128x512xbf16>, vector<8x512xf32> -> vector<8x512xf32>
    %473 = arith.addf %468, %472 : vector<8x512xf32>
    %c1_163 = arith.constant 1 : index
    %c0_164 = arith.constant 0 : index
    %c0_165 = arith.constant 0 : index
    %474 = vector.load %arg5[%c1_163, %c0_164, %c0_165] : memref<2x1x512xf32, #tpu.memory_space<vmem>>, vector<1x1x512xf32>
    %475 = vector.shape_cast %474 : vector<1x1x512xf32> to vector<1x512xf32>
    %476 = vector.broadcast %475 : vector<1x512xf32> to vector<8x512xf32>
    %477 = arith.addf %473, %476 : vector<8x512xf32>
    %478 = vector.extract_strided_slice %477 {offsets = [0, 0], sizes = [8, 128], strides = [1, 1]} : vector<8x512xf32> to vector<8x128xf32>
    %479 = arith.negf %478 : vector<8x128xf32>
    %480 = math.exp %479 : vector<8x128xf32>
    %cst_166 = arith.constant 1.000000e+00 : f32
    %481 = vector.broadcast %cst_166 : f32 to vector<8x128xf32>
    %482 = arith.addf %481, %480 : vector<8x128xf32>
    %483 = arith.divf %481, %482 : vector<8x128xf32>
    %484 = vector.extract_strided_slice %477 {offsets = [0, 128], sizes = [8, 128], strides = [1, 1]} : vector<8x512xf32> to vector<8x128xf32>
    %485 = arith.negf %484 : vector<8x128xf32>
    %486 = math.exp %485 : vector<8x128xf32>
    %cst_167 = arith.constant 1.000000e+00 : f32
    %487 = vector.broadcast %cst_167 : f32 to vector<8x128xf32>
    %488 = arith.addf %487, %486 : vector<8x128xf32>
    %489 = arith.divf %487, %488 : vector<8x128xf32>
    %490 = vector.extract_strided_slice %477 {offsets = [0, 256], sizes = [8, 128], strides = [1, 1]} : vector<8x512xf32> to vector<8x128xf32>
    %491 = math.tanh %490 : vector<8x128xf32>
    %492 = vector.extract_strided_slice %477 {offsets = [0, 384], sizes = [8, 128], strides = [1, 1]} : vector<8x512xf32> to vector<8x128xf32>
    %493 = arith.negf %492 : vector<8x128xf32>
    %494 = math.exp %493 : vector<8x128xf32>
    %cst_168 = arith.constant 1.000000e+00 : f32
    %495 = vector.broadcast %cst_168 : f32 to vector<8x128xf32>
    %496 = arith.addf %495, %494 : vector<8x128xf32>
    %497 = arith.divf %495, %496 : vector<8x128xf32>
    %498 = arith.mulf %489, %431 : vector<8x128xf32>
    %499 = arith.mulf %483, %491 : vector<8x128xf32>
    %500 = arith.addf %498, %499 : vector<8x128xf32>
    %501 = math.tanh %500 : vector<8x128xf32>
    %502 = arith.mulf %497, %501 : vector<8x128xf32>
    %c56 = arith.constant 56 : index
    %c0_169 = arith.constant 0 : index
    %503 = vector.load %arg9[%c56, %c0_169] : memref<64x512xf32, #tpu.memory_space<vmem>>, vector<8x512xf32>
    %504 = arith.truncf %464 : vector<8x128xf32> to vector<8x128xbf16>
    %c0_170 = arith.constant 0 : index
    %c0_171 = arith.constant 0 : index
    %c0_172 = arith.constant 0 : index
    %505 = vector.load %arg4[%c0_170, %c0_171, %c0_172] : memref<2x128x512xbf16, #tpu.memory_space<vmem>>, vector<1x128x512xbf16>
    %506 = vector.shape_cast %505 : vector<1x128x512xbf16> to vector<128x512xbf16>
    %cst_173 = arith.constant dense<0.000000e+00> : vector<8x512xf32>
    %507 = tpu.matmul %504, %506, %cst_173 {dimension_numbers = #tpu.dot_dimension_numbers<[1], [0], [0], [1], [0, 0, 1, 1], [], []>} : vector<8x128xbf16>, vector<128x512xbf16>, vector<8x512xf32> -> vector<8x512xf32>
    %508 = arith.addf %503, %507 : vector<8x512xf32>
    %509 = vector.extract_strided_slice %508 {offsets = [0, 0], sizes = [8, 128], strides = [1, 1]} : vector<8x512xf32> to vector<8x128xf32>
    %510 = arith.negf %509 : vector<8x128xf32>
    %511 = math.exp %510 : vector<8x128xf32>
    %cst_174 = arith.constant 1.000000e+00 : f32
    %512 = vector.broadcast %cst_174 : f32 to vector<8x128xf32>
    %513 = arith.addf %512, %511 : vector<8x128xf32>
    %514 = arith.divf %512, %513 : vector<8x128xf32>
    %515 = vector.extract_strided_slice %508 {offsets = [0, 128], sizes = [8, 128], strides = [1, 1]} : vector<8x512xf32> to vector<8x128xf32>
    %516 = arith.negf %515 : vector<8x128xf32>
    %517 = math.exp %516 : vector<8x128xf32>
    %cst_175 = arith.constant 1.000000e+00 : f32
    %518 = vector.broadcast %cst_175 : f32 to vector<8x128xf32>
    %519 = arith.addf %518, %517 : vector<8x128xf32>
    %520 = arith.divf %518, %519 : vector<8x128xf32>
    %521 = vector.extract_strided_slice %508 {offsets = [0, 256], sizes = [8, 128], strides = [1, 1]} : vector<8x512xf32> to vector<8x128xf32>
    %522 = math.tanh %521 : vector<8x128xf32>
    %523 = vector.extract_strided_slice %508 {offsets = [0, 384], sizes = [8, 128], strides = [1, 1]} : vector<8x512xf32> to vector<8x128xf32>
    %524 = arith.negf %523 : vector<8x128xf32>
    %525 = math.exp %524 : vector<8x128xf32>
    %cst_176 = arith.constant 1.000000e+00 : f32
    %526 = vector.broadcast %cst_176 : f32 to vector<8x128xf32>
    %527 = arith.addf %526, %525 : vector<8x128xf32>
    %528 = arith.divf %526, %527 : vector<8x128xf32>
    %529 = arith.mulf %520, %462 : vector<8x128xf32>
    %530 = arith.mulf %514, %522 : vector<8x128xf32>
    %531 = arith.addf %529, %530 : vector<8x128xf32>
    %532 = math.tanh %531 : vector<8x128xf32>
    %533 = arith.mulf %528, %532 : vector<8x128xf32>
    %534 = arith.truncf %533 : vector<8x128xf32> to vector<8x128xbf16>
    %c0_177 = arith.constant 0 : index
    %c0_178 = arith.constant 0 : index
    %c0_179 = arith.constant 0 : index
    %535 = vector.load %arg3[%c0_177, %c0_178, %c0_179] : memref<1x128x512xbf16, #tpu.memory_space<vmem>>, vector<1x128x512xbf16>
    %536 = vector.shape_cast %535 : vector<1x128x512xbf16> to vector<128x512xbf16>
    %cst_180 = arith.constant dense<0.000000e+00> : vector<8x512xf32>
    %537 = tpu.matmul %534, %536, %cst_180 {dimension_numbers = #tpu.dot_dimension_numbers<[1], [0], [0], [1], [0, 0, 1, 1], [], []>} : vector<8x128xbf16>, vector<128x512xbf16>, vector<8x512xf32> -> vector<8x512xf32>
    %538 = arith.truncf %502 : vector<8x128xf32> to vector<8x128xbf16>
    %c1_181 = arith.constant 1 : index
    %c0_182 = arith.constant 0 : index
    %c0_183 = arith.constant 0 : index
    %539 = vector.load %arg4[%c1_181, %c0_182, %c0_183] : memref<2x128x512xbf16, #tpu.memory_space<vmem>>, vector<1x128x512xbf16>
    %540 = vector.shape_cast %539 : vector<1x128x512xbf16> to vector<128x512xbf16>
    %cst_184 = arith.constant dense<0.000000e+00> : vector<8x512xf32>
    %541 = tpu.matmul %538, %540, %cst_184 {dimension_numbers = #tpu.dot_dimension_numbers<[1], [0], [0], [1], [0, 0, 1, 1], [], []>} : vector<8x128xbf16>, vector<128x512xbf16>, vector<8x512xf32> -> vector<8x512xf32>
    %542 = arith.addf %537, %541 : vector<8x512xf32>
    %c1_185 = arith.constant 1 : index
    %c0_186 = arith.constant 0 : index
    %c0_187 = arith.constant 0 : index
    %543 = vector.load %arg5[%c1_185, %c0_186, %c0_187] : memref<2x1x512xf32, #tpu.memory_space<vmem>>, vector<1x1x512xf32>
    %544 = vector.shape_cast %543 : vector<1x1x512xf32> to vector<1x512xf32>
    %545 = vector.broadcast %544 : vector<1x512xf32> to vector<8x512xf32>
    %546 = arith.addf %542, %545 : vector<8x512xf32>
    %547 = vector.extract_strided_slice %546 {offsets = [0, 0], sizes = [8, 128], strides = [1, 1]} : vector<8x512xf32> to vector<8x128xf32>
    %548 = arith.negf %547 : vector<8x128xf32>
    %549 = math.exp %548 : vector<8x128xf32>
    %cst_188 = arith.constant 1.000000e+00 : f32
    %550 = vector.broadcast %cst_188 : f32 to vector<8x128xf32>
    %551 = arith.addf %550, %549 : vector<8x128xf32>
    %552 = arith.divf %550, %551 : vector<8x128xf32>
    %553 = vector.extract_strided_slice %546 {offsets = [0, 128], sizes = [8, 128], strides = [1, 1]} : vector<8x512xf32> to vector<8x128xf32>
    %554 = arith.negf %553 : vector<8x128xf32>
    %555 = math.exp %554 : vector<8x128xf32>
    %cst_189 = arith.constant 1.000000e+00 : f32
    %556 = vector.broadcast %cst_189 : f32 to vector<8x128xf32>
    %557 = arith.addf %556, %555 : vector<8x128xf32>
    %558 = arith.divf %556, %557 : vector<8x128xf32>
    %559 = vector.extract_strided_slice %546 {offsets = [0, 256], sizes = [8, 128], strides = [1, 1]} : vector<8x512xf32> to vector<8x128xf32>
    %560 = math.tanh %559 : vector<8x128xf32>
    %561 = vector.extract_strided_slice %546 {offsets = [0, 384], sizes = [8, 128], strides = [1, 1]} : vector<8x512xf32> to vector<8x128xf32>
    %562 = arith.negf %561 : vector<8x128xf32>
    %563 = math.exp %562 : vector<8x128xf32>
    %cst_190 = arith.constant 1.000000e+00 : f32
    %564 = vector.broadcast %cst_190 : f32 to vector<8x128xf32>
    %565 = arith.addf %564, %563 : vector<8x128xf32>
    %566 = arith.divf %564, %565 : vector<8x128xf32>
    %567 = arith.mulf %558, %500 : vector<8x128xf32>
    %568 = arith.mulf %552, %560 : vector<8x128xf32>
    %569 = arith.addf %567, %568 : vector<8x128xf32>
    %570 = math.tanh %569 : vector<8x128xf32>
    %571 = arith.mulf %566, %570 : vector<8x128xf32>
    %572 = arith.truncf %571 : vector<8x128xf32> to vector<8x128xbf16>
    %c0_191 = arith.constant 0 : index
    %c0_192 = arith.constant 0 : index
    %573 = vector.load %arg6[%c0_191, %c0_192] : memref<128x128xbf16, #tpu.memory_space<vmem>>, vector<128x128xbf16>
    %cst_193 = arith.constant dense<0.000000e+00> : vector<8x128xf32>
    %574 = tpu.matmul %572, %573, %cst_193 {dimension_numbers = #tpu.dot_dimension_numbers<[1], [0], [0], [1], [0, 0, 1, 1], [], []>} : vector<8x128xbf16>, vector<128x128xbf16>, vector<8x128xf32> -> vector<8x128xf32>
    %c0_194 = arith.constant 0 : index
    %c0_195 = arith.constant 0 : index
    %575 = vector.load %arg7[%c0_194, %c0_195] : memref<1x128xf32, #tpu.memory_space<vmem>>, vector<1x128xf32>
    %576 = vector.broadcast %575 : vector<1x128xf32> to vector<8x128xf32>
    %577 = arith.addf %574, %576 : vector<8x128xf32>
    %c0_196 = arith.constant 0 : index
    %c0_197 = arith.constant 0 : index
    %578 = vector.load %arg8[%c0_196, %c0_197] : memref<8x128xf32, #tpu.memory_space<vmem>>, vector<8x128xf32>
    tpu.vector_store %arg8[%c0_196, %c0_197], %577 {strides = array<i32>} : memref<8x128xf32, #tpu.memory_space<vmem>>, vector<8x128xf32>,
    return
  }
}

</mosaic_0001>

<llo_original>
// kernel: emojifier_forward.1
$region0: #{emojifier_forward.1}
  #allocation0 [shape = 'u32[]', space=smem, size = 0x4, offset = 0x4, fixed_abs, tag = 'smem constant byte address 0x4 - core index']
  #allocation1 [shape = 'u32[144,128]{1,0:T(1,128)}', space=vmem, size = 0x12000, scoped, tag = 'internal scratch']
  #allocation2 [shape = 'f32[64,512]{1,0:T(8,128)}', space=vmem, size = 0x20000, scoped, tag = 'scratch operand']
  %s0 = inlined_call_operand.vmem [shape: s32[64,128], index: 0, kind: input, shape index: {}]
  %s1 = inlined_call_operand.vmem [shape: bf16[128,128], index: 1, kind: input, shape index: {}]
  %s2 = inlined_call_operand.vmem [shape: bf16[128,512], index: 2, kind: input, shape index: {}]
  %s3 = inlined_call_operand.vmem [shape: bf16[1,128,512], index: 3, kind: input, shape index: {}]
  %s4 = inlined_call_operand.vmem [shape: bf16[2,128,512], index: 4, kind: input, shape index: {}]
  %s5 = inlined_call_operand.vmem [shape: f32[2,1,512], index: 5, kind: input, shape index: {}]
  %s6 = inlined_call_operand.vmem [shape: bf16[128,128], index: 6, kind: input, shape index: {}]
  %s7 = inlined_call_operand.vmem [shape: f32[1,128], index: 7, kind: input, shape index: {}]
  %s8 = inlined_call_operand.vmem [shape: f32[8,128], index: 8, kind: output, shape index: {}]
  %s9 = sld [smem:[#allocation0]]
  $region42: #{emojifier_forward.1} parent=0
    _
  %s11 = ssub.s32 1, %s9
  %s12 = scalar_select 0, %s11, %s9
  // Predicated region
  $region2: #{emojifier_forward.1} parent=0 // pred_check
    _
  $region3: #{emojifier_forward.1} parent=0 // pred_check_branch
    %14 = sbr.rel (0) target = $region5
  $region4: #{emojifier_forward.1} parent=0 // pred_region
    _
  $region5: #{emojifier_forward.1} parent=0 // pred_fallthru
    _
  // Predicated region
  $region6: #{emojifier_forward.1} parent=0 // pred_check
    _
  $region7: #{emojifier_forward.1} parent=0 // pred_check_branch
    %16 = sbr.rel (0) target = $region9
  $region8: #{emojifier_forward.1} parent=0 // pred_region
    _
  $region9: #{emojifier_forward.1} parent=0 // pred_fallthru
    _
  // Predicated region
  $region10: #{emojifier_forward.1} parent=0 // pred_check
    _
  $region11: #{emojifier_forward.1} parent=0 // pred_check_branch
    %18 = sbr.rel (0) target = $region13
  $region12: #{emojifier_forward.1} parent=0 // pred_region
    _
  $region13: #{emojifier_forward.1} parent=0 // pred_fallthru
    _
  // Predicated region
  $region14: #{emojifier_forward.1} parent=0 // pred_check
    _
  $region15: #{emojifier_forward.1} parent=0 // pred_check_branch
    %20 = sbr.rel (0) target = $region17
  $region16: #{emojifier_forward.1} parent=0 // pred_region
    _
  $region17: #{emojifier_forward.1} parent=0 // pred_fallthru
    _
  // Predicated region
  $region18: #{emojifier_forward.1} parent=0 // pred_check
    _
  $region19: #{emojifier_forward.1} parent=0 // pred_check_branch
    %22 = sbr.rel (0) target = $region21
  $region20: #{emojifier_forward.1} parent=0 // pred_region
    _
  $region21: #{emojifier_forward.1} parent=0 // pred_fallthru
    _
  // Predicated region
  $region22: #{emojifier_forward.1} parent=0 // pred_check
    _
  $region23: #{emojifier_forward.1} parent=0 // pred_check_branch
    %24 = sbr.rel (0) target = $region25
  $region24: #{emojifier_forward.1} parent=0 // pred_region
    _
  $region25: #{emojifier_forward.1} parent=0 // pred_fallthru
    _
  // Predicated region
  $region26: #{emojifier_forward.1} parent=0 // pred_check
    _
  $region27: #{emojifier_forward.1} parent=0 // pred_check_branch
    %26 = sbr.rel (0) target = $region29
  $region28: #{emojifier_forward.1} parent=0 // pred_region
    _
  $region29: #{emojifier_forward.1} parent=0 // pred_fallthru
    _
  // Predicated region
  $region30: #{emojifier_forward.1} parent=0 // pred_check
    _
  $region31: #{emojifier_forward.1} parent=0 // pred_check_branch
    %28 = sbr.rel (0) target = $region33
  $region32: #{emojifier_forward.1} parent=0 // pred_region
    _
  $region33: #{emojifier_forward.1} parent=0 // pred_fallthru
    _
  %v30 = vlaneseq
  %v31 = vand.u32 %v30, 127
  %v32 = vld [vmem:[%s0] sm:$0xff]
  %v33 = vld [vmem:[%s0 + $0x8] sm:$0xff]
  %v34 = vld [vmem:[%s0 + $0x10] sm:$0xff]
  %v35 = vld [vmem:[%s0 + $0x18] sm:$0xff]
  %v36 = vld [vmem:[%s0 + $0x20] sm:$0xff]
  %v37 = vld [vmem:[%s0 + $0x28] sm:$0xff]
  %v38 = vld [vmem:[%s0 + $0x30] sm:$0xff]
  %v39 = vld [vmem:[%s0 + $0x38] sm:$0xff]
  %vm40 = vcmp.eq.s32.totalorder %v31, %v32
  %vm41 = vcmp.eq.s32.totalorder %v31, %v33
  %vm42 = vcmp.eq.s32.totalorder %v31, %v34
  %vm43 = vcmp.eq.s32.totalorder %v31, %v35
  %vm44 = vcmp.eq.s32.totalorder %v31, %v36
  %vm45 = vcmp.eq.s32.totalorder %v31, %v37
  %vm46 = vcmp.eq.s32.totalorder %v31, %v38
  %vm47 = vcmp.eq.s32.totalorder %v31, %v39
  %v48 = vsel %vm40, 1, 0
  %v49 = vsel %vm41, 1, 0
  %v50 = vsel %vm42, 1, 0
  %v51 = vsel %vm43, 1, 0
  %v52 = vsel %vm44, 1, 0
  %v53 = vsel %vm45, 1, 0
  %v54 = vsel %vm46, 1, 0
  %v55 = vsel %vm47, 1, 0
  %v56 = vcvt.s32.f32 %v48
  %v57 = vcvt.s32.f32 %v49
  %v58 = vcvt.s32.f32 %v50
  %v59 = vcvt.s32.f32 %v51
  %v60 = vcvt.s32.f32 %v52
  %v61 = vcvt.s32.f32 %v53
  %v62 = vcvt.s32.f32 %v54
  %v63 = vcvt.s32.f32 %v55
  %v64 = vpack.c.bf16 %v57, %v56
  %v65 = vpack.c.bf16 %v59, %v58
  %v66 = vpack.c.bf16 %v61, %v60
  %v67 = vpack.c.bf16 %v63, %v62
  %v68 = vld [vmem:[%s1] sm:$0xf]
  %v69 = vld [vmem:[%s1 + $0x4] sm:$0xf]
  %v70 = vld [vmem:[%s1 + $0x8] sm:$0xf]
  %v71 = vld [vmem:[%s1 + $0xc] sm:$0xf]
  %v72 = vld [vmem:[%s1 + $0x10] sm:$0xf]
  %v73 = vld [vmem:[%s1 + $0x14] sm:$0xf]
  %v74 = vld [vmem:[%s1 + $0x18] sm:$0xf]
  %v75 = vld [vmem:[%s1 + $0x1c] sm:$0xf]
  %v76 = vld [vmem:[%s1 + $0x20] sm:$0xf]
  %v77 = vld [vmem:[%s1 + $0x24] sm:$0xf]
  %v78 = vld [vmem:[%s1 + $0x28] sm:$0xf]
  %v79 = vld [vmem:[%s1 + $0x2c] sm:$0xf]
  %v80 = vld [vmem:[%s1 + $0x30] sm:$0xf]
  %v81 = vld [vmem:[%s1 + $0x34] sm:$0xf]
  %v82 = vld [vmem:[%s1 + $0x38] sm:$0xf]
  %v83 = vld [vmem:[%s1 + $0x3c] sm:$0xf]
  %v100 = vunpack.c.l.b16 %v68
  %v101 = vunpack.c.l.b16 %v69
  %v102 = vunpack.c.l.b16 %v70
  %v103 = vunpack.c.l.b16 %v71
  %v104 = vunpack.c.l.b16 %v72
  %v105 = vunpack.c.l.b16 %v73
  %v106 = vunpack.c.l.b16 %v74
  %v107 = vunpack.c.l.b16 %v75
  %v108 = vunpack.c.l.b16 %v76
  %v109 = vunpack.c.l.b16 %v77
  %v110 = vunpack.c.l.b16 %v78
  %v111 = vunpack.c.l.b16 %v79
  %v112 = vunpack.c.l.b16 %v80
  %v113 = vunpack.c.l.b16 %v81
  %v114 = vunpack.c.l.b16 %v82
  %v115 = vunpack.c.l.b16 %v83
  %v116 = vpack.c.b16 %v101, %v100
  %v117 = vpack.c.b16 %v103, %v102
  %v118 = vpack.c.b16 %v105, %v104
  %v119 = vpack.c.b16 %v107, %v106
  %v120 = vpack.c.b16 %v109, %v108
  %v121 = vpack.c.b16 %v111, %v110
  %v122 = vpack.c.b16 %v113, %v112
  %v123 = vpack.c.b16 %v115, %v114
  %132 = vmatprep.subr.bf16.mxu0 0
  %133 = vmatpush1.bf16.msra.mxu0 %v116
  %134 = vmatprep.subr.bf16.mxu0 0
  %135 = vmatpush1.bf16.msra.mxu0 %v117
  %136 = vmatprep.subr.bf16.mxu0 0
  %137 = vmatpush1.bf16.msra.mxu0 %v118
  %138 = vmatprep.subr.bf16.mxu0 0
  %139 = vmatpush1.bf16.msra.mxu0 %v119
  %140 = vmatprep.subr.bf16.mxu0 0
  %141 = vmatpush1.bf16.msra.mxu0 %v120
  %142 = vmatprep.subr.bf16.mxu0 0
  %143 = vmatpush1.bf16.msra.mxu0 %v121
  %144 = vmatprep.subr.bf16.mxu0 0
  %145 = vmatpush1.bf16.msra.mxu0 %v122
  %146 = vmatprep.subr.bf16.mxu0 0
  %147 = vmatpush1.bf16.msra.mxu0 %v123
  %148 = vmatprep.subr.bf16.mxu0 0
  %149 = vmatpush1.bf16.msra.mxu0 0
  %150 = vmatprep.subr.bf16.mxu0 0
  %151 = vmatpush1.bf16.msra.mxu0 0
  %152 = vmatprep.subr.bf16.mxu0 0
  %153 = vmatpush1.bf16.msra.mxu0 0
  %154 = vmatprep.subr.bf16.mxu0 0
  %155 = vmatpush1.bf16.msra.mxu0 0
  %156 = vmatprep.subr.bf16.mxu0 0
  %157 = vmatpush1.bf16.msra.mxu0 0
  %158 = vmatprep.subr.bf16.mxu0 0
  %159 = vmatpush1.bf16.msra.mxu0 0
  %160 = vmatprep.subr.bf16.mxu0 0
  %161 = vmatpush1.bf16.msra.mxu0 0
  %162 = vmatprep.subr.bf16.mxu0 0
  %163 = vmatpush1.bf16.msra.mxu0 0
  %164 = vmatprep.mubr.bf16.mxu0 0
  %165 = vmatmul.mubr.bf16.gmra.mrb[0].mxu0 %v64
  %v166 = vpop.f32.mrb[0].mxu0
  %v167 = vadd.f32 0.0, %v166
  %v168 = vpop.f32.mrb[0].mxu0
  %v169 = vpop.f32.mrb[0].mxu0
  %v170 = vadd.f32 0.0, %v169
  %v171 = vpop.f32.mrb[0].mxu0
  %172 = vmatprep.mubr.bf16.mxu0 0
  %173 = vmatmul.mubr.bf16.gmra.mrb[0].mxu0 %v65
  %v174 = vpop.f32.mrb[0].mxu0
  %v175 = vadd.f32 0.0, %v174
  %v176 = vpop.f32.mrb[0].mxu0
  %v177 = vpop.f32.mrb[0].mxu0
  %v178 = vadd.f32 0.0, %v177
  %v179 = vpop.f32.mrb[0].mxu0
  %180 = vmatprep.mubr.bf16.mxu0 0
  %181 = vmatmul.mubr.bf16.gmra.mrb[0].mxu0 %v66
  %v182 = vpop.f32.mrb[0].mxu0
  %v183 = vadd.f32 0.0, %v182
  %v184 = vpop.f32.mrb[0].mxu0
  %v185 = vpop.f32.mrb[0].mxu0
  %v186 = vadd.f32 0.0, %v185
  %v187 = vpop.f32.mrb[0].mxu0
  %188 = vmatprep.mubr.bf16.mxu0 0
  %189 = vmatmul.mubr.bf16.gmra.mrb[0].mxu0 %v67
  %v190 = vpop.f32.mrb[0].mxu0
  %v191 = vadd.f32 0.0, %v190
  %v192 = vpop.f32.mrb[0].mxu0
  %v193 = vpop.f32.mrb[0].mxu0
  %v194 = vadd.f32 0.0, %v193
  %v195 = vpop.f32.mrb[0].mxu0
  %196 = vdwg.mxu0
  %v197 = vpack.c.bf16 %v170, %v167
  %v198 = vpack.c.bf16 %v178, %v175
  %v199 = vpack.c.bf16 %v186, %v183
  %v200 = vpack.c.bf16 %v194, %v191
  %v201 = vld [vmem:[%s2] sm:$0xff]
  %v202 = vld [vmem:[%s2 + $0x8] sm:$0xff]
  %v203 = vld [vmem:[%s2 + $0x10] sm:$0xff]
  %v204 = vld [vmem:[%s2 + $0x18] sm:$0xff]
  %v205 = vld [vmem:[%s2 + $0x20] sm:$0xff]
  %v206 = vld [vmem:[%s2 + $0x28] sm:$0xff]
  %v207 = vld [vmem:[%s2 + $0x30] sm:$0xff]
  %v208 = vld [vmem:[%s2 + $0x38] sm:$0xff]
  %v209 = vld [vmem:[%s2 + $0x40] sm:$0xff]
  %v210 = vld [vmem:[%s2 + $0x48] sm:$0xff]
  %v211 = vld [vmem:[%s2 + $0x50] sm:$0xff]
  %v212 = vld [vmem:[%s2 + $0x58] sm:$0xff]
  %v213 = vld [vmem:[%s2 + $0x60] sm:$0xff]
  %v214 = vld [vmem:[%s2 + $0x68] sm:$0xff]
  %v215 = vld [vmem:[%s2 + $0x70] sm:$0xff]
  %v216 = vld [vmem:[%s2 + $0x78] sm:$0xff]
  %v217 = vld [vmem:[%s2 + $0x80] sm:$0xff]
  %v218 = vld [vmem:[%s2 + $0x88] sm:$0xff]
  %v219 = vld [vmem:[%s2 + $0x90] sm:$0xff]
  %v220 = vld [vmem:[%s2 + $0x98] sm:$0xff]
  %v221 = vld [vmem:[%s2 + $0xa0] sm:$0xff]
  %v222 = vld [vmem:[%s2 + $0xa8] sm:$0xff]
  %v223 = vld [vmem:[%s2 + $0xb0] sm:$0xff]
  %v224 = vld [vmem:[%s2 + $0xb8] sm:$0xff]
  %v225 = vld [vmem:[%s2 + $0xc0] sm:$0xff]
  %v226 = vld [vmem:[%s2 + $0xc8] sm:$0xff]
  %v227 = vld [vmem:[%s2 + $0xd0] sm:$0xff]
  %v228 = vld [vmem:[%s2 + $0xd8] sm:$0xff]
  %v229 = vld [vmem:[%s2 + $0xe0] sm:$0xff]
  %v230 = vld [vmem:[%s2 + $0xe8] sm:$0xff]
  %v231 = vld [vmem:[%s2 + $0xf0] sm:$0xff]
  %v232 = vld [vmem:[%s2 + $0xf8] sm:$0xff]
  %v233 = vld [vmem:[%s5] sm:$0xf]
  %v235 = vlaneseq
  %v236 = vshrl.u32 %v235, 7
  %v237 = vsub.s32 0, %v236
  %v238 = vrot.slane %v233, %v237
  %v239 = vlaneseq
  %v240 = vshrl.u32 %v239, 7
  %v241 = vsub.s32 1, %v240
  %v242 = vrot.slane %v233, %v241
  %v243 = vlaneseq
  %v244 = vshrl.u32 %v243, 7
  %v245 = vsub.s32 2, %v244
  %v246 = vrot.slane %v233, %v245
  %v247 = vlaneseq
  %v248 = vshrl.u32 %v247, 7
  %v249 = vsub.s32 3, %v248
  %v250 = vrot.slane %v233, %v249
  %v287 = vunpack.c.l.b16 %v201
  %v288 = vunpack.c.h.b16 %v201
  %v289 = vunpack.c.l.b16 %v202
  %v290 = vunpack.c.h.b16 %v202
  %v291 = vunpack.c.l.b16 %v203
  %v292 = vunpack.c.h.b16 %v203
  %v293 = vunpack.c.l.b16 %v204
  %v294 = vunpack.c.h.b16 %v204
  %v295 = vunpack.c.l.b16 %v205
  %v296 = vunpack.c.h.b16 %v205
  %v297 = vunpack.c.l.b16 %v206
  %v298 = vunpack.c.h.b16 %v206
  %v299 = vunpack.c.l.b16 %v207
  %v300 = vunpack.c.h.b16 %v207
  %v301 = vunpack.c.l.b16 %v208
  %v302 = vunpack.c.h.b16 %v208
  %v303 = vunpack.c.l.b16 %v209
  %v304 = vunpack.c.h.b16 %v209
  %v305 = vunpack.c.l.b16 %v210
  %v306 = vunpack.c.h.b16 %v210
  %v307 = vunpack.c.l.b16 %v211
  %v308 = vunpack.c.h.b16 %v211
  %v309 = vunpack.c.l.b16 %v212
  %v310 = vunpack.c.h.b16 %v212
  %v311 = vunpack.c.l.b16 %v213
  %v312 = vunpack.c.h.b16 %v213
  %v313 = vunpack.c.l.b16 %v214
  %v314 = vunpack.c.h.b16 %v214
  %v315 = vunpack.c.l.b16 %v215
  %v316 = vunpack.c.h.b16 %v215
  %v317 = vunpack.c.l.b16 %v216
  %v318 = vunpack.c.h.b16 %v216
  %v319 = vunpack.c.l.b16 %v217
  %v320 = vunpack.c.h.b16 %v217
  %v321 = vunpack.c.l.b16 %v218
  %v322 = vunpack.c.h.b16 %v218
  %v323 = vunpack.c.l.b16 %v219
  %v324 = vunpack.c.h.b16 %v219
  %v325 = vunpack.c.l.b16 %v220
  %v326 = vunpack.c.h.b16 %v220
  %v327 = vunpack.c.l.b16 %v221
  %v328 = vunpack.c.h.b16 %v221
  %v329 = vunpack.c.l.b16 %v222
  %v330 = vunpack.c.h.b16 %v222
  %v331 = vunpack.c.l.b16 %v223
  %v332 = vunpack.c.h.b16 %v223
  %v333 = vunpack.c.l.b16 %v224
  %v334 = vunpack.c.h.b16 %v224
  %v335 = vunpack.c.l.b16 %v225
  %v336 = vunpack.c.h.b16 %v225
  %v337 = vunpack.c.l.b16 %v226
  %v338 = vunpack.c.h.b16 %v226
  %v339 = vunpack.c.l.b16 %v227
  %v340 = vunpack.c.h.b16 %v227
  %v341 = vunpack.c.l.b16 %v228
  %v342 = vunpack.c.h.b16 %v228
  %v343 = vunpack.c.l.b16 %v229
  %v344 = vunpack.c.h.b16 %v229
  %v345 = vunpack.c.l.b16 %v230
  %v346 = vunpack.c.h.b16 %v230
  %v347 = vunpack.c.l.b16 %v231
  %v348 = vunpack.c.h.b16 %v231
  %v349 = vunpack.c.l.b16 %v232
  %v350 = vunpack.c.h.b16 %v232
  %v351 = vpack.c.b16 %v291, %v287
  %v352 = vpack.c.b16 %v292, %v288
  %v353 = vpack.c.b16 %v293, %v289
  %v354 = vpack.c.b16 %v294, %v290
  %v355 = vpack.c.b16 %v299, %v295
  %v356 = vpack.c.b16 %v300, %v296
  %v357 = vpack.c.b16 %v301, %v297
  %v358 = vpack.c.b16 %v302, %v298
  %v359 = vpack.c.b16 %v307, %v303
  %v360 = vpack.c.b16 %v308, %v304
  %v361 = vpack.c.b16 %v309, %v305
  %v362 = vpack.c.b16 %v310, %v306
  %v363 = vpack.c.b16 %v315, %v311
  %v364 = vpack.c.b16 %v316, %v312
  %v365 = vpack.c.b16 %v317, %v313
  %v366 = vpack.c.b16 %v318, %v314
  %v367 = vpack.c.b16 %v323, %v319
  %v368 = vpack.c.b16 %v324, %v320
  %v369 = vpack.c.b16 %v325, %v321
  %v370 = vpack.c.b16 %v326, %v322
  %v371 = vpack.c.b16 %v331, %v327
  %v372 = vpack.c.b16 %v332, %v328
  %v373 = vpack.c.b16 %v333, %v329
  %v374 = vpack.c.b16 %v334, %v330
  %v375 = vpack.c.b16 %v339, %v335
  %v376 = vpack.c.b16 %v340, %v336
  %v377 = vpack.c.b16 %v341, %v337
  %v378 = vpack.c.b16 %v342, %v338
  %v379 = vpack.c.b16 %v347, %v343
  %v380 = vpack.c.b16 %v348, %v344
  %v381 = vpack.c.b16 %v349, %v345
  %v382 = vpack.c.b16 %v350, %v346
  %415 = vmatprep.subr.bf16.mxu0 %v352
  %416 = vmatpush1.bf16.msra.mxu0 %v351
  %417 = vmatprep.subr.bf16.mxu0 %v356
  %418 = vmatpush1.bf16.msra.mxu0 %v355
  %419 = vmatprep.subr.bf16.mxu0 %v360
  %420 = vmatpush1.bf16.msra.mxu0 %v359
  %421 = vmatprep.subr.bf16.mxu0 %v364
  %422 = vmatpush1.bf16.msra.mxu0 %v363
  %423 = vmatprep.subr.bf16.mxu0 %v368
  %424 = vmatpush1.bf16.msra.mxu0 %v367
  %425 = vmatprep.subr.bf16.mxu0 %v372
  %426 = vmatpush1.bf16.msra.mxu0 %v371
  %427 = vmatprep.subr.bf16.mxu0 %v376
  %428 = vmatpush1.bf16.msra.mxu0 %v375
  %429 = vmatprep.subr.bf16.mxu0 %v380
  %430 = vmatpush1.bf16.msra.mxu0 %v379
  %431 = vmatprep.subr.bf16.mxu0 0
  %432 = vmatpush1.bf16.msra.mxu0 0
  %433 = vmatprep.subr.bf16.mxu0 0
  %434 = vmatpush1.bf16.msra.mxu0 0
  %435 = vmatprep.subr.bf16.mxu0 0
  %436 = vmatpush1.bf16.msra.mxu0 0
  %437 = vmatprep.subr.bf16.mxu0 0
  %438 = vmatpush1.bf16.msra.mxu0 0
  %439 = vmatprep.subr.bf16.mxu0 0
  %440 = vmatpush1.bf16.msra.mxu0 0
  %441 = vmatprep.subr.bf16.mxu0 0
  %442 = vmatpush1.bf16.msra.mxu0 0
  %443 = vmatprep.subr.bf16.mxu0 0
  %444 = vmatpush1.bf16.msra.mxu0 0
  %445 = vmatprep.subr.bf16.mxu0 0
  %446 = vmatpush1.bf16.msra.mxu0 0
  %447 = vmatprep.mubr.bf16.mxu0 0
  %448 = vmatmul.mubr.bf16.gmra.mrb[0].mxu0 %v197
  %v449 = vpop.f32.mrb[0].mxu0
  %v450 = vadd.f32 %v238, %v449
  %v451 = vpop.f32.mrb[0].mxu0
  %v452 = vadd.f32 %v242, %v451
  %v453 = vpop.f32.mrb[0].mxu0
  %v454 = vadd.f32 %v238, %v453
  %v455 = vpop.f32.mrb[0].mxu0
  %v456 = vadd.f32 %v242, %v455
  %457 = vmatprep.mubr.bf16.mxu0 0
  %458 = vmatmul.mubr.bf16.gmra.mrb[0].mxu0 %v198
  %v459 = vpop.f32.mrb[0].mxu0
  %v460 = vadd.f32 %v238, %v459
  %v461 = vpop.f32.mrb[0].mxu0
  %v462 = vadd.f32 %v242, %v461
  %v463 = vpop.f32.mrb[0].mxu0
  %v464 = vadd.f32 %v238, %v463
  %v465 = vpop.f32.mrb[0].mxu0
  %v466 = vadd.f32 %v242, %v465
  %467 = vmatprep.mubr.bf16.mxu0 0
  %468 = vmatmul.mubr.bf16.gmra.mrb[0].mxu0 %v199
  %v469 = vpop.f32.mrb[0].mxu0
  %v470 = vadd.f32 %v238, %v469
  %v471 = vpop.f32.mrb[0].mxu0
  %v472 = vadd.f32 %v242, %v471
  %v473 = vpop.f32.mrb[0].mxu0
  %v474 = vadd.f32 %v238, %v473
  %v475 = vpop.f32.mrb[0].mxu0
  %v476 = vadd.f32 %v242, %v475
  %477 = vmatprep.mubr.bf16.mxu0 0
  %478 = vmatmul.mubr.bf16.gmra.mrb[0].mxu0 %v200
  %v479 = vpop.f32.mrb[0].mxu0
  %v480 = vadd.f32 %v238, %v479
  %v481 = vpop.f32.mrb[0].mxu0
  %v482 = vadd.f32 %v242, %v481
  %v483 = vpop.f32.mrb[0].mxu0
  %v484 = vadd.f32 %v238, %v483
  %v485 = vpop.f32.mrb[0].mxu0
  %v486 = vadd.f32 %v242, %v485
  %487 = vdwg.mxu0
  %488 = vmatprep.subr.bf16.mxu0 %v354
  %489 = vmatpush1.bf16.msra.mxu0 %v353
  %490 = vmatprep.subr.bf16.mxu0 %v358
  %491 = vmatpush1.bf16.msra.mxu0 %v357
  %492 = vmatprep.subr.bf16.mxu0 %v362
  %493 = vmatpush1.bf16.msra.mxu0 %v361
  %494 = vmatprep.subr.bf16.mxu0 %v366
  %495 = vmatpush1.bf16.msra.mxu0 %v365
  %496 = vmatprep.subr.bf16.mxu0 %v370
  %497 = vmatpush1.bf16.msra.mxu0 %v369
  %498 = vmatprep.subr.bf16.mxu0 %v374
  %499 = vmatpush1.bf16.msra.mxu0 %v373
  %500 = vmatprep.subr.bf16.mxu0 %v378
  %501 = vmatpush1.bf16.msra.mxu0 %v377
  %502 = vmatprep.subr.bf16.mxu0 %v382
  %503 = vmatpush1.bf16.msra.mxu0 %v381
  %504 = vmatprep.subr.bf16.mxu0 0
  %505 = vmatpush1.bf16.msra.mxu0 0
  %506 = vmatprep.subr.bf16.mxu0 0
  %507 = vmatpush1.bf16.msra.mxu0 0
  %508 = vmatprep.subr.bf16.mxu0 0
  %509 = vmatpush1.bf16.msra.mxu0 0
  %510 = vmatprep.subr.bf16.mxu0 0
  %511 = vmatpush1.bf16.msra.mxu0 0
  %512 = vmatprep.subr.bf16.mxu0 0
  %513 = vmatpush1.bf16.msra.mxu0 0
  %514 = vmatprep.subr.bf16.mxu0 0
  %515 = vmatpush1.bf16.msra.mxu0 0
  %516 = vmatprep.subr.bf16.mxu0 0
  %517 = vmatpush1.bf16.msra.mxu0 0
  %518 = vmatprep.subr.bf16.mxu0 0
  %519 = vmatpush1.bf16.msra.mxu0 0
  %520 = vmatprep.mubr.bf16.mxu0 0
  %521 = vmatmul.mubr.bf16.gmra.mrb[0].mxu0 %v197
  %v522 = vpop.f32.mrb[0].mxu0
  %v523 = vadd.f32 %v246, %v522
  %v524 = vpop.f32.mrb[0].mxu0
  %v525 = vadd.f32 %v250, %v524
  %v526 = vpop.f32.mrb[0].mxu0
  %v527 = vadd.f32 %v246, %v526
  %v528 = vpop.f32.mrb[0].mxu0
  %v529 = vadd.f32 %v250, %v528
  %530 = vmatprep.mubr.bf16.mxu0 0
  %531 = vmatmul.mubr.bf16.gmra.mrb[0].mxu0 %v198
  %v532 = vpop.f32.mrb[0].mxu0
  %v533 = vadd.f32 %v246, %v532
  %v534 = vpop.f32.mrb[0].mxu0
  %v535 = vadd.f32 %v250, %v534
  %v536 = vpop.f32.mrb[0].mxu0
  %v537 = vadd.f32 %v246, %v536
  %v538 = vpop.f32.mrb[0].mxu0
  %v539 = vadd.f32 %v250, %v538
  %540 = vmatprep.mubr.bf16.mxu0 0
  %541 = vmatmul.mubr.bf16.gmra.mrb[0].mxu0 %v199
  %v542 = vpop.f32.mrb[0].mxu0
  %v543 = vadd.f32 %v246, %v542
  %v544 = vpop.f32.mrb[0].mxu0
  %v545 = vadd.f32 %v250, %v544
  %v546 = vpop.f32.mrb[0].mxu0
  %v547 = vadd.f32 %v246, %v546
  %v548 = vpop.f32.mrb[0].mxu0
  %v549 = vadd.f32 %v250, %v548
  %550 = vmatprep.mubr.bf16.mxu0 0
  %551 = vmatmul.mubr.bf16.gmra.mrb[0].mxu0 %v200
  %v552 = vpop.f32.mrb[0].mxu0
  %v553 = vadd.f32 %v246, %v552
  %v554 = vpop.f32.mrb[0].mxu0
  %v555 = vadd.f32 %v250, %v554
  %v556 = vpop.f32.mrb[0].mxu0
  %v557 = vadd.f32 %v246, %v556
  %v558 = vpop.f32.mrb[0].mxu0
  %v559 = vadd.f32 %v250, %v558
  %560 = vdwg.mxu0
  %561 = vst [vmem:[#allocation2] sm:$0xff] %v450
  %562 = vst [vmem:[#allocation2 + $0x8] sm:$0xff] %v452
  %563 = vst [vmem:[#allocation2 + $0x10] sm:$0xff] %v523
  %564 = vst [vmem:[#allocation2 + $0x18] sm:$0xff] %v525
  %565 = vst [vmem:[#allocation2 + $0x20] sm:$0xff] %v454
  %566 = vst [vmem:[#allocation2 + $0x28] sm:$0xff] %v456
  %567 = vst [vmem:[#allocation2 + $0x30] sm:$0xff] %v527
  %568 = vst [vmem:[#allocation2 + $0x38] sm:$0xff] %v529
  %569 = vst [vmem:[#allocation2 + $0x40] sm:$0xff] %v460
  %570 = vst [vmem:[#allocation2 + $0x48] sm:$0xff] %v462
  %571 = vst [vmem:[#allocation2 + $0x50] sm:$0xff] %v533
  %572 = vst [vmem:[#allocation2 + $0x58] sm:$0xff] %v535
  %573 = vst [vmem:[#allocation2 + $0x60] sm:$0xff] %v464
  %574 = vst [vmem:[#allocation2 + $0x68] sm:$0xff] %v466
  %575 = vst [vmem:[#allocation2 + $0x70] sm:$0xff] %v537
  %576 = vst [vmem:[#allocation2 + $0x78] sm:$0xff] %v539
  %577 = vst [vmem:[#allocation2 + $0x80] sm:$0xff] %v470
  %578 = vst [vmem:[#allocation2 + $0x88] sm:$0xff] %v472
  %579 = vst [vmem:[#allocation2 + $0x90] sm:$0xff] %v543
  %580 = vst [vmem:[#allocation2 + $0x98] sm:$0xff] %v545
  %581 = vst [vmem:[#allocation2 + $0xa0] sm:$0xff] %v474
  %582 = vst [vmem:[#allocation2 + $0xa8] sm:$0xff] %v476
  %583 = vst [vmem:[#allocation2 + $0xb0] sm:$0xff] %v547
  %584 = vst [vmem:[#allocation2 + $0xb8] sm:$0xff] %v549
  %585 = vst [vmem:[#allocation2 + $0xc0] sm:$0xff] %v480
  %586 = vst [vmem:[#allocation2 + $0xc8] sm:$0xff] %v482
  %587 = vst [vmem:[#allocation2 + $0xd0] sm:$0xff] %v553
  %588 = vst [vmem:[#allocation2 + $0xd8] sm:$0xff] %v555
  %589 = vst [vmem:[#allocation2 + $0xe0] sm:$0xff] %v484
  %590 = vst [vmem:[#allocation2 + $0xe8] sm:$0xff] %v486
  %591 = vst [vmem:[#allocation2 + $0xf0] sm:$0xff] %v557
  %592 = vst [vmem:[#allocation2 + $0xf8] sm:$0xff] %v559
  %v593 = vld [vmem:[#allocation2] sm:$0xff]
  %v594 = vld [vmem:[#allocation2 + $0x8] sm:$0xff]
  %v595 = vld [vmem:[#allocation2 + $0x10] sm:$0xff]
  %v596 = vld [vmem:[#allocation2 + $0x18] sm:$0xff]
  %v597 = vld [vmem:[%s4] sm:$0xff]
  %v598 = vld [vmem:[%s4 + $0x8] sm:$0xff]
  %v599 = vld [vmem:[%s4 + $0x10] sm:$0xff]
  %v600 = vld [vmem:[%s4 + $0x18] sm:$0xff]
  %v601 = vld [vmem:[%s4 + $0x20] sm:$0xff]
  %v602 = vld [vmem:[%s4 + $0x28] sm:$0xff]
  %v603 = vld [vmem:[%s4 + $0x30] sm:$0xff]
  %v604 = vld [vmem:[%s4 + $0x38] sm:$0xff]
  %v605 = vld [vmem:[%s4 + $0x40] sm:$0xff]
  %v606 = vld [vmem:[%s4 + $0x48] sm:$0xff]
  %v607 = vld [vmem:[%s4 + $0x50] sm:$0xff]
  %v608 = vld [vmem:[%s4 + $0x58] sm:$0xff]
  %v609 = vld [vmem:[%s4 + $0x60] sm:$0xff]
  %v610 = vld [vmem:[%s4 + $0x68] sm:$0xff]
  %v611 = vld [vmem:[%s4 + $0x70] sm:$0xff]
  %v612 = vld [vmem:[%s4 + $0x78] sm:$0xff]
  %v613 = vld [vmem:[%s4 + $0x80] sm:$0xff]
  %v614 = vld [vmem:[%s4 + $0x88] sm:$0xff]
  %v615 = vld [vmem:[%s4 + $0x90] sm:$0xff]
  %v616 = vld [vmem:[%s4 + $0x98] sm:$0xff]
  %v617 = vld [vmem:[%s4 + $0xa0] sm:$0xff]
  %v618 = vld [vmem:[%s4 + $0xa8] sm:$0xff]
  %v619 = vld [vmem:[%s4 + $0xb0] sm:$0xff]
  %v620 = vld [vmem:[%s4 + $0xb8] sm:$0xff]
  %v621 = vld [vmem:[%s4 + $0xc0] sm:$0xff]
  %v622 = vld [vmem:[%s4 + $0xc8] sm:$0xff]
  %v623 = vld [vmem:[%s4 + $0xd0] sm:$0xff]
  %v624 = vld [vmem:[%s4 + $0xd8] sm:$0xff]
  %v625 = vld [vmem:[%s4 + $0xe0] sm:$0xff]
  %v626 = vld [vmem:[%s4 + $0xe8] sm:$0xff]
  %v627 = vld [vmem:[%s4 + $0xf0] sm:$0xff]
  %v628 = vld [vmem:[%s4 + $0xf8] sm:$0xff]
  %v661 = vunpack.c.l.b16 %v597
  %v662 = vunpack.c.h.b16 %v597
  %v663 = vunpack.c.l.b16 %v598
  %v664 = vunpack.c.h.b16 %v598
  %v665 = vunpack.c.l.b16 %v599
  %v666 = vunpack.c.h.b16 %v599
  %v667 = vunpack.c.l.b16 %v600
  %v668 = vunpack.c.h.b16 %v600
  %v669 = vunpack.c.l.b16 %v601
  %v670 = vunpack.c.h.b16 %v601
  %v671 = vunpack.c.l.b16 %v602
  %v672 = vunpack.c.h.b16 %v602
  %v673 = vunpack.c.l.b16 %v603
  %v674 = vunpack.c.h.b16 %v603
  %v675 = vunpack.c.l.b16 %v604
  %v676 = vunpack.c.h.b16 %v604
  %v677 = vunpack.c.l.b16 %v605
  %v678 = vunpack.c.h.b16 %v605
  %v679 = vunpack.c.l.b16 %v606
  %v680 = vunpack.c.h.b16 %v606
  %v681 = vunpack.c.l.b16 %v607
  %v682 = vunpack.c.h.b16 %v607
  %v683 = vunpack.c.l.b16 %v608
  %v684 = vunpack.c.h.b16 %v608
  %v685 = vunpack.c.l.b16 %v609
  %v686 = vunpack.c.h.b16 %v609
  %v687 = vunpack.c.l.b16 %v610
  %v688 = vunpack.c.h.b16 %v610
  %v689 = vunpack.c.l.b16 %v611
  %v690 = vunpack.c.h.b16 %v611
  %v691 = vunpack.c.l.b16 %v612
  %v692 = vunpack.c.h.b16 %v612
  %v693 = vunpack.c.l.b16 %v613
  %v694 = vunpack.c.h.b16 %v613
  %v695 = vunpack.c.l.b16 %v614
  %v696 = vunpack.c.h.b16 %v614
  %v697 = vunpack.c.l.b16 %v615
  %v698 = vunpack.c.h.b16 %v615
  %v699 = vunpack.c.l.b16 %v616
  %v700 = vunpack.c.h.b16 %v616
  %v701 = vunpack.c.l.b16 %v617
  %v702 = vunpack.c.h.b16 %v617
  %v703 = vunpack.c.l.b16 %v618
  %v704 = vunpack.c.h.b16 %v618
  %v705 = vunpack.c.l.b16 %v619
  %v706 = vunpack.c.h.b16 %v619
  %v707 = vunpack.c.l.b16 %v620
  %v708 = vunpack.c.h.b16 %v620
  %v709 = vunpack.c.l.b16 %v621
  %v710 = vunpack.c.h.b16 %v621
  %v711 = vunpack.c.l.b16 %v622
  %v712 = vunpack.c.h.b16 %v622
  %v713 = vunpack.c.l.b16 %v623
  %v714 = vunpack.c.h.b16 %v623
  %v715 = vunpack.c.l.b16 %v624
  %v716 = vunpack.c.h.b16 %v624
  %v717 = vunpack.c.l.b16 %v625
  %v718 = vunpack.c.h.b16 %v625
  %v719 = vunpack.c.l.b16 %v626
  %v720 = vunpack.c.h.b16 %v626
  %v721 = vunpack.c.l.b16 %v627
  %v722 = vunpack.c.h.b16 %v627
  %v723 = vunpack.c.l.b16 %v628
  %v724 = vunpack.c.h.b16 %v628
  %v725 = vpack.c.b16 %v665, %v661
  %v726 = vpack.c.b16 %v666, %v662
  %v727 = vpack.c.b16 %v667, %v663
  %v728 = vpack.c.b16 %v668, %v664
  %v729 = vpack.c.b16 %v673, %v669
  %v730 = vpack.c.b16 %v674, %v670
  %v731 = vpack.c.b16 %v675, %v671
  %v732 = vpack.c.b16 %v676, %v672
  %v733 = vpack.c.b16 %v681, %v677
  %v734 = vpack.c.b16 %v682, %v678
  %v735 = vpack.c.b16 %v683, %v679
  %v736 = vpack.c.b16 %v684, %v680
  %v737 = vpack.c.b16 %v689, %v685
  %v738 = vpack.c.b16 %v690, %v686
  %v739 = vpack.c.b16 %v691, %v687
  %v740 = vpack.c.b16 %v692, %v688
  %v741 = vpack.c.b16 %v697, %v693
  %v742 = vpack.c.b16 %v698, %v694
  %v743 = vpack.c.b16 %v699, %v695
  %v744 = vpack.c.b16 %v700, %v696
  %v745 = vpack.c.b16 %v705, %v701
  %v746 = vpack.c.b16 %v706, %v702
  %v747 = vpack.c.b16 %v707, %v703
  %v748 = vpack.c.b16 %v708, %v704
  %v749 = vpack.c.b16 %v713, %v709
  %v750 = vpack.c.b16 %v714, %v710
  %v751 = vpack.c.b16 %v715, %v711
  %v752 = vpack.c.b16 %v716, %v712
  %v753 = vpack.c.b16 %v721, %v717
  %v754 = vpack.c.b16 %v722, %v718
  %v755 = vpack.c.b16 %v723, %v719
  %v756 = vpack.c.b16 %v724, %v720
  %789 = vmatprep.subr.bf16.mxu0 %v726
  %790 = vmatpush1.bf16.msra.mxu0 %v725
  %791 = vmatprep.subr.bf16.mxu0 %v730
  %792 = vmatpush1.bf16.msra.mxu0 %v729
  %793 = vmatprep.subr.bf16.mxu0 %v734
  %794 = vmatpush1.bf16.msra.mxu0 %v733
  %795 = vmatprep.subr.bf16.mxu0 %v738
  %796 = vmatpush1.bf16.msra.mxu0 %v737
  %797 = vmatprep.subr.bf16.mxu0 %v742
  %798 = vmatpush1.bf16.msra.mxu0 %v741
  %799 = vmatprep.subr.bf16.mxu0 %v746
  %800 = vmatpush1.bf16.msra.mxu0 %v745
  %801 = vmatprep.subr.bf16.mxu0 %v750
  %802 = vmatpush1.bf16.msra.mxu0 %v749
  %803 = vmatprep.subr.bf16.mxu0 %v754
  %804 = vmatpush1.bf16.msra.mxu0 %v753
  %805 = vmatprep.subr.bf16.mxu0 0
  %806 = vmatpush1.bf16.msra.mxu0 0
  %807 = vmatprep.subr.bf16.mxu0 0
  %808 = vmatpush1.bf16.msra.mxu0 0
  %809 = vmatprep.subr.bf16.mxu0 0
  %810 = vmatpush1.bf16.msra.mxu0 0
  %811 = vmatprep.subr.bf16.mxu0 0
  %812 = vmatpush1.bf16.msra.mxu0 0
  %813 = vmatprep.subr.bf16.mxu0 0
  %814 = vmatpush1.bf16.msra.mxu0 0
  %815 = vmatprep.subr.bf16.mxu0 0
  %816 = vmatpush1.bf16.msra.mxu0 0
  %817 = vmatprep.subr.bf16.mxu0 0
  %818 = vmatpush1.bf16.msra.mxu0 0
  %819 = vmatprep.subr.bf16.mxu0 0
  %820 = vmatpush1.bf16.msra.mxu0 0
  %821 = vmatprep.mubr.bf16.mxu0 0
  %822 = vmatmul.mubr.bf16.gmra.mrb[0].mxu0 0
  %v823 = vpop.f32.mrb[0].mxu0
  %v824 = vadd.f32 0.0, %v823
  %v825 = vpop.f32.mrb[0].mxu0
  %v826 = vadd.f32 0.0, %v825
  %v827 = vpop.f32.mrb[0].mxu0
  %v828 = vpop.f32.mrb[0].mxu0
  %829 = vdwg.mxu0
  %830 = vmatprep.subr.bf16.mxu0 %v728
  %831 = vmatpush1.bf16.msra.mxu0 %v727
  %832 = vmatprep.subr.bf16.mxu0 %v732
  %833 = vmatpush1.bf16.msra.mxu0 %v731
  %834 = vmatprep.subr.bf16.mxu0 %v736
  %835 = vmatpush1.bf16.msra.mxu0 %v735
  %836 = vmatprep.subr.bf16.mxu0 %v740
  %837 = vmatpush1.bf16.msra.mxu0 %v739
  %838 = vmatprep.subr.bf16.mxu0 %v744
  %839 = vmatpush1.bf16.msra.mxu0 %v743
  %840 = vmatprep.subr.bf16.mxu0 %v748
  %841 = vmatpush1.bf16.msra.mxu0 %v747
  %842 = vmatprep.subr.bf16.mxu0 %v752
  %843 = vmatpush1.bf16.msra.mxu0 %v751
  %844 = vmatprep.subr.bf16.mxu0 %v756
  %845 = vmatpush1.bf16.msra.mxu0 %v755
  %846 = vmatprep.subr.bf16.mxu0 0
  %847 = vmatpush1.bf16.msra.mxu0 0
  %848 = vmatprep.subr.bf16.mxu0 0
  %849 = vmatpush1.bf16.msra.mxu0 0
  %850 = vmatprep.subr.bf16.mxu0 0
  %851 = vmatpush1.bf16.msra.mxu0 0
  %852 = vmatprep.subr.bf16.mxu0 0
  %853 = vmatpush1.bf16.msra.mxu0 0
  %854 = vmatprep.subr.bf16.mxu0 0
  %855 = vmatpush1.bf16.msra.mxu0 0
  %856 = vmatprep.subr.bf16.mxu0 0
  %857 = vmatpush1.bf16.msra.mxu0 0
  %858 = vmatprep.subr.bf16.mxu0 0
  %859 = vmatpush1.bf16.msra.mxu0 0
  %860 = vmatprep.subr.bf16.mxu0 0
  %861 = vmatpush1.bf16.msra.mxu0 0
  %862 = vmatprep.mubr.bf16.mxu0 0
  %863 = vmatmul.mubr.bf16.gmra.mrb[0].mxu0 0
  %v864 = vpop.f32.mrb[0].mxu0
  %v865 = vadd.f32 0.0, %v864
  %v866 = vpop.f32.mrb[0].mxu0
  %v867 = vadd.f32 0.0, %v866
  %v868 = vpop.f32.mrb[0].mxu0
  %v869 = vpop.f32.mrb[0].mxu0
  %870 = vdwg.mxu0
  %v871 = vadd.f32 %v593, %v824
  %v872 = vadd.f32 %v594, %v826
  %v873 = vadd.f32 %v595, %v865
  %v874 = vadd.f32 %v596, %v867
  %v875 = vxor.u32 %v871, 2147483648
  %v876 = vmul.f32 %v875, 1.442695
  %v877 = vpow.pop %v876
  %v878 = vadd.f32 %v877, 1.0
  %v879 = vrcp.pop %v878
  %v880 = vmul.f32 1.0, %v879
  %v881 = vxor.u32 %v872, 2147483648
  %v882 = vmul.f32 %v881, 1.442695
  %v883 = vpow.pop %v882
  %v884 = vadd.f32 %v883, 1.0
  %v885 = vrcp.pop %v884
  %v886 = vmul.f32 1.0, %v885
  %v887 = vtanh.pop %v873
  %v888 = vxor.u32 %v874, 2147483648
  %v889 = vmul.f32 %v888, 1.442695
  %v890 = vpow.pop %v889
  %v891 = vadd.f32 %v890, 1.0
  %v892 = vrcp.pop %v891
  %v893 = vmul.f32 1.0, %v892
  %v894 = vmul.f32 %v886, 0.0
  %v895 = vmul.f32 %v880, %v887
  %v896 = vadd.f32 %v894, %v895
  %v897 = vtanh.pop %v896
  %v898 = vmul.f32 %v893, %v897
  %v899 = vpack.c.bf16 %v898, %v898
  %v900 = vld [vmem:[%s3] sm:$0xff]
  %v901 = vld [vmem:[%s3 + $0x8] sm:$0xff]
  %v902 = vld [vmem:[%s3 + $0x10] sm:$0xff]
  %v903 = vld [vmem:[%s3 + $0x18] sm:$0xff]
  %v904 = vld [vmem:[%s3 + $0x20] sm:$0xff]
  %v905 = vld [vmem:[%s3 + $0x28] sm:$0xff]
  %v906 = vld [vmem:[%s3 + $0x30] sm:$0xff]
  %v907 = vld [vmem:[%s3 + $0x38] sm:$0xff]
  %v908 = vld [vmem:[%s3 + $0x40] sm:$0xff]
  %v909 = vld [vmem:[%s3 + $0x48] sm:$0xff]
  %v910 = vld [vmem:[%s3 + $0x50] sm:$0xff]
  %v911 = vld [vmem:[%s3 + $0x58] sm:$0xff]
  %v912 = vld [vmem:[%s3 + $0x60] sm:$0xff]
  %v913 = vld [vmem:[%s3 + $0x68] sm:$0xff]
  %v914 = vld [vmem:[%s3 + $0x70] sm:$0xff]
  %v915 = vld [vmem:[%s3 + $0x78] sm:$0xff]
  %v916 = vld [vmem:[%s3 + $0x80] sm:$0xff]
  %v917 = vld [vmem:[%s3 + $0x88] sm:$0xff]
  %v918 = vld [vmem:[%s3 + $0x90] sm:$0xff]
  %v919 = vld [vmem:[%s3 + $0x98] sm:$0xff]
  %v920 = vld [vmem:[%s3 + $0xa0] sm:$0xff]
  %v921 = vld [vmem:[%s3 + $0xa8] sm:$0xff]
  %v922 = vld [vmem:[%s3 + $0xb0] sm:$0xff]
  %v923 = vld [vmem:[%s3 + $0xb8] sm:$0xff]
  %v924 = vld [vmem:[%s3 + $0xc0] sm:$0xff]
  %v925 = vld [vmem:[%s3 + $0xc8] sm:$0xff]
  %v926 = vld [vmem:[%s3 + $0xd0] sm:$0xff]
  %v927 = vld [vmem:[%s3 + $0xd8] sm:$0xff]
  %v928 = vld [vmem:[%s3 + $0xe0] sm:$0xff]
  %v929 = vld [vmem:[%s3 + $0xe8] sm:$0xff]
  %v930 = vld [vmem:[%s3 + $0xf0] sm:$0xff]
  %v931 = vld [vmem:[%s3 + $0xf8] sm:$0xff]
  %s932 = scalar_lea.vmem %s4, 256
  %v933 = vld [vmem:[%s932] sm:$0xff]
  %v934 = vld [vmem:[%s932 + $0x8] sm:$0xff]
  %v935 = vld [vmem:[%s932 + $0x10] sm:$0xff]
  %v936 = vld [vmem:[%s932 + $0x18] sm:$0xff]
  %v937 = vld [vmem:[%s932 + $0x20] sm:$0xff]
  %v938 = vld [vmem:[%s932 + $0x28] sm:$0xff]
  %v939 = vld [vmem:[%s932 + $0x30] sm:$0xff]
  %v940 = vld [vmem:[%s932 + $0x38] sm:$0xff]
  %v941 = vld [vmem:[%s932 + $0x40] sm:$0xff]
  %v942 = vld [vmem:[%s932 + $0x48] sm:$0xff]
  %v943 = vld [vmem:[%s932 + $0x50] sm:$0xff]
  %v944 = vld [vmem:[%s932 + $0x58] sm:$0xff]
  %v945 = vld [vmem:[%s932 + $0x60] sm:$0xff]
  %v946 = vld [vmem:[%s932 + $0x68] sm:$0xff]
  %v947 = vld [vmem:[%s932 + $0x70] sm:$0xff]
  %v948 = vld [vmem:[%s932 + $0x78] sm:$0xff]
  %v949 = vld [vmem:[%s932 + $0x80] sm:$0xff]
  %v950 = vld [vmem:[%s932 + $0x88] sm:$0xff]
  %v951 = vld [vmem:[%s932 + $0x90] sm:$0xff]
  %v952 = vld [vmem:[%s932 + $0x98] sm:$0xff]
  %v953 = vld [vmem:[%s932 + $0xa0] sm:$0xff]
  %v954 = vld [vmem:[%s932 + $0xa8] sm:$0xff]
  %v955 = vld [vmem:[%s932 + $0xb0] sm:$0xff]
  %v956 = vld [vmem:[%s932 + $0xb8] sm:$0xff]
  %v957 = vld [vmem:[%s932 + $0xc0] sm:$0xff]
  %v958 = vld [vmem:[%s932 + $0xc8] sm:$0xff]
  %v959 = vld [vmem:[%s932 + $0xd0] sm:$0xff]
  %v960 = vld [vmem:[%s932 + $0xd8] sm:$0xff]
  %v961 = vld [vmem:[%s932 + $0xe0] sm:$0xff]
  %v962 = vld [vmem:[%s932 + $0xe8] sm:$0xff]
  %v963 = vld [vmem:[%s932 + $0xf0] sm:$0xff]
  %v964 = vld [vmem:[%s932 + $0xf8] sm:$0xff]
  %v997 = vunpack.c.l.b16 %v933
  %v998 = vunpack.c.h.b16 %v933
  %v999 = vunpack.c.l.b16 %v934
  %v1000 = vunpack.c.h.b16 %v934
  %v1001 = vunpack.c.l.b16 %v935
  %v1002 = vunpack.c.h.b16 %v935
  %v1003 = vunpack.c.l.b16 %v936
  %v1004 = vunpack.c.h.b16 %v936
  %v1005 = vunpack.c.l.b16 %v937
  %v1006 = vunpack.c.h.b16 %v937
  %v1007 = vunpack.c.l.b16 %v938
  %v1008 = vunpack.c.h.b16 %v938
  %v1009 = vunpack.c.l.b16 %v939
  %v1010 = vunpack.c.h.b16 %v939
  %v1011 = vunpack.c.l.b16 %v940
  %v1012 = vunpack.c.h.b16 %v940
  %v1013 = vunpack.c.l.b16 %v941
  %v1014 = vunpack.c.h.b16 %v941
  %v1015 = vunpack.c.l.b16 %v942
  %v1016 = vunpack.c.h.b16 %v942
  %v1017 = vunpack.c.l.b16 %v943
  %v1018 = vunpack.c.h.b16 %v943
  %v1019 = vunpack.c.l.b16 %v944
  %v1020 = vunpack.c.h.b16 %v944
  %v1021 = vunpack.c.l.b16 %v945
  %v1022 = vunpack.c.h.b16 %v945
  %v1023 = vunpack.c.l.b16 %v946
  %v1024 = vunpack.c.h.b16 %v946
  %v1025 = vunpack.c.l.b16 %v947
  %v1026 = vunpack.c.h.b16 %v947
  %v1027 = vunpack.c.l.b16 %v948
  %v1028 = vunpack.c.h.b16 %v948
  %v1029 = vunpack.c.l.b16 %v949
  %v1030 = vunpack.c.h.b16 %v949
  %v1031 = vunpack.c.l.b16 %v950
  %v1032 = vunpack.c.h.b16 %v950
  %v1033 = vunpack.c.l.b16 %v951
  %v1034 = vunpack.c.h.b16 %v951
  %v1035 = vunpack.c.l.b16 %v952
  %v1036 = vunpack.c.h.b16 %v952
  %v1037 = vunpack.c.l.b16 %v953
  %v1038 = vunpack.c.h.b16 %v953
  %v1039 = vunpack.c.l.b16 %v954
  %v1040 = vunpack.c.h.b16 %v954
  %v1041 = vunpack.c.l.b16 %v955
  %v1042 = vunpack.c.h.b16 %v955
  %v1043 = vunpack.c.l.b16 %v956
  %v1044 = vunpack.c.h.b16 %v956
  %v1045 = vunpack.c.l.b16 %v957
  %v1046 = vunpack.c.h.b16 %v957
  %v1047 = vunpack.c.l.b16 %v958
  %v1048 = vunpack.c.h.b16 %v958
  %v1049 = vunpack.c.l.b16 %v959
  %v1050 = vunpack.c.h.b16 %v959
  %v1051 = vunpack.c.l.b16 %v960
  %v1052 = vunpack.c.h.b16 %v960
  %v1053 = vunpack.c.l.b16 %v961
  %v1054 = vunpack.c.h.b16 %v961
  %v1055 = vunpack.c.l.b16 %v962
  %v1056 = vunpack.c.h.b16 %v962
  %v1057 = vunpack.c.l.b16 %v963
  %v1058 = vunpack.c.h.b16 %v963
  %v1059 = vunpack.c.l.b16 %v964
  %v1060 = vunpack.c.h.b16 %v964
  %v1061 = vpack.c.b16 %v1001, %v997
  %v1062 = vpack.c.b16 %v1002, %v998
  %v1063 = vpack.c.b16 %v1003, %v999
  %v1064 = vpack.c.b16 %v1004, %v1000
  %v1065 = vpack.c.b16 %v1009, %v1005
  %v1066 = vpack.c.b16 %v1010, %v1006
  %v1067 = vpack.c.b16 %v1011, %v1007
  %v1068 = vpack.c.b16 %v1012, %v1008
  %v1069 = vpack.c.b16 %v1017, %v1013
  %v1070 = vpack.c.b16 %v1018, %v1014
  %v1071 = vpack.c.b16 %v1019, %v1015
  %v1072 = vpack.c.b16 %v1020, %v1016
  %v1073 = vpack.c.b16 %v1025, %v1021
  %v1074 = vpack.c.b16 %v1026, %v1022
  %v1075 = vpack.c.b16 %v1027, %v1023
  %v1076 = vpack.c.b16 %v1028, %v1024
  %v1077 = vpack.c.b16 %v1033, %v1029
  %v1078 = vpack.c.b16 %v1034, %v1030
  %v1079 = vpack.c.b16 %v1035, %v1031
  %v1080 = vpack.c.b16 %v1036, %v1032
  %v1081 = vpack.c.b16 %v1041, %v1037
  %v1082 = vpack.c.b16 %v1042, %v1038
  %v1083 = vpack.c.b16 %v1043, %v1039
  %v1084 = vpack.c.b16 %v1044, %v1040
  %v1085 = vpack.c.b16 %v1049, %v1045
  %v1086 = vpack.c.b16 %v1050, %v1046
  %v1087 = vpack.c.b16 %v1051, %v1047
  %v1088 = vpack.c.b16 %v1052, %v1048
  %v1089 = vpack.c.b16 %v1057, %v1053
  %v1090 = vpack.c.b16 %v1058, %v1054
  %v1091 = vpack.c.b16 %v1059, %v1055
  %v1092 = vpack.c.b16 %v1060, %v1056
  %1125 = vmatprep.subr.bf16.mxu0 %v1062
  %1126 = vmatpush1.bf16.msra.mxu0 %v1061
  %1127 = vmatprep.subr.bf16.mxu0 %v1066
  %1128 = vmatpush1.bf16.msra.mxu0 %v1065
  %1129 = vmatprep.subr.bf16.mxu0 %v1070
  %1130 = vmatpush1.bf16.msra.mxu0 %v1069
  %1131 = vmatprep.subr.bf16.mxu0 %v1074
  %1132 = vmatpush1.bf16.msra.mxu0 %v1073
  %1133 = vmatprep.subr.bf16.mxu0 %v1078
  %1134 = vmatpush1.bf16.msra.mxu0 %v1077
  %1135 = vmatprep.subr.bf16.mxu0 %v1082
  %1136 = vmatpush1.bf16.msra.mxu0 %v1081
  %1137 = vmatprep.subr.bf16.mxu0 %v1086
  %1138 = vmatpush1.bf16.msra.mxu0 %v1085
  %1139 = vmatprep.subr.bf16.mxu0 %v1090
  %1140 = vmatpush1.bf16.msra.mxu0 %v1089
  %1141 = vmatprep.subr.bf16.mxu0 0
  %1142 = vmatpush1.bf16.msra.mxu0 0
  %1143 = vmatprep.subr.bf16.mxu0 0
  %1144 = vmatpush1.bf16.msra.mxu0 0
  %1145 = vmatprep.subr.bf16.mxu0 0
  %1146 = vmatpush1.bf16.msra.mxu0 0
  %1147 = vmatprep.subr.bf16.mxu0 0
  %1148 = vmatpush1.bf16.msra.mxu0 0
  %1149 = vmatprep.subr.bf16.mxu0 0
  %1150 = vmatpush1.bf16.msra.mxu0 0
  %1151 = vmatprep.subr.bf16.mxu0 0
  %1152 = vmatpush1.bf16.msra.mxu0 0
  %1153 = vmatprep.subr.bf16.mxu0 0
  %1154 = vmatpush1.bf16.msra.mxu0 0
  %1155 = vmatprep.subr.bf16.mxu0 0
  %1156 = vmatpush1.bf16.msra.mxu0 0
  %1157 = vmatprep.mubr.bf16.mxu0 0
  %1158 = vmatmul.mubr.bf16.gmra.mrb[0].mxu0 0
  %v1159 = vpop.f32.mrb[0].mxu0
  %v1160 = vadd.f32 0.0, %v1159
  %v1161 = vpop.f32.mrb[0].mxu0
  %v1162 = vadd.f32 0.0, %v1161
  %v1163 = vpop.f32.mrb[0].mxu0
  %v1164 = vpop.f32.mrb[0].mxu0
  %1165 = vdwg.mxu0
  %1166 = vmatprep.subr.bf16.mxu0 %v1064
  %1167 = vmatpush1.bf16.msra.mxu0 %v1063
  %1168 = vmatprep.subr.bf16.mxu0 %v1068
  %1169 = vmatpush1.bf16.msra.mxu0 %v1067
  %1170 = vmatprep.subr.bf16.mxu0 %v1072
  %1171 = vmatpush1.bf16.msra.mxu0 %v1071
  %1172 = vmatprep.subr.bf16.mxu0 %v1076
  %1173 = vmatpush1.bf16.msra.mxu0 %v1075
  %1174 = vmatprep.subr.bf16.mxu0 %v1080
  %1175 = vmatpush1.bf16.msra.mxu0 %v1079
  %1176 = vmatprep.subr.bf16.mxu0 %v1084
  %1177 = vmatpush1.bf16.msra.mxu0 %v1083
  %1178 = vmatprep.subr.bf16.mxu0 %v1088
  %1179 = vmatpush1.bf16.msra.mxu0 %v1087
  %1180 = vmatprep.subr.bf16.mxu0 %v1092
  %1181 = vmatpush1.bf16.msra.mxu0 %v1091
  %1182 = vmatprep.subr.bf16.mxu0 0
  %1183 = vmatpush1.bf16.msra.mxu0 0
  %1184 = vmatprep.subr.bf16.mxu0 0
  %1185 = vmatpush1.bf16.msra.mxu0 0
  %1186 = vmatprep.subr.bf16.mxu0 0
  %1187 = vmatpush1.bf16.msra.mxu0 0
  %1188 = vmatprep.subr.bf16.mxu0 0
  %1189 = vmatpush1.bf16.msra.mxu0 0
  %1190 = vmatprep.subr.bf16.mxu0 0
  %1191 = vmatpush1.bf16.msra.mxu0 0
  %1192 = vmatprep.subr.bf16.mxu0 0
  %1193 = vmatpush1.bf16.msra.mxu0 0
  %1194 = vmatprep.subr.bf16.mxu0 0
  %1195 = vmatpush1.bf16.msra.mxu0 0
  %1196 = vmatprep.subr.bf16.mxu0 0
  %1197 = vmatpush1.bf16.msra.mxu0 0
  %1198 = vmatprep.mubr.bf16.mxu0 0
  %1199 = vmatmul.mubr.bf16.gmra.mrb[0].mxu0 0
  %v1200 = vpop.f32.mrb[0].mxu0
  %v1201 = vadd.f32 0.0, %v1200
  %v1202 = vpop.f32.mrb[0].mxu0
  %v1203 = vadd.f32 0.0, %v1202
  %v1204 = vpop.f32.mrb[0].mxu0
  %v1205 = vpop.f32.mrb[0].mxu0
  %1206 = vdwg.mxu0
  %v1239 = vunpack.c.l.b16 %v900
  %v1240 = vunpack.c.h.b16 %v900
  %v1241 = vunpack.c.l.b16 %v901
  %v1242 = vunpack.c.h.b16 %v901
  %v1243 = vunpack.c.l.b16 %v902
  %v1244 = vunpack.c.h.b16 %v902
  %v1245 = vunpack.c.l.b16 %v903
  %v1246 = vunpack.c.h.b16 %v903
  %v1247 = vunpack.c.l.b16 %v904
  %v1248 = vunpack.c.h.b16 %v904
  %v1249 = vunpack.c.l.b16 %v905
  %v1250 = vunpack.c.h.b16 %v905
  %v1251 = vunpack.c.l.b16 %v906
  %v1252 = vunpack.c.h.b16 %v906
  %v1253 = vunpack.c.l.b16 %v907
  %v1254 = vunpack.c.h.b16 %v907
  %v1255 = vunpack.c.l.b16 %v908
  %v1256 = vunpack.c.h.b16 %v908
  %v1257 = vunpack.c.l.b16 %v909
  %v1258 = vunpack.c.h.b16 %v909
  %v1259 = vunpack.c.l.b16 %v910
  %v1260 = vunpack.c.h.b16 %v910
  %v1261 = vunpack.c.l.b16 %v911
  %v1262 = vunpack.c.h.b16 %v911
  %v1263 = vunpack.c.l.b16 %v912
  %v1264 = vunpack.c.h.b16 %v912
  %v1265 = vunpack.c.l.b16 %v913
  %v1266 = vunpack.c.h.b16 %v913
  %v1267 = vunpack.c.l.b16 %v914
  %v1268 = vunpack.c.h.b16 %v914
  %v1269 = vunpack.c.l.b16 %v915
  %v1270 = vunpack.c.h.b16 %v915
  %v1271 = vunpack.c.l.b16 %v916
  %v1272 = vunpack.c.h.b16 %v916
  %v1273 = vunpack.c.l.b16 %v917
  %v1274 = vunpack.c.h.b16 %v917
  %v1275 = vunpack.c.l.b16 %v918
  %v1276 = vunpack.c.h.b16 %v918
  %v1277 = vunpack.c.l.b16 %v919
  %v1278 = vunpack.c.h.b16 %v919
  %v1279 = vunpack.c.l.b16 %v920
  %v1280 = vunpack.c.h.b16 %v920
  %v1281 = vunpack.c.l.b16 %v921
  %v1282 = vunpack.c.h.b16 %v921
  %v1283 = vunpack.c.l.b16 %v922
  %v1284 = vunpack.c.h.b16 %v922
  %v1285 = vunpack.c.l.b16 %v923
  %v1286 = vunpack.c.h.b16 %v923
  %v1287 = vunpack.c.l.b16 %v924
  %v1288 = vunpack.c.h.b16 %v924
  %v1289 = vunpack.c.l.b16 %v925
  %v1290 = vunpack.c.h.b16 %v925
  %v1291 = vunpack.c.l.b16 %v926
  %v1292 = vunpack.c.h.b16 %v926
  %v1293 = vunpack.c.l.b16 %v927
  %v1294 = vunpack.c.h.b16 %v927
  %v1295 = vunpack.c.l.b16 %v928
  %v1296 = vunpack.c.h.b16 %v928
  %v1297 = vunpack.c.l.b16 %v929
  %v1298 = vunpack.c.h.b16 %v929
  %v1299 = vunpack.c.l.b16 %v930
  %v1300 = vunpack.c.h.b16 %v930
  %v1301 = vunpack.c.l.b16 %v931
  %v1302 = vunpack.c.h.b16 %v931
  %v1303 = vpack.c.b16 %v1243, %v1239
  %v1304 = vpack.c.b16 %v1244, %v1240
  %v1305 = vpack.c.b16 %v1245, %v1241
  %v1306 = vpack.c.b16 %v1246, %v1242
  %v1307 = vpack.c.b16 %v1251, %v1247
  %v1308 = vpack.c.b16 %v1252, %v1248
  %v1309 = vpack.c.b16 %v1253, %v1249
  %v1310 = vpack.c.b16 %v1254, %v1250
  %v1311 = vpack.c.b16 %v1259, %v1255
  %v1312 = vpack.c.b16 %v1260, %v1256
  %v1313 = vpack.c.b16 %v1261, %v1257
  %v1314 = vpack.c.b16 %v1262, %v1258
  %v1315 = vpack.c.b16 %v1267, %v1263
  %v1316 = vpack.c.b16 %v1268, %v1264
  %v1317 = vpack.c.b16 %v1269, %v1265
  %v1318 = vpack.c.b16 %v1270, %v1266
  %v1319 = vpack.c.b16 %v1275, %v1271
  %v1320 = vpack.c.b16 %v1276, %v1272
  %v1321 = vpack.c.b16 %v1277, %v1273
  %v1322 = vpack.c.b16 %v1278, %v1274
  %v1323 = vpack.c.b16 %v1283, %v1279
  %v1324 = vpack.c.b16 %v1284, %v1280
  %v1325 = vpack.c.b16 %v1285, %v1281
  %v1326 = vpack.c.b16 %v1286, %v1282
  %v1327 = vpack.c.b16 %v1291, %v1287
  %v1328 = vpack.c.b16 %v1292, %v1288
  %v1329 = vpack.c.b16 %v1293, %v1289
  %v1330 = vpack.c.b16 %v1294, %v1290
  %v1331 = vpack.c.b16 %v1299, %v1295
  %v1332 = vpack.c.b16 %v1300, %v1296
  %v1333 = vpack.c.b16 %v1301, %v1297
  %v1334 = vpack.c.b16 %v1302, %v1298
  %1367 = vmatprep.subr.bf16.mxu0 %v1304
  %1368 = vmatpush1.bf16.msra.mxu0 %v1303
  %1369 = vmatprep.subr.bf16.mxu0 %v1308
  %1370 = vmatpush1.bf16.msra.mxu0 %v1307
  %1371 = vmatprep.subr.bf16.mxu0 %v1312
  %1372 = vmatpush1.bf16.msra.mxu0 %v1311
  %1373 = vmatprep.subr.bf16.mxu0 %v1316
  %1374 = vmatpush1.bf16.msra.mxu0 %v1315
  %1375 = vmatprep.subr.bf16.mxu0 %v1320
  %1376 = vmatpush1.bf16.msra.mxu0 %v1319
  %1377 = vmatprep.subr.bf16.mxu0 %v1324
  %1378 = vmatpush1.bf16.msra.mxu0 %v1323
  %1379 = vmatprep.subr.bf16.mxu0 %v1328
  %1380 = vmatpush1.bf16.msra.mxu0 %v1327
  %1381 = vmatprep.subr.bf16.mxu0 %v1332
  %1382 = vmatpush1.bf16.msra.mxu0 %v1331
  %1383 = vmatprep.subr.bf16.mxu0 0
  %1384 = vmatpush1.bf16.msra.mxu0 0
  %1385 = vmatprep.subr.bf16.mxu0 0
  %1386 = vmatpush1.bf16.msra.mxu0 0
  %1387 = vmatprep.subr.bf16.mxu0 0
  %1388 = vmatpush1.bf16.msra.mxu0 0
  %1389 = vmatprep.subr.bf16.mxu0 0
  %1390 = vmatpush1.bf16.msra.mxu0 0
  %1391 = vmatprep.subr.bf16.mxu0 0
  %1392 = vmatpush1.bf16.msra.mxu0 0
  %1393 = vmatprep.subr.bf16.mxu0 0
  %1394 = vmatpush1.bf16.msra.mxu0 0
  %1395 = vmatprep.subr.bf16.mxu0 0
  %1396 = vmatpush1.bf16.msra.mxu0 0
  %1397 = vmatprep.subr.bf16.mxu0 0
  %1398 = vmatpush1.bf16.msra.mxu0 0
  %1399 = vmatprep.mubr.bf16.mxu0 0
  %1400 = vmatmul.mubr.bf16.gmra.mrb[0].mxu0 %v899
  %v1401 = vpop.f32.mrb[0].mxu0
  %v1402 = vadd.f32 %v1160, %v1401
  %v1403 = vpop.f32.mrb[0].mxu0
  %v1404 = vadd.f32 %v1162, %v1403
  %v1405 = vpop.f32.mrb[0].mxu0
  %v1406 = vpop.f32.mrb[0].mxu0
  %1407 = vdwg.mxu0
  %1408 = vmatprep.subr.bf16.mxu0 %v1306
  %1409 = vmatpush1.bf16.msra.mxu0 %v1305
  %1410 = vmatprep.subr.bf16.mxu0 %v1310
  %1411 = vmatpush1.bf16.msra.mxu0 %v1309
  %1412 = vmatprep.subr.bf16.mxu0 %v1314
  %1413 = vmatpush1.bf16.msra.mxu0 %v1313
  %1414 = vmatprep.subr.bf16.mxu0 %v1318
  %1415 = vmatpush1.bf16.msra.mxu0 %v1317
  %1416 = vmatprep.subr.bf16.mxu0 %v1322
  %1417 = vmatpush1.bf16.msra.mxu0 %v1321
  %1418 = vmatprep.subr.bf16.mxu0 %v1326
  %1419 = vmatpush1.bf16.msra.mxu0 %v1325
  %1420 = vmatprep.subr.bf16.mxu0 %v1330
  %1421 = vmatpush1.bf16.msra.mxu0 %v1329
  %1422 = vmatprep.subr.bf16.mxu0 %v1334
  %1423 = vmatpush1.bf16.msra.mxu0 %v1333
  %1424 = vmatprep.subr.bf16.mxu0 0
  %1425 = vmatpush1.bf16.msra.mxu0 0
  %1426 = vmatprep.subr.bf16.mxu0 0
  %1427 = vmatpush1.bf16.msra.mxu0 0
  %1428 = vmatprep.subr.bf16.mxu0 0
  %1429 = vmatpush1.bf16.msra.mxu0 0
  %1430 = vmatprep.subr.bf16.mxu0 0
  %1431 = vmatpush1.bf16.msra.mxu0 0
  %1432 = vmatprep.subr.bf16.mxu0 0
  %1433 = vmatpush1.bf16.msra.mxu0 0
  %1434 = vmatprep.subr.bf16.mxu0 0
  %1435 = vmatpush1.bf16.msra.mxu0 0
  %1436 = vmatprep.subr.bf16.mxu0 0
  %1437 = vmatpush1.bf16.msra.mxu0 0
  %1438 = vmatprep.subr.bf16.mxu0 0
  %1439 = vmatpush1.bf16.msra.mxu0 0
  %1440 = vmatprep.mubr.bf16.mxu0 0
  %1441 = vmatmul.mubr.bf16.gmra.mrb[0].mxu0 %v899
  %v1442 = vpop.f32.mrb[0].mxu0
  %v1443 = vadd.f32 %v1201, %v1442
  %v1444 = vpop.f32.mrb[0].mxu0
  %v1445 = vadd.f32 %v1203, %v1444
  %v1446 = vpop.f32.mrb[0].mxu0
  %v1447 = vpop.f32.mrb[0].mxu0
  %1448 = vdwg.mxu0
  %s1449 = scalar_lea.vmem %s5, 4
  %v1450 = vld [vmem:[%s1449] sm:$0xf]
  %v1452 = vlaneseq
  %v1453 = vshrl.u32 %v1452, 7
  %v1454 = vsub.s32 0, %v1453
  %v1455 = vrot.slane %v1450, %v1454
  %v1456 = vlaneseq
  %v1457 = vshrl.u32 %v1456, 7
  %v1458 = vsub.s32 1, %v1457
  %v1459 = vrot.slane %v1450, %v1458
  %v1460 = vlaneseq
  %v1461 = vshrl.u32 %v1460, 7
  %v1462 = vsub.s32 2, %v1461
  %v1463 = vrot.slane %v1450, %v1462
  %v1464 = vlaneseq
  %v1465 = vshrl.u32 %v1464, 7
  %v1466 = vsub.s32 3, %v1465
  %v1467 = vrot.slane %v1450, %v1466
  %v1472 = vadd.f32 %v1402, %v1455
  %v1473 = vadd.f32 %v1404, %v1459
  %v1474 = vadd.f32 %v1443, %v1463
  %v1475 = vadd.f32 %v1445, %v1467
  %v1476 = vxor.u32 %v1472, 2147483648
  %v1477 = vmul.f32 %v1476, 1.442695
  %v1478 = vpow.pop %v1477
  %v1479 = vadd.f32 %v1478, 1.0
  %v1480 = vrcp.pop %v1479
  %v1481 = vmul.f32 1.0, %v1480
  %v1482 = vxor.u32 %v1473, 2147483648
  %v1483 = vmul.f32 %v1482, 1.442695
  %v1484 = vpow.pop %v1483
  %v1485 = vadd.f32 %v1484, 1.0
  %v1486 = vrcp.pop %v1485
  %v1487 = vmul.f32 1.0, %v1486
  %v1488 = vtanh.pop %v1474
  %v1489 = vxor.u32 %v1475, 2147483648
  %v1490 = vmul.f32 %v1489, 1.442695
  %v1491 = vpow.pop %v1490
  %v1492 = vadd.f32 %v1491, 1.0
  %v1493 = vrcp.pop %v1492
  %v1494 = vmul.f32 1.0, %v1493
  %v1495 = vmul.f32 %v1487, 0.0
  %v1496 = vmul.f32 %v1481, %v1488
  %v1497 = vadd.f32 %v1495, %v1496
  %v1498 = vtanh.pop %v1497
  %v1499 = vmul.f32 %v1494, %v1498
  %v1500 = vld [vmem:[#allocation2 + $0x20] sm:$0xff]
  %v1501 = vld [vmem:[#allocation2 + $0x28] sm:$0xff]
  %v1502 = vld [vmem:[#allocation2 + $0x30] sm:$0xff]
  %v1503 = vld [vmem:[#allocation2 + $0x38] sm:$0xff]
  %1504 = vmatprep.subr.bf16.mxu0 %v726
  %1505 = vmatpush1.bf16.msra.mxu0 %v725
  %1506 = vmatprep.subr.bf16.mxu0 %v730
  %1507 = vmatpush1.bf16.msra.mxu0 %v729
  %1508 = vmatprep.subr.bf16.mxu0 %v734
  %1509 = vmatpush1.bf16.msra.mxu0 %v733
  %1510 = vmatprep.subr.bf16.mxu0 %v738
  %1511 = vmatpush1.bf16.msra.mxu0 %v737
  %1512 = vmatprep.subr.bf16.mxu0 %v742
  %1513 = vmatpush1.bf16.msra.mxu0 %v741
  %1514 = vmatprep.subr.bf16.mxu0 %v746
  %1515 = vmatpush1.bf16.msra.mxu0 %v745
  %1516 = vmatprep.subr.bf16.mxu0 %v750
  %1517 = vmatpush1.bf16.msra.mxu0 %v749
  %1518 = vmatprep.subr.bf16.mxu0 %v754
  %1519 = vmatpush1.bf16.msra.mxu0 %v753
  %1520 = vmatprep.subr.bf16.mxu0 0
  %1521 = vmatpush1.bf16.msra.mxu0 0
  %1522 = vmatprep.subr.bf16.mxu0 0
  %1523 = vmatpush1.bf16.msra.mxu0 0
  %1524 = vmatprep.subr.bf16.mxu0 0
  %1525 = vmatpush1.bf16.msra.mxu0 0
  %1526 = vmatprep.subr.bf16.mxu0 0
  %1527 = vmatpush1.bf16.msra.mxu0 0
  %1528 = vmatprep.subr.bf16.mxu0 0
  %1529 = vmatpush1.bf16.msra.mxu0 0
  %1530 = vmatprep.subr.bf16.mxu0 0
  %1531 = vmatpush1.bf16.msra.mxu0 0
  %1532 = vmatprep.subr.bf16.mxu0 0
  %1533 = vmatpush1.bf16.msra.mxu0 0
  %1534 = vmatprep.subr.bf16.mxu0 0
  %1535 = vmatpush1.bf16.msra.mxu0 0
  %1536 = vmatprep.mubr.bf16.mxu0 0
  %1537 = vmatmul.mubr.bf16.gmra.mrb[0].mxu0 %v899
  %v1538 = vpop.f32.mrb[0].mxu0
  %v1539 = vadd.f32 0.0, %v1538
  %v1540 = vpop.f32.mrb[0].mxu0
  %v1541 = vadd.f32 0.0, %v1540
  %v1542 = vpop.f32.mrb[0].mxu0
  %v1543 = vpop.f32.mrb[0].mxu0
  %1544 = vdwg.mxu0
  %1545 = vmatprep.subr.bf16.mxu0 %v728
  %1546 = vmatpush1.bf16.msra.mxu0 %v727
  %1547 = vmatprep.subr.bf16.mxu0 %v732
  %1548 = vmatpush1.bf16.msra.mxu0 %v731
  %1549 = vmatprep.subr.bf16.mxu0 %v736
  %1550 = vmatpush1.bf16.msra.mxu0 %v735
  %1551 = vmatprep.subr.bf16.mxu0 %v740
  %1552 = vmatpush1.bf16.msra.mxu0 %v739
  %1553 = vmatprep.subr.bf16.mxu0 %v744
  %1554 = vmatpush1.bf16.msra.mxu0 %v743
  %1555 = vmatprep.subr.bf16.mxu0 %v748
  %1556 = vmatpush1.bf16.msra.mxu0 %v747
  %1557 = vmatprep.subr.bf16.mxu0 %v752
  %1558 = vmatpush1.bf16.msra.mxu0 %v751
  %1559 = vmatprep.subr.bf16.mxu0 %v756
  %1560 = vmatpush1.bf16.msra.mxu0 %v755
  %1561 = vmatprep.subr.bf16.mxu0 0
  %1562 = vmatpush1.bf16.msra.mxu0 0
  %1563 = vmatprep.subr.bf16.mxu0 0
  %1564 = vmatpush1.bf16.msra.mxu0 0
  %1565 = vmatprep.subr.bf16.mxu0 0
  %1566 = vmatpush1.bf16.msra.mxu0 0
  %1567 = vmatprep.subr.bf16.mxu0 0
  %1568 = vmatpush1.bf16.msra.mxu0 0
  %1569 = vmatprep.subr.bf16.mxu0 0
  %1570 = vmatpush1.bf16.msra.mxu0 0
  %1571 = vmatprep.subr.bf16.mxu0 0
  %1572 = vmatpush1.bf16.msra.mxu0 0
  %1573 = vmatprep.subr.bf16.mxu0 0
  %1574 = vmatpush1.bf16.msra.mxu0 0
  %1575 = vmatprep.subr.bf16.mxu0 0
  %1576 = vmatpush1.bf16.msra.mxu0 0
  %1577 = vmatprep.mubr.bf16.mxu0 0
  %1578 = vmatmul.mubr.bf16.gmra.mrb[0].mxu0 %v899
  %v1579 = vpop.f32.mrb[0].mxu0
  %v1580 = vadd.f32 0.0, %v1579
  %v1581 = vpop.f32.mrb[0].mxu0
  %v1582 = vadd.f32 0.0, %v1581
  %v1583 = vpop.f32.mrb[0].mxu0
  %v1584 = vpop.f32.mrb[0].mxu0
  %1585 = vdwg.mxu0
  %v1586 = vadd.f32 %v1500, %v1539
  %v1587 = vadd.f32 %v1501, %v1541
  %v1588 = vadd.f32 %v1502, %v1580
  %v1589 = vadd.f32 %v1503, %v1582
  %v1590 = vxor.u32 %v1586, 2147483648
  %v1591 = vmul.f32 %v1590, 1.442695
  %v1592 = vpow.pop %v1591
  %v1593 = vadd.f32 %v1592, 1.0
  %v1594 = vrcp.pop %v1593
  %v1595 = vmul.f32 1.0, %v1594
  %v1596 = vxor.u32 %v1587, 2147483648
  %v1597 = vmul.f32 %v1596, 1.442695
  %v1598 = vpow.pop %v1597
  %v1599 = vadd.f32 %v1598, 1.0
  %v1600 = vrcp.pop %v1599
  %v1601 = vmul.f32 1.0, %v1600
  %v1602 = vtanh.pop %v1588
  %v1603 = vxor.u32 %v1589, 2147483648
  %v1604 = vmul.f32 %v1603, 1.442695
  %v1605 = vpow.pop %v1604
  %v1606 = vadd.f32 %v1605, 1.0
  %v1607 = vrcp.pop %v1606
  %v1608 = vmul.f32 1.0, %v1607
  %v1609 = vmul.f32 %v1601, %v896
  %v1610 = vmul.f32 %v1595, %v1602
  %v1611 = vadd.f32 %v1609, %v1610
  %v1612 = vtanh.pop %v1611
  %v1613 = vmul.f32 %v1608, %v1612
  %v1614 = vpack.c.bf16 %v1613, %v1613
  %v1615 = vpack.c.bf16 %v1499, %v1499
  %1616 = vmatprep.subr.bf16.mxu0 %v1062
  %1617 = vmatpush1.bf16.msra.mxu0 %v1061
  %1618 = vmatprep.subr.bf16.mxu0 %v1066
  %1619 = vmatpush1.bf16.msra.mxu0 %v1065
  %1620 = vmatprep.subr.bf16.mxu0 %v1070
  %1621 = vmatpush1.bf16.msra.mxu0 %v1069
  %1622 = vmatprep.subr.bf16.mxu0 %v1074
  %1623 = vmatpush1.bf16.msra.mxu0 %v1073
  %1624 = vmatprep.subr.bf16.mxu0 %v1078
  %1625 = vmatpush1.bf16.msra.mxu0 %v1077
  %1626 = vmatprep.subr.bf16.mxu0 %v1082
  %1627 = vmatpush1.bf16.msra.mxu0 %v1081
  %1628 = vmatprep.subr.bf16.mxu0 %v1086
  %1629 = vmatpush1.bf16.msra.mxu0 %v1085
  %1630 = vmatprep.subr.bf16.mxu0 %v1090
  %1631 = vmatpush1.bf16.msra.mxu0 %v1089
  %1632 = vmatprep.subr.bf16.mxu0 0
  %1633 = vmatpush1.bf16.msra.mxu0 0
  %1634 = vmatprep.subr.bf16.mxu0 0
  %1635 = vmatpush1.bf16.msra.mxu0 0
  %1636 = vmatprep.subr.bf16.mxu0 0
  %1637 = vmatpush1.bf16.msra.mxu0 0
  %1638 = vmatprep.subr.bf16.mxu0 0
  %1639 = vmatpush1.bf16.msra.mxu0 0
  %1640 = vmatprep.subr.bf16.mxu0 0
  %1641 = vmatpush1.bf16.msra.mxu0 0
  %1642 = vmatprep.subr.bf16.mxu0 0
  %1643 = vmatpush1.bf16.msra.mxu0 0
  %1644 = vmatprep.subr.bf16.mxu0 0
  %1645 = vmatpush1.bf16.msra.mxu0 0
  %1646 = vmatprep.subr.bf16.mxu0 0
  %1647 = vmatpush1.bf16.msra.mxu0 0
  %1648 = vmatprep.mubr.bf16.mxu0 0
  %1649 = vmatmul.mubr.bf16.gmra.mrb[0].mxu0 %v1615
  %v1650 = vpop.f32.mrb[0].mxu0
  %v1651 = vadd.f32 0.0, %v1650
  %v1652 = vpop.f32.mrb[0].mxu0
  %v1653 = vadd.f32 0.0, %v1652
  %v1654 = vpop.f32.mrb[0].mxu0
  %v1655 = vpop.f32.mrb[0].mxu0
  %1656 = vdwg.mxu0
  %1657 = vmatprep.subr.bf16.mxu0 %v1064
  %1658 = vmatpush1.bf16.msra.mxu0 %v1063
  %1659 = vmatprep.subr.bf16.mxu0 %v1068
  %1660 = vmatpush1.bf16.msra.mxu0 %v1067
  %1661 = vmatprep.subr.bf16.mxu0 %v1072
  %1662 = vmatpush1.bf16.msra.mxu0 %v1071
  %1663 = vmatprep.subr.bf16.mxu0 %v1076
  %1664 = vmatpush1.bf16.msra.mxu0 %v1075
  %1665 = vmatprep.subr.bf16.mxu0 %v1080
  %1666 = vmatpush1.bf16.msra.mxu0 %v1079
  %1667 = vmatprep.subr.bf16.mxu0 %v1084
  %1668 = vmatpush1.bf16.msra.mxu0 %v1083
  %1669 = vmatprep.subr.bf16.mxu0 %v1088
  %1670 = vmatpush1.bf16.msra.mxu0 %v1087
  %1671 = vmatprep.subr.bf16.mxu0 %v1092
  %1672 = vmatpush1.bf16.msra.mxu0 %v1091
  %1673 = vmatprep.subr.bf16.mxu0 0
  %1674 = vmatpush1.bf16.msra.mxu0 0
  %1675 = vmatprep.subr.bf16.mxu0 0
  %1676 = vmatpush1.bf16.msra.mxu0 0
  %1677 = vmatprep.subr.bf16.mxu0 0
  %1678 = vmatpush1.bf16.msra.mxu0 0
  %1679 = vmatprep.subr.bf16.mxu0 0
  %1680 = vmatpush1.bf16.msra.mxu0 0
  %1681 = vmatprep.subr.bf16.mxu0 0
  %1682 = vmatpush1.bf16.msra.mxu0 0
  %1683 = vmatprep.subr.bf16.mxu0 0
  %1684 = vmatpush1.bf16.msra.mxu0 0
  %1685 = vmatprep.subr.bf16.mxu0 0
  %1686 = vmatpush1.bf16.msra.mxu0 0
  %1687 = vmatprep.subr.bf16.mxu0 0
  %1688 = vmatpush1.bf16.msra.mxu0 0
  %1689 = vmatprep.mubr.bf16.mxu0 0
  %1690 = vmatmul.mubr.bf16.gmra.mrb[0].mxu0 %v1615
  %v1691 = vpop.f32.mrb[0].mxu0
  %v1692 = vadd.f32 0.0, %v1691
  %v1693 = vpop.f32.mrb[0].mxu0
  %v1694 = vadd.f32 0.0, %v1693
  %v1695 = vpop.f32.mrb[0].mxu0
  %v1696 = vpop.f32.mrb[0].mxu0
  %1697 = vdwg.mxu0
  %1698 = vmatprep.subr.bf16.mxu0 %v1304
  %1699 = vmatpush1.bf16.msra.mxu0 %v1303
  %1700 = vmatprep.subr.bf16.mxu0 %v1308
  %1701 = vmatpush1.bf16.msra.mxu0 %v1307
  %1702 = vmatprep.subr.bf16.mxu0 %v1312
  %1703 = vmatpush1.bf16.msra.mxu0 %v1311
  %1704 = vmatprep.subr.bf16.mxu0 %v1316
  %1705 = vmatpush1.bf16.msra.mxu0 %v1315
  %1706 = vmatprep.subr.bf16.mxu0 %v1320
  %1707 = vmatpush1.bf16.msra.mxu0 %v1319
  %1708 = vmatprep.subr.bf16.mxu0 %v1324
  %1709 = vmatpush1.bf16.msra.mxu0 %v1323
  %1710 = vmatprep.subr.bf16.mxu0 %v1328
  %1711 = vmatpush1.bf16.msra.mxu0 %v1327
  %1712 = vmatprep.subr.bf16.mxu0 %v1332
  %1713 = vmatpush1.bf16.msra.mxu0 %v1331
  %1714 = vmatprep.subr.bf16.mxu0 0
  %1715 = vmatpush1.bf16.msra.mxu0 0
  %1716 = vmatprep.subr.bf16.mxu0 0
  %1717 = vmatpush1.bf16.msra.mxu0 0
  %1718 = vmatprep.subr.bf16.mxu0 0
  %1719 = vmatpush1.bf16.msra.mxu0 0
  %1720 = vmatprep.subr.bf16.mxu0 0
  %1721 = vmatpush1.bf16.msra.mxu0 0
  %1722 = vmatprep.subr.bf16.mxu0 0
  %1723 = vmatpush1.bf16.msra.mxu0 0
  %1724 = vmatprep.subr.bf16.mxu0 0
  %1725 = vmatpush1.bf16.msra.mxu0 0
  %1726 = vmatprep.subr.bf16.mxu0 0
  %1727 = vmatpush1.bf16.msra.mxu0 0
  %1728 = vmatprep.subr.bf16.mxu0 0
  %1729 = vmatpush1.bf16.msra.mxu0 0
  %1730 = vmatprep.mubr.bf16.mxu0 0
  %1731 = vmatmul.mubr.bf16.gmra.mrb[0].mxu0 %v1614
  %v1732 = vpop.f32.mrb[0].mxu0
  %v1733 = vadd.f32 %v1651, %v1732
  %v1734 = vpop.f32.mrb[0].mxu0
  %v1735 = vadd.f32 %v1653, %v1734
  %v1736 = vpop.f32.mrb[0].mxu0
  %v1737 = vpop.f32.mrb[0].mxu0
  %1738 = vdwg.mxu0
  %1739 = vmatprep.subr.bf16.mxu0 %v1306
  %1740 = vmatpush1.bf16.msra.mxu0 %v1305
  %1741 = vmatprep.subr.bf16.mxu0 %v1310
  %1742 = vmatpush1.bf16.msra.mxu0 %v1309
  %1743 = vmatprep.subr.bf16.mxu0 %v1314
  %1744 = vmatpush1.bf16.msra.mxu0 %v1313
  %1745 = vmatprep.subr.bf16.mxu0 %v1318
  %1746 = vmatpush1.bf16.msra.mxu0 %v1317
  %1747 = vmatprep.subr.bf16.mxu0 %v1322
  %1748 = vmatpush1.bf16.msra.mxu0 %v1321
  %1749 = vmatprep.subr.bf16.mxu0 %v1326
  %1750 = vmatpush1.bf16.msra.mxu0 %v1325
  %1751 = vmatprep.subr.bf16.mxu0 %v1330
  %1752 = vmatpush1.bf16.msra.mxu0 %v1329
  %1753 = vmatprep.subr.bf16.mxu0 %v1334
  %1754 = vmatpush1.bf16.msra.mxu0 %v1333
  %1755 = vmatprep.subr.bf16.mxu0 0
  %1756 = vmatpush1.bf16.msra.mxu0 0
  %1757 = vmatprep.subr.bf16.mxu0 0
  %1758 = vmatpush1.bf16.msra.mxu0 0
  %1759 = vmatprep.subr.bf16.mxu0 0
  %1760 = vmatpush1.bf16.msra.mxu0 0
  %1761 = vmatprep.subr.bf16.mxu0 0
  %1762 = vmatpush1.bf16.msra.mxu0 0
  %1763 = vmatprep.subr.bf16.mxu0 0
  %1764 = vmatpush1.bf16.msra.mxu0 0
  %1765 = vmatprep.subr.bf16.mxu0 0
  %1766 = vmatpush1.bf16.msra.mxu0 0
  %1767 = vmatprep.subr.bf16.mxu0 0
  %1768 = vmatpush1.bf16.msra.mxu0 0
  %1769 = vmatprep.subr.bf16.mxu0 0
  %1770 = vmatpush1.bf16.msra.mxu0 0
  %1771 = vmatprep.mubr.bf16.mxu0 0
  %1772 = vmatmul.mubr.bf16.gmra.mrb[0].mxu0 %v1614
  %v1773 = vpop.f32.mrb[0].mxu0
  %v1774 = vadd.f32 %v1692, %v1773
  %v1775 = vpop.f32.mrb[0].mxu0
  %v1776 = vadd.f32 %v1694, %v1775
  %v1777 = vpop.f32.mrb[0].mxu0
  %v1778 = vpop.f32.mrb[0].mxu0
  %1779 = vdwg.mxu0
  %v1780 = vadd.f32 %v1733, %v1455
  %v1781 = vadd.f32 %v1735, %v1459
  %v1782 = vadd.f32 %v1774, %v1463
  %v1783 = vadd.f32 %v1776, %v1467
  %v1784 = vxor.u32 %v1780, 2147483648
  %v1785 = vmul.f32 %v1784, 1.442695
  %v1786 = vpow.pop %v1785
  %v1787 = vadd.f32 %v1786, 1.0
  %v1788 = vrcp.pop %v1787
  %v1789 = vmul.f32 1.0, %v1788
  %v1790 = vxor.u32 %v1781, 2147483648
  %v1791 = vmul.f32 %v1790, 1.442695
  %v1792 = vpow.pop %v1791
  %v1793 = vadd.f32 %v1792, 1.0
  %v1794 = vrcp.pop %v1793
  %v1795 = vmul.f32 1.0, %v1794
  %v1796 = vtanh.pop %v1782
  %v1797 = vxor.u32 %v1783, 2147483648
  %v1798 = vmul.f32 %v1797, 1.442695
  %v1799 = vpow.pop %v1798
  %v1800 = vadd.f32 %v1799, 1.0
  %v1801 = vrcp.pop %v1800
  %v1802 = vmul.f32 1.0, %v1801
  %v1803 = vmul.f32 %v1795, %v1497
  %v1804 = vmul.f32 %v1789, %v1796
  %v1805 = vadd.f32 %v1803, %v1804
  %v1806 = vtanh.pop %v1805
  %v1807 = vmul.f32 %v1802, %v1806
  %v1808 = vld [vmem:[#allocation2 + $0x40] sm:$0xff]
  %v1809 = vld [vmem:[#allocation2 + $0x48] sm:$0xff]
  %v1810 = vld [vmem:[#allocation2 + $0x50] sm:$0xff]
  %v1811 = vld [vmem:[#allocation2 + $0x58] sm:$0xff]
  %1812 = vmatprep.subr.bf16.mxu0 %v726
  %1813 = vmatpush1.bf16.msra.mxu0 %v725
  %1814 = vmatprep.subr.bf16.mxu0 %v730
  %1815 = vmatpush1.bf16.msra.mxu0 %v729
  %1816 = vmatprep.subr.bf16.mxu0 %v734
  %1817 = vmatpush1.bf16.msra.mxu0 %v733
  %1818 = vmatprep.subr.bf16.mxu0 %v738
  %1819 = vmatpush1.bf16.msra.mxu0 %v737
  %1820 = vmatprep.subr.bf16.mxu0 %v742
  %1821 = vmatpush1.bf16.msra.mxu0 %v741
  %1822 = vmatprep.subr.bf16.mxu0 %v746
  %1823 = vmatpush1.bf16.msra.mxu0 %v745
  %1824 = vmatprep.subr.bf16.mxu0 %v750
  %1825 = vmatpush1.bf16.msra.mxu0 %v749
  %1826 = vmatprep.subr.bf16.mxu0 %v754
  %1827 = vmatpush1.bf16.msra.mxu0 %v753
  %1828 = vmatprep.subr.bf16.mxu0 0
  %1829 = vmatpush1.bf16.msra.mxu0 0
  %1830 = vmatprep.subr.bf16.mxu0 0
  %1831 = vmatpush1.bf16.msra.mxu0 0
  %1832 = vmatprep.subr.bf16.mxu0 0
  %1833 = vmatpush1.bf16.msra.mxu0 0
  %1834 = vmatprep.subr.bf16.mxu0 0
  %1835 = vmatpush1.bf16.msra.mxu0 0
  %1836 = vmatprep.subr.bf16.mxu0 0
  %1837 = vmatpush1.bf16.msra.mxu0 0
  %1838 = vmatprep.subr.bf16.mxu0 0
  %1839 = vmatpush1.bf16.msra.mxu0 0
  %1840 = vmatprep.subr.bf16.mxu0 0
  %1841 = vmatpush1.bf16.msra.mxu0 0
  %1842 = vmatprep.subr.bf16.mxu0 0
  %1843 = vmatpush1.bf16.msra.mxu0 0
  %1844 = vmatprep.mubr.bf16.mxu0 0
  %1845 = vmatmul.mubr.bf16.gmra.mrb[0].mxu0 %v1614
  %v1846 = vpop.f32.mrb[0].mxu0
  %v1847 = vadd.f32 0.0, %v1846
  %v1848 = vpop.f32.mrb[0].mxu0
  %v1849 = vadd.f32 0.0, %v1848
  %v1850 = vpop.f32.mrb[0].mxu0
  %v1851 = vpop.f32.mrb[0].mxu0
  %1852 = vdwg.mxu0
  %1853 = vmatprep.subr.bf16.mxu0 %v728
  %1854 = vmatpush1.bf16.msra.mxu0 %v727
  %1855 = vmatprep.subr.bf16.mxu0 %v732
  %1856 = vmatpush1.bf16.msra.mxu0 %v731
  %1857 = vmatprep.subr.bf16.mxu0 %v736
  %1858 = vmatpush1.bf16.msra.mxu0 %v735
  %1859 = vmatprep.subr.bf16.mxu0 %v740
  %1860 = vmatpush1.bf16.msra.mxu0 %v739
  %1861 = vmatprep.subr.bf16.mxu0 %v744
  %1862 = vmatpush1.bf16.msra.mxu0 %v743
  %1863 = vmatprep.subr.bf16.mxu0 %v748
  %1864 = vmatpush1.bf16.msra.mxu0 %v747
  %1865 = vmatprep.subr.bf16.mxu0 %v752
  %1866 = vmatpush1.bf16.msra.mxu0 %v751
  %1867 = vmatprep.subr.bf16.mxu0 %v756
  %1868 = vmatpush1.bf16.msra.mxu0 %v755
  %1869 = vmatprep.subr.bf16.mxu0 0
  %1870 = vmatpush1.bf16.msra.mxu0 0
  %1871 = vmatprep.subr.bf16.mxu0 0
  %1872 = vmatpush1.bf16.msra.mxu0 0
  %1873 = vmatprep.subr.bf16.mxu0 0
  %1874 = vmatpush1.bf16.msra.mxu0 0
  %1875 = vmatprep.subr.bf16.mxu0 0
  %1876 = vmatpush1.bf16.msra.mxu0 0
  %1877 = vmatprep.subr.bf16.mxu0 0
  %1878 = vmatpush1.bf16.msra.mxu0 0
  %1879 = vmatprep.subr.bf16.mxu0 0
  %1880 = vmatpush1.bf16.msra.mxu0 0
  %1881 = vmatprep.subr.bf16.mxu0 0
  %1882 = vmatpush1.bf16.msra.mxu0 0
  %1883 = vmatprep.subr.bf16.mxu0 0
  %1884 = vmatpush1.bf16.msra.mxu0 0
  %1885 = vmatprep.mubr.bf16.mxu0 0
  %1886 = vmatmul.mubr.bf16.gmra.mrb[0].mxu0 %v1614
  %v1887 = vpop.f32.mrb[0].mxu0
  %v1888 = vadd.f32 0.0, %v1887
  %v1889 = vpop.f32.mrb[0].mxu0
  %v1890 = vadd.f32 0.0, %v1889
  %v1891 = vpop.f32.mrb[0].mxu0
  %v1892 = vpop.f32.mrb[0].mxu0
  %1893 = vdwg.mxu0
  %v1894 = vadd.f32 %v1808, %v1847
  %v1895 = vadd.f32 %v1809, %v1849
  %v1896 = vadd.f32 %v1810, %v1888
  %v1897 = vadd.f32 %v1811, %v1890
  %v1898 = vxor.u32 %v1894, 2147483648
  %v1899 = vmul.f32 %v1898, 1.442695
  %v1900 = vpow.pop %v1899
  %v1901 = vadd.f32 %v1900, 1.0
  %v1902 = vrcp.pop %v1901
  %v1903 = vmul.f32 1.0, %v1902
  %v1904 = vxor.u32 %v1895, 2147483648
  %v1905 = vmul.f32 %v1904, 1.442695
  %v1906 = vpow.pop %v1905
  %v1907 = vadd.f32 %v1906, 1.0
  %v1908 = vrcp.pop %v1907
  %v1909 = vmul.f32 1.0, %v1908
  %v1910 = vtanh.pop %v1896
  %v1911 = vxor.u32 %v1897, 2147483648
  %v1912 = vmul.f32 %v1911, 1.442695
  %v1913 = vpow.pop %v1912
  %v1914 = vadd.f32 %v1913, 1.0
  %v1915 = vrcp.pop %v1914
  %v1916 = vmul.f32 1.0, %v1915
  %v1917 = vmul.f32 %v1909, %v1611
  %v1918 = vmul.f32 %v1903, %v1910
  %v1919 = vadd.f32 %v1917, %v1918
  %v1920 = vtanh.pop %v1919
  %v1921 = vmul.f32 %v1916, %v1920
  %v1922 = vpack.c.bf16 %v1921, %v1921
  %v1923 = vpack.c.bf16 %v1807, %v1807
  %1924 = vmatprep.subr.bf16.mxu0 %v1062
  %1925 = vmatpush1.bf16.msra.mxu0 %v1061
  %1926 = vmatprep.subr.bf16.mxu0 %v1066
  %1927 = vmatpush1.bf16.msra.mxu0 %v1065
  %1928 = vmatprep.subr.bf16.mxu0 %v1070
  %1929 = vmatpush1.bf16.msra.mxu0 %v1069
  %1930 = vmatprep.subr.bf16.mxu0 %v1074
  %1931 = vmatpush1.bf16.msra.mxu0 %v1073
  %1932 = vmatprep.subr.bf16.mxu0 %v1078
  %1933 = vmatpush1.bf16.msra.mxu0 %v1077
  %1934 = vmatprep.subr.bf16.mxu0 %v1082
  %1935 = vmatpush1.bf16.msra.mxu0 %v1081
  %1936 = vmatprep.subr.bf16.mxu0 %v1086
  %1937 = vmatpush1.bf16.msra.mxu0 %v1085
  %1938 = vmatprep.subr.bf16.mxu0 %v1090
  %1939 = vmatpush1.bf16.msra.mxu0 %v1089
  %1940 = vmatprep.subr.bf16.mxu0 0
  %1941 = vmatpush1.bf16.msra.mxu0 0
  %1942 = vmatprep.subr.bf16.mxu0 0
  %1943 = vmatpush1.bf16.msra.mxu0 0
  %1944 = vmatprep.subr.bf16.mxu0 0
  %1945 = vmatpush1.bf16.msra.mxu0 0
  %1946 = vmatprep.subr.bf16.mxu0 0
  %1947 = vmatpush1.bf16.msra.mxu0 0
  %1948 = vmatprep.subr.bf16.mxu0 0
  %1949 = vmatpush1.bf16.msra.mxu0 0
  %1950 = vmatprep.subr.bf16.mxu0 0
  %1951 = vmatpush1.bf16.msra.mxu0 0
  %1952 = vmatprep.subr.bf16.mxu0 0
  %1953 = vmatpush1.bf16.msra.mxu0 0
  %1954 = vmatprep.subr.bf16.mxu0 0
  %1955 = vmatpush1.bf16.msra.mxu0 0
  %1956 = vmatprep.mubr.bf16.mxu0 0
  %1957 = vmatmul.mubr.bf16.gmra.mrb[0].mxu0 %v1923
  %v1958 = vpop.f32.mrb[0].mxu0
  %v1959 = vadd.f32 0.0, %v1958
  %v1960 = vpop.f32.mrb[0].mxu0
  %v1961 = vadd.f32 0.0, %v1960
  %v1962 = vpop.f32.mrb[0].mxu0
  %v1963 = vpop.f32.mrb[0].mxu0
  %1964 = vdwg.mxu0
  %1965 = vmatprep.subr.bf16.mxu0 %v1064
  %1966 = vmatpush1.bf16.msra.mxu0 %v1063
  %1967 = vmatprep.subr.bf16.mxu0 %v1068
  %1968 = vmatpush1.bf16.msra.mxu0 %v1067
  %1969 = vmatprep.subr.bf16.mxu0 %v1072
  %1970 = vmatpush1.bf16.msra.mxu0 %v1071
  %1971 = vmatprep.subr.bf16.mxu0 %v1076
  %1972 = vmatpush1.bf16.msra.mxu0 %v1075
  %1973 = vmatprep.subr.bf16.mxu0 %v1080
  %1974 = vmatpush1.bf16.msra.mxu0 %v1079
  %1975 = vmatprep.subr.bf16.mxu0 %v1084
  %1976 = vmatpush1.bf16.msra.mxu0 %v1083
  %1977 = vmatprep.subr.bf16.mxu0 %v1088
  %1978 = vmatpush1.bf16.msra.mxu0 %v1087
  %1979 = vmatprep.subr.bf16.mxu0 %v1092
  %1980 = vmatpush1.bf16.msra.mxu0 %v1091
  %1981 = vmatprep.subr.bf16.mxu0 0
  %1982 = vmatpush1.bf16.msra.mxu0 0
  %1983 = vmatprep.subr.bf16.mxu0 0
  %1984 = vmatpush1.bf16.msra.mxu0 0
  %1985 = vmatprep.subr.bf16.mxu0 0
  %1986 = vmatpush1.bf16.msra.mxu0 0
  %1987 = vmatprep.subr.bf16.mxu0 0
  %1988 = vmatpush1.bf16.msra.mxu0 0
  %1989 = vmatprep.subr.bf16.mxu0 0
  %1990 = vmatpush1.bf16.msra.mxu0 0
  %1991 = vmatprep.subr.bf16.mxu0 0
  %1992 = vmatpush1.bf16.msra.mxu0 0
  %1993 = vmatprep.subr.bf16.mxu0 0
  %1994 = vmatpush1.bf16.msra.mxu0 0
  %1995 = vmatprep.subr.bf16.mxu0 0
  %1996 = vmatpush1.bf16.msra.mxu0 0
  %1997 = vmatprep.mubr.bf16.mxu0 0
  %1998 = vmatmul.mubr.bf16.gmra.mrb[0].mxu0 %v1923
  %v1999 = vpop.f32.mrb[0].mxu0
  %v2000 = vadd.f32 0.0, %v1999
  %v2001 = vpop.f32.mrb[0].mxu0
  %v2002 = vadd.f32 0.0, %v2001
  %v2003 = vpop.f32.mrb[0].mxu0
  %v2004 = vpop.f32.mrb[0].mxu0
  %2005 = vdwg.mxu0
  %2006 = vmatprep.subr.bf16.mxu0 %v1304
  %2007 = vmatpush1.bf16.msra.mxu0 %v1303
  %2008 = vmatprep.subr.bf16.mxu0 %v1308
  %2009 = vmatpush1.bf16.msra.mxu0 %v1307
  %2010 = vmatprep.subr.bf16.mxu0 %v1312
  %2011 = vmatpush1.bf16.msra.mxu0 %v1311
  %2012 = vmatprep.subr.bf16.mxu0 %v1316
  %2013 = vmatpush1.bf16.msra.mxu0 %v1315
  %2014 = vmatprep.subr.bf16.mxu0 %v1320
  %2015 = vmatpush1.bf16.msra.mxu0 %v1319
  %2016 = vmatprep.subr.bf16.mxu0 %v1324
  %2017 = vmatpush1.bf16.msra.mxu0 %v1323
  %2018 = vmatprep.subr.bf16.mxu0 %v1328
  %2019 = vmatpush1.bf16.msra.mxu0 %v1327
  %2020 = vmatprep.subr.bf16.mxu0 %v1332
  %2021 = vmatpush1.bf16.msra.mxu0 %v1331
  %2022 = vmatprep.subr.bf16.mxu0 0
  %2023 = vmatpush1.bf16.msra.mxu0 0
  %2024 = vmatprep.subr.bf16.mxu0 0
  %2025 = vmatpush1.bf16.msra.mxu0 0
  %2026 = vmatprep.subr.bf16.mxu0 0
  %2027 = vmatpush1.bf16.msra.mxu0 0
  %2028 = vmatprep.subr.bf16.mxu0 0
  %2029 = vmatpush1.bf16.msra.mxu0 0
  %2030 = vmatprep.subr.bf16.mxu0 0
  %2031 = vmatpush1.bf16.msra.mxu0 0
  %2032 = vmatprep.subr.bf16.mxu0 0
  %2033 = vmatpush1.bf16.msra.mxu0 0
  %2034 = vmatprep.subr.bf16.mxu0 0
  %2035 = vmatpush1.bf16.msra.mxu0 0
  %2036 = vmatprep.subr.bf16.mxu0 0
  %2037 = vmatpush1.bf16.msra.mxu0 0
  %2038 = vmatprep.mubr.bf16.mxu0 0
  %2039 = vmatmul.mubr.bf16.gmra.mrb[0].mxu0 %v1922
  %v2040 = vpop.f32.mrb[0].mxu0
  %v2041 = vadd.f32 %v1959, %v2040
  %v2042 = vpop.f32.mrb[0].mxu0
  %v2043 = vadd.f32 %v1961, %v2042
  %v2044 = vpop.f32.mrb[0].mxu0
  %v2045 = vpop.f32.mrb[0].mxu0
  %2046 = vdwg.mxu0
  %2047 = vmatprep.subr.bf16.mxu0 %v1306
  %2048 = vmatpush1.bf16.msra.mxu0 %v1305
  %2049 = vmatprep.subr.bf16.mxu0 %v1310
  %2050 = vmatpush1.bf16.msra.mxu0 %v1309
  %2051 = vmatprep.subr.bf16.mxu0 %v1314
  %2052 = vmatpush1.bf16.msra.mxu0 %v1313
  %2053 = vmatprep.subr.bf16.mxu0 %v1318
  %2054 = vmatpush1.bf16.msra.mxu0 %v1317
  %2055 = vmatprep.subr.bf16.mxu0 %v1322
  %2056 = vmatpush1.bf16.msra.mxu0 %v1321
  %2057 = vmatprep.subr.bf16.mxu0 %v1326
  %2058 = vmatpush1.bf16.msra.mxu0 %v1325
  %2059 = vmatprep.subr.bf16.mxu0 %v1330
  %2060 = vmatpush1.bf16.msra.mxu0 %v1329
  %2061 = vmatprep.subr.bf16.mxu0 %v1334
  %2062 = vmatpush1.bf16.msra.mxu0 %v1333
  %2063 = vmatprep.subr.bf16.mxu0 0
  %2064 = vmatpush1.bf16.msra.mxu0 0
  %2065 = vmatprep.subr.bf16.mxu0 0
  %2066 = vmatpush1.bf16.msra.mxu0 0
  %2067 = vmatprep.subr.bf16.mxu0 0
  %2068 = vmatpush1.bf16.msra.mxu0 0
  %2069 = vmatprep.subr.bf16.mxu0 0
  %2070 = vmatpush1.bf16.msra.mxu0 0
  %2071 = vmatprep.subr.bf16.mxu0 0
  %2072 = vmatpush1.bf16.msra.mxu0 0
  %2073 = vmatprep.subr.bf16.mxu0 0
  %2074 = vmatpush1.bf16.msra.mxu0 0
  %2075 = vmatprep.subr.bf16.mxu0 0
  %2076 = vmatpush1.bf16.msra.mxu0 0
  %2077 = vmatprep.subr.bf16.mxu0 0
  %2078 = vmatpush1.bf16.msra.mxu0 0
  %2079 = vmatprep.mubr.bf16.mxu0 0
  %2080 = vmatmul.mubr.bf16.gmra.mrb[0].mxu0 %v1922
  %v2081 = vpop.f32.mrb[0].mxu0
  %v2082 = vadd.f32 %v2000, %v2081
  %v2083 = vpop.f32.mrb[0].mxu0
  %v2084 = vadd.f32 %v2002, %v2083
  %v2085 = vpop.f32.mrb[0].mxu0
  %v2086 = vpop.f32.mrb[0].mxu0
  %2087 = vdwg.mxu0
  %v2088 = vadd.f32 %v2041, %v1455
  %v2089 = vadd.f32 %v2043, %v1459
  %v2090 = vadd.f32 %v2082, %v1463
  %v2091 = vadd.f32 %v2084, %v1467
  %v2092 = vxor.u32 %v2088, 2147483648
  %v2093 = vmul.f32 %v2092, 1.442695
  %v2094 = vpow.pop %v2093
  %v2095 = vadd.f32 %v2094, 1.0
  %v2096 = vrcp.pop %v2095
  %v2097 = vmul.f32 1.0, %v2096
  %v2098 = vxor.u32 %v2089, 2147483648
  %v2099 = vmul.f32 %v2098, 1.442695
  %v2100 = vpow.pop %v2099
  %v2101 = vadd.f32 %v2100, 1.0
  %v2102 = vrcp.pop %v2101
  %v2103 = vmul.f32 1.0, %v2102
  %v2104 = vtanh.pop %v2090
  %v2105 = vxor.u32 %v2091, 2147483648
  %v2106 = vmul.f32 %v2105, 1.442695
  %v2107 = vpow.pop %v2106
  %v2108 = vadd.f32 %v2107, 1.0
  %v2109 = vrcp.pop %v2108
  %v2110 = vmul.f32 1.0, %v2109
  %v2111 = vmul.f32 %v2103, %v1805
  %v2112 = vmul.f32 %v2097, %v2104
  %v2113 = vadd.f32 %v2111, %v2112
  %v2114 = vtanh.pop %v2113
  %v2115 = vmul.f32 %v2110, %v2114
  %v2116 = vld [vmem:[#allocation2 + $0x60] sm:$0xff]
  %v2117 = vld [vmem:[#allocation2 + $0x68] sm:$0xff]
  %v2118 = vld [vmem:[#allocation2 + $0x70] sm:$0xff]
  %v2119 = vld [vmem:[#allocation2 + $0x78] sm:$0xff]
  %2120 = vmatprep.subr.bf16.mxu0 %v726
  %2121 = vmatpush1.bf16.msra.mxu0 %v725
  %2122 = vmatprep.subr.bf16.mxu0 %v730
  %2123 = vmatpush1.bf16.msra.mxu0 %v729
  %2124 = vmatprep.subr.bf16.mxu0 %v734
  %2125 = vmatpush1.bf16.msra.mxu0 %v733
  %2126 = vmatprep.subr.bf16.mxu0 %v738
  %2127 = vmatpush1.bf16.msra.mxu0 %v737
  %2128 = vmatprep.subr.bf16.mxu0 %v742
  %2129 = vmatpush1.bf16.msra.mxu0 %v741
  %2130 = vmatprep.subr.bf16.mxu0 %v746
  %2131 = vmatpush1.bf16.msra.mxu0 %v745
  %2132 = vmatprep.subr.bf16.mxu0 %v750
  %2133 = vmatpush1.bf16.msra.mxu0 %v749
  %2134 = vmatprep.subr.bf16.mxu0 %v754
  %2135 = vmatpush1.bf16.msra.mxu0 %v753
  %2136 = vmatprep.subr.bf16.mxu0 0
  %2137 = vmatpush1.bf16.msra.mxu0 0
  %2138 = vmatprep.subr.bf16.mxu0 0
  %2139 = vmatpush1.bf16.msra.mxu0 0
  %2140 = vmatprep.subr.bf16.mxu0 0
  %2141 = vmatpush1.bf16.msra.mxu0 0
  %2142 = vmatprep.subr.bf16.mxu0 0
  %2143 = vmatpush1.bf16.msra.mxu0 0
  %2144 = vmatprep.subr.bf16.mxu0 0
  %2145 = vmatpush1.bf16.msra.mxu0 0
  %2146 = vmatprep.subr.bf16.mxu0 0
  %2147 = vmatpush1.bf16.msra.mxu0 0
  %2148 = vmatprep.subr.bf16.mxu0 0
  %2149 = vmatpush1.bf16.msra.mxu0 0
  %2150 = vmatprep.subr.bf16.mxu0 0
  %2151 = vmatpush1.bf16.msra.mxu0 0
  %2152 = vmatprep.mubr.bf16.mxu0 0
  %2153 = vmatmul.mubr.bf16.gmra.mrb[0].mxu0 %v1922
  %v2154 = vpop.f32.mrb[0].mxu0
  %v2155 = vadd.f32 0.0, %v2154
  %v2156 = vpop.f32.mrb[0].mxu0
  %v2157 = vadd.f32 0.0, %v2156
  %v2158 = vpop.f32.mrb[0].mxu0
  %v2159 = vpop.f32.mrb[0].mxu0
  %2160 = vdwg.mxu0
  %2161 = vmatprep.subr.bf16.mxu0 %v728
  %2162 = vmatpush1.bf16.msra.mxu0 %v727
  %2163 = vmatprep.subr.bf16.mxu0 %v732
  %2164 = vmatpush1.bf16.msra.mxu0 %v731
  %2165 = vmatprep.subr.bf16.mxu0 %v736
  %2166 = vmatpush1.bf16.msra.mxu0 %v735
  %2167 = vmatprep.subr.bf16.mxu0 %v740
  %2168 = vmatpush1.bf16.msra.mxu0 %v739
  %2169 = vmatprep.subr.bf16.mxu0 %v744
  %2170 = vmatpush1.bf16.msra.mxu0 %v743
  %2171 = vmatprep.subr.bf16.mxu0 %v748
  %2172 = vmatpush1.bf16.msra.mxu0 %v747
  %2173 = vmatprep.subr.bf16.mxu0 %v752
  %2174 = vmatpush1.bf16.msra.mxu0 %v751
  %2175 = vmatprep.subr.bf16.mxu0 %v756
  %2176 = vmatpush1.bf16.msra.mxu0 %v755
  %2177 = vmatprep.subr.bf16.mxu0 0
  %2178 = vmatpush1.bf16.msra.mxu0 0
  %2179 = vmatprep.subr.bf16.mxu0 0
  %2180 = vmatpush1.bf16.msra.mxu0 0
  %2181 = vmatprep.subr.bf16.mxu0 0
  %2182 = vmatpush1.bf16.msra.mxu0 0
  %2183 = vmatprep.subr.bf16.mxu0 0
  %2184 = vmatpush1.bf16.msra.mxu0 0
  %2185 = vmatprep.subr.bf16.mxu0 0
  %2186 = vmatpush1.bf16.msra.mxu0 0
  %2187 = vmatprep.subr.bf16.mxu0 0
  %2188 = vmatpush1.bf16.msra.mxu0 0
  %2189 = vmatprep.subr.bf16.mxu0 0
  %2190 = vmatpush1.bf16.msra.mxu0 0
  %2191 = vmatprep.subr.bf16.mxu0 0
  %2192 = vmatpush1.bf16.msra.mxu0 0
  %2193 = vmatprep.mubr.bf16.mxu0 0
  %2194 = vmatmul.mubr.bf16.gmra.mrb[0].mxu0 %v1922
  %v2195 = vpop.f32.mrb[0].mxu0
  %v2196 = vadd.f32 0.0, %v2195
  %v2197 = vpop.f32.mrb[0].mxu0
  %v2198 = vadd.f32 0.0, %v2197
  %v2199 = vpop.f32.mrb[0].mxu0
  %v2200 = vpop.f32.mrb[0].mxu0
  %2201 = vdwg.mxu0
  %v2202 = vadd.f32 %v2116, %v2155
  %v2203 = vadd.f32 %v2117, %v2157
  %v2204 = vadd.f32 %v2118, %v2196
  %v2205 = vadd.f32 %v2119, %v2198
  %v2206 = vxor.u32 %v2202, 2147483648
  %v2207 = vmul.f32 %v2206, 1.442695
  %v2208 = vpow.pop %v2207
  %v2209 = vadd.f32 %v2208, 1.0
  %v2210 = vrcp.pop %v2209
  %v2211 = vmul.f32 1.0, %v2210
  %v2212 = vxor.u32 %v2203, 2147483648
  %v2213 = vmul.f32 %v2212, 1.442695
  %v2214 = vpow.pop %v2213
  %v2215 = vadd.f32 %v2214, 1.0
  %v2216 = vrcp.pop %v2215
  %v2217 = vmul.f32 1.0, %v2216
  %v2218 = vtanh.pop %v2204
  %v2219 = vxor.u32 %v2205, 2147483648
  %v2220 = vmul.f32 %v2219, 1.442695
  %v2221 = vpow.pop %v2220
  %v2222 = vadd.f32 %v2221, 1.0
  %v2223 = vrcp.pop %v2222
  %v2224 = vmul.f32 1.0, %v2223
  %v2225 = vmul.f32 %v2217, %v1919
  %v2226 = vmul.f32 %v2211, %v2218
  %v2227 = vadd.f32 %v2225, %v2226
  %v2228 = vtanh.pop %v2227
  %v2229 = vmul.f32 %v2224, %v2228
  %v2230 = vpack.c.bf16 %v2229, %v2229
  %v2231 = vpack.c.bf16 %v2115, %v2115
  %2232 = vmatprep.subr.bf16.mxu0 %v1062
  %2233 = vmatpush1.bf16.msra.mxu0 %v1061
  %2234 = vmatprep.subr.bf16.mxu0 %v1066
  %2235 = vmatpush1.bf16.msra.mxu0 %v1065
  %2236 = vmatprep.subr.bf16.mxu0 %v1070
  %2237 = vmatpush1.bf16.msra.mxu0 %v1069
  %2238 = vmatprep.subr.bf16.mxu0 %v1074
  %2239 = vmatpush1.bf16.msra.mxu0 %v1073
  %2240 = vmatprep.subr.bf16.mxu0 %v1078
  %2241 = vmatpush1.bf16.msra.mxu0 %v1077
  %2242 = vmatprep.subr.bf16.mxu0 %v1082
  %2243 = vmatpush1.bf16.msra.mxu0 %v1081
  %2244 = vmatprep.subr.bf16.mxu0 %v1086
  %2245 = vmatpush1.bf16.msra.mxu0 %v1085
  %2246 = vmatprep.subr.bf16.mxu0 %v1090
  %2247 = vmatpush1.bf16.msra.mxu0 %v1089
  %2248 = vmatprep.subr.bf16.mxu0 0
  %2249 = vmatpush1.bf16.msra.mxu0 0
  %2250 = vmatprep.subr.bf16.mxu0 0
  %2251 = vmatpush1.bf16.msra.mxu0 0
  %2252 = vmatprep.subr.bf16.mxu0 0
  %2253 = vmatpush1.bf16.msra.mxu0 0
  %2254 = vmatprep.subr.bf16.mxu0 0
  %2255 = vmatpush1.bf16.msra.mxu0 0
  %2256 = vmatprep.subr.bf16.mxu0 0
  %2257 = vmatpush1.bf16.msra.mxu0 0
  %2258 = vmatprep.subr.bf16.mxu0 0
  %2259 = vmatpush1.bf16.msra.mxu0 0
  %2260 = vmatprep.subr.bf16.mxu0 0
  %2261 = vmatpush1.bf16.msra.mxu0 0
  %2262 = vmatprep.subr.bf16.mxu0 0
  %2263 = vmatpush1.bf16.msra.mxu0 0
  %2264 = vmatprep.mubr.bf16.mxu0 0
  %2265 = vmatmul.mubr.bf16.gmra.mrb[0].mxu0 %v2231
  %v2266 = vpop.f32.mrb[0].mxu0
  %v2267 = vadd.f32 0.0, %v2266
  %v2268 = vpop.f32.mrb[0].mxu0
  %v2269 = vadd.f32 0.0, %v2268
  %v2270 = vpop.f32.mrb[0].mxu0
  %v2271 = vpop.f32.mrb[0].mxu0
  %2272 = vdwg.mxu0
  %2273 = vmatprep.subr.bf16.mxu0 %v1064
  %2274 = vmatpush1.bf16.msra.mxu0 %v1063
  %2275 = vmatprep.subr.bf16.mxu0 %v1068
  %2276 = vmatpush1.bf16.msra.mxu0 %v1067
  %2277 = vmatprep.subr.bf16.mxu0 %v1072
  %2278 = vmatpush1.bf16.msra.mxu0 %v1071
  %2279 = vmatprep.subr.bf16.mxu0 %v1076
  %2280 = vmatpush1.bf16.msra.mxu0 %v1075
  %2281 = vmatprep.subr.bf16.mxu0 %v1080
  %2282 = vmatpush1.bf16.msra.mxu0 %v1079
  %2283 = vmatprep.subr.bf16.mxu0 %v1084
  %2284 = vmatpush1.bf16.msra.mxu0 %v1083
  %2285 = vmatprep.subr.bf16.mxu0 %v1088
  %2286 = vmatpush1.bf16.msra.mxu0 %v1087
  %2287 = vmatprep.subr.bf16.mxu0 %v1092
  %2288 = vmatpush1.bf16.msra.mxu0 %v1091
  %2289 = vmatprep.subr.bf16.mxu0 0
  %2290 = vmatpush1.bf16.msra.mxu0 0
  %2291 = vmatprep.subr.bf16.mxu0 0
  %2292 = vmatpush1.bf16.msra.mxu0 0
  %2293 = vmatprep.subr.bf16.mxu0 0
  %2294 = vmatpush1.bf16.msra.mxu0 0
  %2295 = vmatprep.subr.bf16.mxu0 0
  %2296 = vmatpush1.bf16.msra.mxu0 0
  %2297 = vmatprep.subr.bf16.mxu0 0
  %2298 = vmatpush1.bf16.msra.mxu0 0
  %2299 = vmatprep.subr.bf16.mxu0 0
  %2300 = vmatpush1.bf16.msra.mxu0 0
  %2301 = vmatprep.subr.bf16.mxu0 0
  %2302 = vmatpush1.bf16.msra.mxu0 0
  %2303 = vmatprep.subr.bf16.mxu0 0
  %2304 = vmatpush1.bf16.msra.mxu0 0
  %2305 = vmatprep.mubr.bf16.mxu0 0
  %2306 = vmatmul.mubr.bf16.gmra.mrb[0].mxu0 %v2231
  %v2307 = vpop.f32.mrb[0].mxu0
  %v2308 = vadd.f32 0.0, %v2307
  %v2309 = vpop.f32.mrb[0].mxu0
  %v2310 = vadd.f32 0.0, %v2309
  %v2311 = vpop.f32.mrb[0].mxu0
  %v2312 = vpop.f32.mrb[0].mxu0
  %2313 = vdwg.mxu0
  %2314 = vmatprep.subr.bf16.mxu0 %v1304
  %2315 = vmatpush1.bf16.msra.mxu0 %v1303
  %2316 = vmatprep.subr.bf16.mxu0 %v1308
  %2317 = vmatpush1.bf16.msra.mxu0 %v1307
  %2318 = vmatprep.subr.bf16.mxu0 %v1312
  %2319 = vmatpush1.bf16.msra.mxu0 %v1311
  %2320 = vmatprep.subr.bf16.mxu0 %v1316
  %2321 = vmatpush1.bf16.msra.mxu0 %v1315
  %2322 = vmatprep.subr.bf16.mxu0 %v1320
  %2323 = vmatpush1.bf16.msra.mxu0 %v1319
  %2324 = vmatprep.subr.bf16.mxu0 %v1324
  %2325 = vmatpush1.bf16.msra.mxu0 %v1323
  %2326 = vmatprep.subr.bf16.mxu0 %v1328
  %2327 = vmatpush1.bf16.msra.mxu0 %v1327
  %2328 = vmatprep.subr.bf16.mxu0 %v1332
  %2329 = vmatpush1.bf16.msra.mxu0 %v1331
  %2330 = vmatprep.subr.bf16.mxu0 0
  %2331 = vmatpush1.bf16.msra.mxu0 0
  %2332 = vmatprep.subr.bf16.mxu0 0
  %2333 = vmatpush1.bf16.msra.mxu0 0
  %2334 = vmatprep.subr.bf16.mxu0 0
  %2335 = vmatpush1.bf16.msra.mxu0 0
  %2336 = vmatprep.subr.bf16.mxu0 0
  %2337 = vmatpush1.bf16.msra.mxu0 0
  %2338 = vmatprep.subr.bf16.mxu0 0
  %2339 = vmatpush1.bf16.msra.mxu0 0
  %2340 = vmatprep.subr.bf16.mxu0 0
  %2341 = vmatpush1.bf16.msra.mxu0 0
  %2342 = vmatprep.subr.bf16.mxu0 0
  %2343 = vmatpush1.bf16.msra.mxu0 0
  %2344 = vmatprep.subr.bf16.mxu0 0
  %2345 = vmatpush1.bf16.msra.mxu0 0
  %2346 = vmatprep.mubr.bf16.mxu0 0
  %2347 = vmatmul.mubr.bf16.gmra.mrb[0].mxu0 %v2230
  %v2348 = vpop.f32.mrb[0].mxu0
  %v2349 = vadd.f32 %v2267, %v2348
  %v2350 = vpop.f32.mrb[0].mxu0
  %v2351 = vadd.f32 %v2269, %v2350
  %v2352 = vpop.f32.mrb[0].mxu0
  %v2353 = vpop.f32.mrb[0].mxu0
  %2354 = vdwg.mxu0
  %2355 = vmatprep.subr.bf16.mxu0 %v1306
  %2356 = vmatpush1.bf16.msra.mxu0 %v1305
  %2357 = vmatprep.subr.bf16.mxu0 %v1310
  %2358 = vmatpush1.bf16.msra.mxu0 %v1309
  %2359 = vmatprep.subr.bf16.mxu0 %v1314
  %2360 = vmatpush1.bf16.msra.mxu0 %v1313
  %2361 = vmatprep.subr.bf16.mxu0 %v1318
  %2362 = vmatpush1.bf16.msra.mxu0 %v1317
  %2363 = vmatprep.subr.bf16.mxu0 %v1322
  %2364 = vmatpush1.bf16.msra.mxu0 %v1321
  %2365 = vmatprep.subr.bf16.mxu0 %v1326
  %2366 = vmatpush1.bf16.msra.mxu0 %v1325
  %2367 = vmatprep.subr.bf16.mxu0 %v1330
  %2368 = vmatpush1.bf16.msra.mxu0 %v1329
  %2369 = vmatprep.subr.bf16.mxu0 %v1334
  %2370 = vmatpush1.bf16.msra.mxu0 %v1333
  %2371 = vmatprep.subr.bf16.mxu0 0
  %2372 = vmatpush1.bf16.msra.mxu0 0
  %2373 = vmatprep.subr.bf16.mxu0 0
  %2374 = vmatpush1.bf16.msra.mxu0 0
  %2375 = vmatprep.subr.bf16.mxu0 0
  %2376 = vmatpush1.bf16.msra.mxu0 0
  %2377 = vmatprep.subr.bf16.mxu0 0
  %2378 = vmatpush1.bf16.msra.mxu0 0
  %2379 = vmatprep.subr.bf16.mxu0 0
  %2380 = vmatpush1.bf16.msra.mxu0 0
  %2381 = vmatprep.subr.bf16.mxu0 0
  %2382 = vmatpush1.bf16.msra.mxu0 0
  %2383 = vmatprep.subr.bf16.mxu0 0
  %2384 = vmatpush1.bf16.msra.mxu0 0
  %2385 = vmatprep.subr.bf16.mxu0 0
  %2386 = vmatpush1.bf16.msra.mxu0 0
  %2387 = vmatprep.mubr.bf16.mxu0 0
  %2388 = vmatmul.mubr.bf16.gmra.mrb[0].mxu0 %v2230
  %v2389 = vpop.f32.mrb[0].mxu0
  %v2390 = vadd.f32 %v2308, %v2389
  %v2391 = vpop.f32.mrb[0].mxu0
  %v2392 = vadd.f32 %v2310, %v2391
  %v2393 = vpop.f32.mrb[0].mxu0
  %v2394 = vpop.f32.mrb[0].mxu0
  %2395 = vdwg.mxu0
  %v2396 = vadd.f32 %v2349, %v1455
  %v2397 = vadd.f32 %v2351, %v1459
  %v2398 = vadd.f32 %v2390, %v1463
  %v2399 = vadd.f32 %v2392, %v1467
  %v2400 = vxor.u32 %v2396, 2147483648
  %v2401 = vmul.f32 %v2400, 1.442695
  %v2402 = vpow.pop %v2401
  %v2403 = vadd.f32 %v2402, 1.0
  %v2404 = vrcp.pop %v2403
  %v2405 = vmul.f32 1.0, %v2404
  %v2406 = vxor.u32 %v2397, 2147483648
  %v2407 = vmul.f32 %v2406, 1.442695
  %v2408 = vpow.pop %v2407
  %v2409 = vadd.f32 %v2408, 1.0
  %v2410 = vrcp.pop %v2409
  %v2411 = vmul.f32 1.0, %v2410
  %v2412 = vtanh.pop %v2398
  %v2413 = vxor.u32 %v2399, 2147483648
  %v2414 = vmul.f32 %v2413, 1.442695
  %v2415 = vpow.pop %v2414
  %v2416 = vadd.f32 %v2415, 1.0
  %v2417 = vrcp.pop %v2416
  %v2418 = vmul.f32 1.0, %v2417
  %v2419 = vmul.f32 %v2411, %v2113
  %v2420 = vmul.f32 %v2405, %v2412
  %v2421 = vadd.f32 %v2419, %v2420
  %v2422 = vtanh.pop %v2421
  %v2423 = vmul.f32 %v2418, %v2422
  %v2424 = vld [vmem:[#allocation2 + $0x80] sm:$0xff]
  %v2425 = vld [vmem:[#allocation2 + $0x88] sm:$0xff]
  %v2426 = vld [vmem:[#allocation2 + $0x90] sm:$0xff]
  %v2427 = vld [vmem:[#allocation2 + $0x98] sm:$0xff]
  %2428 = vmatprep.subr.bf16.mxu0 %v726
  %2429 = vmatpush1.bf16.msra.mxu0 %v725
  %2430 = vmatprep.subr.bf16.mxu0 %v730
  %2431 = vmatpush1.bf16.msra.mxu0 %v729
  %2432 = vmatprep.subr.bf16.mxu0 %v734
  %2433 = vmatpush1.bf16.msra.mxu0 %v733
  %2434 = vmatprep.subr.bf16.mxu0 %v738
  %2435 = vmatpush1.bf16.msra.mxu0 %v737
  %2436 = vmatprep.subr.bf16.mxu0 %v742
  %2437 = vmatpush1.bf16.msra.mxu0 %v741
  %2438 = vmatprep.subr.bf16.mxu0 %v746
  %2439 = vmatpush1.bf16.msra.mxu0 %v745
  %2440 = vmatprep.subr.bf16.mxu0 %v750
  %2441 = vmatpush1.bf16.msra.mxu0 %v749
  %2442 = vmatprep.subr.bf16.mxu0 %v754
  %2443 = vmatpush1.bf16.msra.mxu0 %v753
  %2444 = vmatprep.subr.bf16.mxu0 0
  %2445 = vmatpush1.bf16.msra.mxu0 0
  %2446 = vmatprep.subr.bf16.mxu0 0
  %2447 = vmatpush1.bf16.msra.mxu0 0
  %2448 = vmatprep.subr.bf16.mxu0 0
  %2449 = vmatpush1.bf16.msra.mxu0 0
  %2450 = vmatprep.subr.bf16.mxu0 0
  %2451 = vmatpush1.bf16.msra.mxu0 0
  %2452 = vmatprep.subr.bf16.mxu0 0
  %2453 = vmatpush1.bf16.msra.mxu0 0
  %2454 = vmatprep.subr.bf16.mxu0 0
  %2455 = vmatpush1.bf16.msra.mxu0 0
  %2456 = vmatprep.subr.bf16.mxu0 0
  %2457 = vmatpush1.bf16.msra.mxu0 0
  %2458 = vmatprep.subr.bf16.mxu0 0
  %2459 = vmatpush1.bf16.msra.mxu0 0
  %2460 = vmatprep.mubr.bf16.mxu0 0
  %2461 = vmatmul.mubr.bf16.gmra.mrb[0].mxu0 %v2230
  %v2462 = vpop.f32.mrb[0].mxu0
  %v2463 = vadd.f32 0.0, %v2462
  %v2464 = vpop.f32.mrb[0].mxu0
  %v2465 = vadd.f32 0.0, %v2464
  %v2466 = vpop.f32.mrb[0].mxu0
  %v2467 = vpop.f32.mrb[0].mxu0
  %2468 = vdwg.mxu0
  %2469 = vmatprep.subr.bf16.mxu0 %v728
  %2470 = vmatpush1.bf16.msra.mxu0 %v727
  %2471 = vmatprep.subr.bf16.mxu0 %v732
  %2472 = vmatpush1.bf16.msra.mxu0 %v731
  %2473 = vmatprep.subr.bf16.mxu0 %v736
  %2474 = vmatpush1.bf16.msra.mxu0 %v735
  %2475 = vmatprep.subr.bf16.mxu0 %v740
  %2476 = vmatpush1.bf16.msra.mxu0 %v739
  %2477 = vmatprep.subr.bf16.mxu0 %v744
  %2478 = vmatpush1.bf16.msra.mxu0 %v743
  %2479 = vmatprep.subr.bf16.mxu0 %v748
  %2480 = vmatpush1.bf16.msra.mxu0 %v747
  %2481 = vmatprep.subr.bf16.mxu0 %v752
  %2482 = vmatpush1.bf16.msra.mxu0 %v751
  %2483 = vmatprep.subr.bf16.mxu0 %v756
  %2484 = vmatpush1.bf16.msra.mxu0 %v755
  %2485 = vmatprep.subr.bf16.mxu0 0
  %2486 = vmatpush1.bf16.msra.mxu0 0
  %2487 = vmatprep.subr.bf16.mxu0 0
  %2488 = vmatpush1.bf16.msra.mxu0 0
  %2489 = vmatprep.subr.bf16.mxu0 0
  %2490 = vmatpush1.bf16.msra.mxu0 0
  %2491 = vmatprep.subr.bf16.mxu0 0
  %2492 = vmatpush1.bf16.msra.mxu0 0
  %2493 = vmatprep.subr.bf16.mxu0 0
  %2494 = vmatpush1.bf16.msra.mxu0 0
  %2495 = vmatprep.subr.bf16.mxu0 0
  %2496 = vmatpush1.bf16.msra.mxu0 0
  %2497 = vmatprep.subr.bf16.mxu0 0
  %2498 = vmatpush1.bf16.msra.mxu0 0
  %2499 = vmatprep.subr.bf16.mxu0 0
  %2500 = vmatpush1.bf16.msra.mxu0 0
  %2501 = vmatprep.mubr.bf16.mxu0 0
  %2502 = vmatmul.mubr.bf16.gmra.mrb[0].mxu0 %v2230
  %v2503 = vpop.f32.mrb[0].mxu0
  %v2504 = vadd.f32 0.0, %v2503
  %v2505 = vpop.f32.mrb[0].mxu0
  %v2506 = vadd.f32 0.0, %v2505
  %v2507 = vpop.f32.mrb[0].mxu0
  %v2508 = vpop.f32.mrb[0].mxu0
  %2509 = vdwg.mxu0
  %v2510 = vadd.f32 %v2424, %v2463
  %v2511 = vadd.f32 %v2425, %v2465
  %v2512 = vadd.f32 %v2426, %v2504
  %v2513 = vadd.f32 %v2427, %v2506
  %v2514 = vxor.u32 %v2510, 2147483648
  %v2515 = vmul.f32 %v2514, 1.442695
  %v2516 = vpow.pop %v2515
  %v2517 = vadd.f32 %v2516, 1.0
  %v2518 = vrcp.pop %v2517
  %v2519 = vmul.f32 1.0, %v2518
  %v2520 = vxor.u32 %v2511, 2147483648
  %v2521 = vmul.f32 %v2520, 1.442695
  %v2522 = vpow.pop %v2521
  %v2523 = vadd.f32 %v2522, 1.0
  %v2524 = vrcp.pop %v2523
  %v2525 = vmul.f32 1.0, %v2524
  %v2526 = vtanh.pop %v2512
  %v2527 = vxor.u32 %v2513, 2147483648
  %v2528 = vmul.f32 %v2527, 1.442695
  %v2529 = vpow.pop %v2528
  %v2530 = vadd.f32 %v2529, 1.0
  %v2531 = vrcp.pop %v2530
  %v2532 = vmul.f32 1.0, %v2531
  %v2533 = vmul.f32 %v2525, %v2227
  %v2534 = vmul.f32 %v2519, %v2526
  %v2535 = vadd.f32 %v2533, %v2534
  %v2536 = vtanh.pop %v2535
  %v2537 = vmul.f32 %v2532, %v2536
  %v2538 = vpack.c.bf16 %v2537, %v2537
  %v2539 = vpack.c.bf16 %v2423, %v2423
  %2540 = vmatprep.subr.bf16.mxu0 %v1062
  %2541 = vmatpush1.bf16.msra.mxu0 %v1061
  %2542 = vmatprep.subr.bf16.mxu0 %v1066
  %2543 = vmatpush1.bf16.msra.mxu0 %v1065
  %2544 = vmatprep.subr.bf16.mxu0 %v1070
  %2545 = vmatpush1.bf16.msra.mxu0 %v1069
  %2546 = vmatprep.subr.bf16.mxu0 %v1074
  %2547 = vmatpush1.bf16.msra.mxu0 %v1073
  %2548 = vmatprep.subr.bf16.mxu0 %v1078
  %2549 = vmatpush1.bf16.msra.mxu0 %v1077
  %2550 = vmatprep.subr.bf16.mxu0 %v1082
  %2551 = vmatpush1.bf16.msra.mxu0 %v1081
  %2552 = vmatprep.subr.bf16.mxu0 %v1086
  %2553 = vmatpush1.bf16.msra.mxu0 %v1085
  %2554 = vmatprep.subr.bf16.mxu0 %v1090
  %2555 = vmatpush1.bf16.msra.mxu0 %v1089
  %2556 = vmatprep.subr.bf16.mxu0 0
  %2557 = vmatpush1.bf16.msra.mxu0 0
  %2558 = vmatprep.subr.bf16.mxu0 0
  %2559 = vmatpush1.bf16.msra.mxu0 0
  %2560 = vmatprep.subr.bf16.mxu0 0
  %2561 = vmatpush1.bf16.msra.mxu0 0
  %2562 = vmatprep.subr.bf16.mxu0 0
  %2563 = vmatpush1.bf16.msra.mxu0 0
  %2564 = vmatprep.subr.bf16.mxu0 0
  %2565 = vmatpush1.bf16.msra.mxu0 0
  %2566 = vmatprep.subr.bf16.mxu0 0
  %2567 = vmatpush1.bf16.msra.mxu0 0
  %2568 = vmatprep.subr.bf16.mxu0 0
  %2569 = vmatpush1.bf16.msra.mxu0 0
  %2570 = vmatprep.subr.bf16.mxu0 0
  %2571 = vmatpush1.bf16.msra.mxu0 0
  %2572 = vmatprep.mubr.bf16.mxu0 0
  %2573 = vmatmul.mubr.bf16.gmra.mrb[0].mxu0 %v2539
  %v2574 = vpop.f32.mrb[0].mxu0
  %v2575 = vadd.f32 0.0, %v2574
  %v2576 = vpop.f32.mrb[0].mxu0
  %v2577 = vadd.f32 0.0, %v2576
  %v2578 = vpop.f32.mrb[0].mxu0
  %v2579 = vpop.f32.mrb[0].mxu0
  %2580 = vdwg.mxu0
  %2581 = vmatprep.subr.bf16.mxu0 %v1064
  %2582 = vmatpush1.bf16.msra.mxu0 %v1063
  %2583 = vmatprep.subr.bf16.mxu0 %v1068
  %2584 = vmatpush1.bf16.msra.mxu0 %v1067
  %2585 = vmatprep.subr.bf16.mxu0 %v1072
  %2586 = vmatpush1.bf16.msra.mxu0 %v1071
  %2587 = vmatprep.subr.bf16.mxu0 %v1076
  %2588 = vmatpush1.bf16.msra.mxu0 %v1075
  %2589 = vmatprep.subr.bf16.mxu0 %v1080
  %2590 = vmatpush1.bf16.msra.mxu0 %v1079
  %2591 = vmatprep.subr.bf16.mxu0 %v1084
  %2592 = vmatpush1.bf16.msra.mxu0 %v1083
  %2593 = vmatprep.subr.bf16.mxu0 %v1088
  %2594 = vmatpush1.bf16.msra.mxu0 %v1087
  %2595 = vmatprep.subr.bf16.mxu0 %v1092
  %2596 = vmatpush1.bf16.msra.mxu0 %v1091
  %2597 = vmatprep.subr.bf16.mxu0 0
  %2598 = vmatpush1.bf16.msra.mxu0 0
  %2599 = vmatprep.subr.bf16.mxu0 0
  %2600 = vmatpush1.bf16.msra.mxu0 0
  %2601 = vmatprep.subr.bf16.mxu0 0
  %2602 = vmatpush1.bf16.msra.mxu0 0
  %2603 = vmatprep.subr.bf16.mxu0 0
  %2604 = vmatpush1.bf16.msra.mxu0 0
  %2605 = vmatprep.subr.bf16.mxu0 0
  %2606 = vmatpush1.bf16.msra.mxu0 0
  %2607 = vmatprep.subr.bf16.mxu0 0
  %2608 = vmatpush1.bf16.msra.mxu0 0
  %2609 = vmatprep.subr.bf16.mxu0 0
  %2610 = vmatpush1.bf16.msra.mxu0 0
  %2611 = vmatprep.subr.bf16.mxu0 0
  %2612 = vmatpush1.bf16.msra.mxu0 0
  %2613 = vmatprep.mubr.bf16.mxu0 0
  %2614 = vmatmul.mubr.bf16.gmra.mrb[0].mxu0 %v2539
  %v2615 = vpop.f32.mrb[0].mxu0
  %v2616 = vadd.f32 0.0, %v2615
  %v2617 = vpop.f32.mrb[0].mxu0
  %v2618 = vadd.f32 0.0, %v2617
  %v2619 = vpop.f32.mrb[0].mxu0
  %v2620 = vpop.f32.mrb[0].mxu0
  %2621 = vdwg.mxu0
  %2622 = vmatprep.subr.bf16.mxu0 %v1304
  %2623 = vmatpush1.bf16.msra.mxu0 %v1303
  %2624 = vmatprep.subr.bf16.mxu0 %v1308
  %2625 = vmatpush1.bf16.msra.mxu0 %v1307
  %2626 = vmatprep.subr.bf16.mxu0 %v1312
  %2627 = vmatpush1.bf16.msra.mxu0 %v1311
  %2628 = vmatprep.subr.bf16.mxu0 %v1316
  %2629 = vmatpush1.bf16.msra.mxu0 %v1315
  %2630 = vmatprep.subr.bf16.mxu0 %v1320
  %2631 = vmatpush1.bf16.msra.mxu0 %v1319
  %2632 = vmatprep.subr.bf16.mxu0 %v1324
  %2633 = vmatpush1.bf16.msra.mxu0 %v1323
  %2634 = vmatprep.subr.bf16.mxu0 %v1328
  %2635 = vmatpush1.bf16.msra.mxu0 %v1327
  %2636 = vmatprep.subr.bf16.mxu0 %v1332
  %2637 = vmatpush1.bf16.msra.mxu0 %v1331
  %2638 = vmatprep.subr.bf16.mxu0 0
  %2639 = vmatpush1.bf16.msra.mxu0 0
  %2640 = vmatprep.subr.bf16.mxu0 0
  %2641 = vmatpush1.bf16.msra.mxu0 0
  %2642 = vmatprep.subr.bf16.mxu0 0
  %2643 = vmatpush1.bf16.msra.mxu0 0
  %2644 = vmatprep.subr.bf16.mxu0 0
  %2645 = vmatpush1.bf16.msra.mxu0 0
  %2646 = vmatprep.subr.bf16.mxu0 0
  %2647 = vmatpush1.bf16.msra.mxu0 0
  %2648 = vmatprep.subr.bf16.mxu0 0
  %2649 = vmatpush1.bf16.msra.mxu0 0
  %2650 = vmatprep.subr.bf16.mxu0 0
  %2651 = vmatpush1.bf16.msra.mxu0 0
  %2652 = vmatprep.subr.bf16.mxu0 0
  %2653 = vmatpush1.bf16.msra.mxu0 0
  %2654 = vmatprep.mubr.bf16.mxu0 0
  %2655 = vmatmul.mubr.bf16.gmra.mrb[0].mxu0 %v2538
  %v2656 = vpop.f32.mrb[0].mxu0
  %v2657 = vadd.f32 %v2575, %v2656
  %v2658 = vpop.f32.mrb[0].mxu0
  %v2659 = vadd.f32 %v2577, %v2658
  %v2660 = vpop.f32.mrb[0].mxu0
  %v2661 = vpop.f32.mrb[0].mxu0
  %2662 = vdwg.mxu0
  %2663 = vmatprep.subr.bf16.mxu0 %v1306
  %2664 = vmatpush1.bf16.msra.mxu0 %v1305
  %2665 = vmatprep.subr.bf16.mxu0 %v1310
  %2666 = vmatpush1.bf16.msra.mxu0 %v1309
  %2667 = vmatprep.subr.bf16.mxu0 %v1314
  %2668 = vmatpush1.bf16.msra.mxu0 %v1313
  %2669 = vmatprep.subr.bf16.mxu0 %v1318
  %2670 = vmatpush1.bf16.msra.mxu0 %v1317
  %2671 = vmatprep.subr.bf16.mxu0 %v1322
  %2672 = vmatpush1.bf16.msra.mxu0 %v1321
  %2673 = vmatprep.subr.bf16.mxu0 %v1326
  %2674 = vmatpush1.bf16.msra.mxu0 %v1325
  %2675 = vmatprep.subr.bf16.mxu0 %v1330
  %2676 = vmatpush1.bf16.msra.mxu0 %v1329
  %2677 = vmatprep.subr.bf16.mxu0 %v1334
  %2678 = vmatpush1.bf16.msra.mxu0 %v1333
  %2679 = vmatprep.subr.bf16.mxu0 0
  %2680 = vmatpush1.bf16.msra.mxu0 0
  %2681 = vmatprep.subr.bf16.mxu0 0
  %2682 = vmatpush1.bf16.msra.mxu0 0
  %2683 = vmatprep.subr.bf16.mxu0 0
  %2684 = vmatpush1.bf16.msra.mxu0 0
  %2685 = vmatprep.subr.bf16.mxu0 0
  %2686 = vmatpush1.bf16.msra.mxu0 0
  %2687 = vmatprep.subr.bf16.mxu0 0
  %2688 = vmatpush1.bf16.msra.mxu0 0
  %2689 = vmatprep.subr.bf16.mxu0 0
  %2690 = vmatpush1.bf16.msra.mxu0 0
  %2691 = vmatprep.subr.bf16.mxu0 0
  %2692 = vmatpush1.bf16.msra.mxu0 0
  %2693 = vmatprep.subr.bf16.mxu0 0
  %2694 = vmatpush1.bf16.msra.mxu0 0
  %2695 = vmatprep.mubr.bf16.mxu0 0
  %2696 = vmatmul.mubr.bf16.gmra.mrb[0].mxu0 %v2538
  %v2697 = vpop.f32.mrb[0].mxu0
  %v2698 = vadd.f32 %v2616, %v2697
  %v2699 = vpop.f32.mrb[0].mxu0
  %v2700 = vadd.f32 %v2618, %v2699
  %v2701 = vpop.f32.mrb[0].mxu0
  %v2702 = vpop.f32.mrb[0].mxu0
  %2703 = vdwg.mxu0
  %v2704 = vadd.f32 %v2657, %v1455
  %v2705 = vadd.f32 %v2659, %v1459
  %v2706 = vadd.f32 %v2698, %v1463
  %v2707 = vadd.f32 %v2700, %v1467
  %v2708 = vxor.u32 %v2704, 2147483648
  %v2709 = vmul.f32 %v2708, 1.442695
  %v2710 = vpow.pop %v2709
  %v2711 = vadd.f32 %v2710, 1.0
  %v2712 = vrcp.pop %v2711
  %v2713 = vmul.f32 1.0, %v2712
  %v2714 = vxor.u32 %v2705, 2147483648
  %v2715 = vmul.f32 %v2714, 1.442695
  %v2716 = vpow.pop %v2715
  %v2717 = vadd.f32 %v2716, 1.0
  %v2718 = vrcp.pop %v2717
  %v2719 = vmul.f32 1.0, %v2718
  %v2720 = vtanh.pop %v2706
  %v2721 = vxor.u32 %v2707, 2147483648
  %v2722 = vmul.f32 %v2721, 1.442695
  %v2723 = vpow.pop %v2722
  %v2724 = vadd.f32 %v2723, 1.0
  %v2725 = vrcp.pop %v2724
  %v2726 = vmul.f32 1.0, %v2725
  %v2727 = vmul.f32 %v2719, %v2421
  %v2728 = vmul.f32 %v2713, %v2720
  %v2729 = vadd.f32 %v2727, %v2728
  %v2730 = vtanh.pop %v2729
  %v2731 = vmul.f32 %v2726, %v2730
  %v2732 = vld [vmem:[#allocation2 + $0xa0] sm:$0xff]
  %v2733 = vld [vmem:[#allocation2 + $0xa8] sm:$0xff]
  %v2734 = vld [vmem:[#allocation2 + $0xb0] sm:$0xff]
  %v2735 = vld [vmem:[#allocation2 + $0xb8] sm:$0xff]
  %2736 = vmatprep.subr.bf16.mxu0 %v726
  %2737 = vmatpush1.bf16.msra.mxu0 %v725
  %2738 = vmatprep.subr.bf16.mxu0 %v730
  %2739 = vmatpush1.bf16.msra.mxu0 %v729
  %2740 = vmatprep.subr.bf16.mxu0 %v734
  %2741 = vmatpush1.bf16.msra.mxu0 %v733
  %2742 = vmatprep.subr.bf16.mxu0 %v738
  %2743 = vmatpush1.bf16.msra.mxu0 %v737
  %2744 = vmatprep.subr.bf16.mxu0 %v742
  %2745 = vmatpush1.bf16.msra.mxu0 %v741
  %2746 = vmatprep.subr.bf16.mxu0 %v746
  %2747 = vmatpush1.bf16.msra.mxu0 %v745
  %2748 = vmatprep.subr.bf16.mxu0 %v750
  %2749 = vmatpush1.bf16.msra.mxu0 %v749
  %2750 = vmatprep.subr.bf16.mxu0 %v754
  %2751 = vmatpush1.bf16.msra.mxu0 %v753
  %2752 = vmatprep.subr.bf16.mxu0 0
  %2753 = vmatpush1.bf16.msra.mxu0 0
  %2754 = vmatprep.subr.bf16.mxu0 0
  %2755 = vmatpush1.bf16.msra.mxu0 0
  %2756 = vmatprep.subr.bf16.mxu0 0
  %2757 = vmatpush1.bf16.msra.mxu0 0
  %2758 = vmatprep.subr.bf16.mxu0 0
  %2759 = vmatpush1.bf16.msra.mxu0 0
  %2760 = vmatprep.subr.bf16.mxu0 0
  %2761 = vmatpush1.bf16.msra.mxu0 0
  %2762 = vmatprep.subr.bf16.mxu0 0
  %2763 = vmatpush1.bf16.msra.mxu0 0
  %2764 = vmatprep.subr.bf16.mxu0 0
  %2765 = vmatpush1.bf16.msra.mxu0 0
  %2766 = vmatprep.subr.bf16.mxu0 0
  %2767 = vmatpush1.bf16.msra.mxu0 0
  %2768 = vmatprep.mubr.bf16.mxu0 0
  %2769 = vmatmul.mubr.bf16.gmra.mrb[0].mxu0 %v2538
  %v2770 = vpop.f32.mrb[0].mxu0
  %v2771 = vadd.f32 0.0, %v2770
  %v2772 = vpop.f32.mrb[0].mxu0
  %v2773 = vadd.f32 0.0, %v2772
  %v2774 = vpop.f32.mrb[0].mxu0
  %v2775 = vpop.f32.mrb[0].mxu0
  %2776 = vdwg.mxu0
  %2777 = vmatprep.subr.bf16.mxu0 %v728
  %2778 = vmatpush1.bf16.msra.mxu0 %v727
  %2779 = vmatprep.subr.bf16.mxu0 %v732
  %2780 = vmatpush1.bf16.msra.mxu0 %v731
  %2781 = vmatprep.subr.bf16.mxu0 %v736
  %2782 = vmatpush1.bf16.msra.mxu0 %v735
  %2783 = vmatprep.subr.bf16.mxu0 %v740
  %2784 = vmatpush1.bf16.msra.mxu0 %v739
  %2785 = vmatprep.subr.bf16.mxu0 %v744
  %2786 = vmatpush1.bf16.msra.mxu0 %v743
  %2787 = vmatprep.subr.bf16.mxu0 %v748
  %2788 = vmatpush1.bf16.msra.mxu0 %v747
  %2789 = vmatprep.subr.bf16.mxu0 %v752
  %2790 = vmatpush1.bf16.msra.mxu0 %v751
  %2791 = vmatprep.subr.bf16.mxu0 %v756
  %2792 = vmatpush1.bf16.msra.mxu0 %v755
  %2793 = vmatprep.subr.bf16.mxu0 0
  %2794 = vmatpush1.bf16.msra.mxu0 0
  %2795 = vmatprep.subr.bf16.mxu0 0
  %2796 = vmatpush1.bf16.msra.mxu0 0
  %2797 = vmatprep.subr.bf16.mxu0 0
  %2798 = vmatpush1.bf16.msra.mxu0 0
  %2799 = vmatprep.subr.bf16.mxu0 0
  %2800 = vmatpush1.bf16.msra.mxu0 0
  %2801 = vmatprep.subr.bf16.mxu0 0
  %2802 = vmatpush1.bf16.msra.mxu0 0
  %2803 = vmatprep.subr.bf16.mxu0 0
  %2804 = vmatpush1.bf16.msra.mxu0 0
  %2805 = vmatprep.subr.bf16.mxu0 0
  %2806 = vmatpush1.bf16.msra.mxu0 0
  %2807 = vmatprep.subr.bf16.mxu0 0
  %2808 = vmatpush1.bf16.msra.mxu0 0
  %2809 = vmatprep.mubr.bf16.mxu0 0
  %2810 = vmatmul.mubr.bf16.gmra.mrb[0].mxu0 %v2538
  %v2811 = vpop.f32.mrb[0].mxu0
  %v2812 = vadd.f32 0.0, %v2811
  %v2813 = vpop.f32.mrb[0].mxu0
  %v2814 = vadd.f32 0.0, %v2813
  %v2815 = vpop.f32.mrb[0].mxu0
  %v2816 = vpop.f32.mrb[0].mxu0
  %2817 = vdwg.mxu0
  %v2818 = vadd.f32 %v2732, %v2771
  %v2819 = vadd.f32 %v2733, %v2773
  %v2820 = vadd.f32 %v2734, %v2812
  %v2821 = vadd.f32 %v2735, %v2814
  %v2822 = vxor.u32 %v2818, 2147483648
  %v2823 = vmul.f32 %v2822, 1.442695
  %v2824 = vpow.pop %v2823
  %v2825 = vadd.f32 %v2824, 1.0
  %v2826 = vrcp.pop %v2825
  %v2827 = vmul.f32 1.0, %v2826
  %v2828 = vxor.u32 %v2819, 2147483648
  %v2829 = vmul.f32 %v2828, 1.442695
  %v2830 = vpow.pop %v2829
  %v2831 = vadd.f32 %v2830, 1.0
  %v2832 = vrcp.pop %v2831
  %v2833 = vmul.f32 1.0, %v2832
  %v2834 = vtanh.pop %v2820
  %v2835 = vxor.u32 %v2821, 2147483648
  %v2836 = vmul.f32 %v2835, 1.442695
  %v2837 = vpow.pop %v2836
  %v2838 = vadd.f32 %v2837, 1.0
  %v2839 = vrcp.pop %v2838
  %v2840 = vmul.f32 1.0, %v2839
  %v2841 = vmul.f32 %v2833, %v2535
  %v2842 = vmul.f32 %v2827, %v2834
  %v2843 = vadd.f32 %v2841, %v2842
  %v2844 = vtanh.pop %v2843
  %v2845 = vmul.f32 %v2840, %v2844
  %v2846 = vpack.c.bf16 %v2845, %v2845
  %v2847 = vpack.c.bf16 %v2731, %v2731
  %2848 = vmatprep.subr.bf16.mxu0 %v1062
  %2849 = vmatpush1.bf16.msra.mxu0 %v1061
  %2850 = vmatprep.subr.bf16.mxu0 %v1066
  %2851 = vmatpush1.bf16.msra.mxu0 %v1065
  %2852 = vmatprep.subr.bf16.mxu0 %v1070
  %2853 = vmatpush1.bf16.msra.mxu0 %v1069
  %2854 = vmatprep.subr.bf16.mxu0 %v1074
  %2855 = vmatpush1.bf16.msra.mxu0 %v1073
  %2856 = vmatprep.subr.bf16.mxu0 %v1078
  %2857 = vmatpush1.bf16.msra.mxu0 %v1077
  %2858 = vmatprep.subr.bf16.mxu0 %v1082
  %2859 = vmatpush1.bf16.msra.mxu0 %v1081
  %2860 = vmatprep.subr.bf16.mxu0 %v1086
  %2861 = vmatpush1.bf16.msra.mxu0 %v1085
  %2862 = vmatprep.subr.bf16.mxu0 %v1090
  %2863 = vmatpush1.bf16.msra.mxu0 %v1089
  %2864 = vmatprep.subr.bf16.mxu0 0
  %2865 = vmatpush1.bf16.msra.mxu0 0
  %2866 = vmatprep.subr.bf16.mxu0 0
  %2867 = vmatpush1.bf16.msra.mxu0 0
  %2868 = vmatprep.subr.bf16.mxu0 0
  %2869 = vmatpush1.bf16.msra.mxu0 0
  %2870 = vmatprep.subr.bf16.mxu0 0
  %2871 = vmatpush1.bf16.msra.mxu0 0
  %2872 = vmatprep.subr.bf16.mxu0 0
  %2873 = vmatpush1.bf16.msra.mxu0 0
  %2874 = vmatprep.subr.bf16.mxu0 0
  %2875 = vmatpush1.bf16.msra.mxu0 0
  %2876 = vmatprep.subr.bf16.mxu0 0
  %2877 = vmatpush1.bf16.msra.mxu0 0
  %2878 = vmatprep.subr.bf16.mxu0 0
  %2879 = vmatpush1.bf16.msra.mxu0 0
  %2880 = vmatprep.mubr.bf16.mxu0 0
  %2881 = vmatmul.mubr.bf16.gmra.mrb[0].mxu0 %v2847
  %v2882 = vpop.f32.mrb[0].mxu0
  %v2883 = vadd.f32 0.0, %v2882
  %v2884 = vpop.f32.mrb[0].mxu0
  %v2885 = vadd.f32 0.0, %v2884
  %v2886 = vpop.f32.mrb[0].mxu0
  %v2887 = vpop.f32.mrb[0].mxu0
  %2888 = vdwg.mxu0
  %2889 = vmatprep.subr.bf16.mxu0 %v1064
  %2890 = vmatpush1.bf16.msra.mxu0 %v1063
  %2891 = vmatprep.subr.bf16.mxu0 %v1068
  %2892 = vmatpush1.bf16.msra.mxu0 %v1067
  %2893 = vmatprep.subr.bf16.mxu0 %v1072
  %2894 = vmatpush1.bf16.msra.mxu0 %v1071
  %2895 = vmatprep.subr.bf16.mxu0 %v1076
  %2896 = vmatpush1.bf16.msra.mxu0 %v1075
  %2897 = vmatprep.subr.bf16.mxu0 %v1080
  %2898 = vmatpush1.bf16.msra.mxu0 %v1079
  %2899 = vmatprep.subr.bf16.mxu0 %v1084
  %2900 = vmatpush1.bf16.msra.mxu0 %v1083
  %2901 = vmatprep.subr.bf16.mxu0 %v1088
  %2902 = vmatpush1.bf16.msra.mxu0 %v1087
  %2903 = vmatprep.subr.bf16.mxu0 %v1092
  %2904 = vmatpush1.bf16.msra.mxu0 %v1091
  %2905 = vmatprep.subr.bf16.mxu0 0
  %2906 = vmatpush1.bf16.msra.mxu0 0
  %2907 = vmatprep.subr.bf16.mxu0 0
  %2908 = vmatpush1.bf16.msra.mxu0 0
  %2909 = vmatprep.subr.bf16.mxu0 0
  %2910 = vmatpush1.bf16.msra.mxu0 0
  %2911 = vmatprep.subr.bf16.mxu0 0
  %2912 = vmatpush1.bf16.msra.mxu0 0
  %2913 = vmatprep.subr.bf16.mxu0 0
  %2914 = vmatpush1.bf16.msra.mxu0 0
  %2915 = vmatprep.subr.bf16.mxu0 0
  %2916 = vmatpush1.bf16.msra.mxu0 0
  %2917 = vmatprep.subr.bf16.mxu0 0
  %2918 = vmatpush1.bf16.msra.mxu0 0
  %2919 = vmatprep.subr.bf16.mxu0 0
  %2920 = vmatpush1.bf16.msra.mxu0 0
  %2921 = vmatprep.mubr.bf16.mxu0 0
  %2922 = vmatmul.mubr.bf16.gmra.mrb[0].mxu0 %v2847
  %v2923 = vpop.f32.mrb[0].mxu0
  %v2924 = vadd.f32 0.0, %v2923
  %v2925 = vpop.f32.mrb[0].mxu0
  %v2926 = vadd.f32 0.0, %v2925
  %v2927 = vpop.f32.mrb[0].mxu0
  %v2928 = vpop.f32.mrb[0].mxu0
  %2929 = vdwg.mxu0
  %2930 = vmatprep.subr.bf16.mxu0 %v1304
  %2931 = vmatpush1.bf16.msra.mxu0 %v1303
  %2932 = vmatprep.subr.bf16.mxu0 %v1308
  %2933 = vmatpush1.bf16.msra.mxu0 %v1307
  %2934 = vmatprep.subr.bf16.mxu0 %v1312
  %2935 = vmatpush1.bf16.msra.mxu0 %v1311
  %2936 = vmatprep.subr.bf16.mxu0 %v1316
  %2937 = vmatpush1.bf16.msra.mxu0 %v1315
  %2938 = vmatprep.subr.bf16.mxu0 %v1320
  %2939 = vmatpush1.bf16.msra.mxu0 %v1319
  %2940 = vmatprep.subr.bf16.mxu0 %v1324
  %2941 = vmatpush1.bf16.msra.mxu0 %v1323
  %2942 = vmatprep.subr.bf16.mxu0 %v1328
  %2943 = vmatpush1.bf16.msra.mxu0 %v1327
  %2944 = vmatprep.subr.bf16.mxu0 %v1332
  %2945 = vmatpush1.bf16.msra.mxu0 %v1331
  %2946 = vmatprep.subr.bf16.mxu0 0
  %2947 = vmatpush1.bf16.msra.mxu0 0
  %2948 = vmatprep.subr.bf16.mxu0 0
  %2949 = vmatpush1.bf16.msra.mxu0 0
  %2950 = vmatprep.subr.bf16.mxu0 0
  %2951 = vmatpush1.bf16.msra.mxu0 0
  %2952 = vmatprep.subr.bf16.mxu0 0
  %2953 = vmatpush1.bf16.msra.mxu0 0
  %2954 = vmatprep.subr.bf16.mxu0 0
  %2955 = vmatpush1.bf16.msra.mxu0 0
  %2956 = vmatprep.subr.bf16.mxu0 0
  %2957 = vmatpush1.bf16.msra.mxu0 0
  %2958 = vmatprep.subr.bf16.mxu0 0
  %2959 = vmatpush1.bf16.msra.mxu0 0
  %2960 = vmatprep.subr.bf16.mxu0 0
  %2961 = vmatpush1.bf16.msra.mxu0 0
  %2962 = vmatprep.mubr.bf16.mxu0 0
  %2963 = vmatmul.mubr.bf16.gmra.mrb[0].mxu0 %v2846
  %v2964 = vpop.f32.mrb[0].mxu0
  %v2965 = vadd.f32 %v2883, %v2964
  %v2966 = vpop.f32.mrb[0].mxu0
  %v2967 = vadd.f32 %v2885, %v2966
  %v2968 = vpop.f32.mrb[0].mxu0
  %v2969 = vpop.f32.mrb[0].mxu0
  %2970 = vdwg.mxu0
  %2971 = vmatprep.subr.bf16.mxu0 %v1306
  %2972 = vmatpush1.bf16.msra.mxu0 %v1305
  %2973 = vmatprep.subr.bf16.mxu0 %v1310
  %2974 = vmatpush1.bf16.msra.mxu0 %v1309
  %2975 = vmatprep.subr.bf16.mxu0 %v1314
  %2976 = vmatpush1.bf16.msra.mxu0 %v1313
  %2977 = vmatprep.subr.bf16.mxu0 %v1318
  %2978 = vmatpush1.bf16.msra.mxu0 %v1317
  %2979 = vmatprep.subr.bf16.mxu0 %v1322
  %2980 = vmatpush1.bf16.msra.mxu0 %v1321
  %2981 = vmatprep.subr.bf16.mxu0 %v1326
  %2982 = vmatpush1.bf16.msra.mxu0 %v1325
  %2983 = vmatprep.subr.bf16.mxu0 %v1330
  %2984 = vmatpush1.bf16.msra.mxu0 %v1329
  %2985 = vmatprep.subr.bf16.mxu0 %v1334
  %2986 = vmatpush1.bf16.msra.mxu0 %v1333
  %2987 = vmatprep.subr.bf16.mxu0 0
  %2988 = vmatpush1.bf16.msra.mxu0 0
  %2989 = vmatprep.subr.bf16.mxu0 0
  %2990 = vmatpush1.bf16.msra.mxu0 0
  %2991 = vmatprep.subr.bf16.mxu0 0
  %2992 = vmatpush1.bf16.msra.mxu0 0
  %2993 = vmatprep.subr.bf16.mxu0 0
  %2994 = vmatpush1.bf16.msra.mxu0 0
  %2995 = vmatprep.subr.bf16.mxu0 0
  %2996 = vmatpush1.bf16.msra.mxu0 0
  %2997 = vmatprep.subr.bf16.mxu0 0
  %2998 = vmatpush1.bf16.msra.mxu0 0
  %2999 = vmatprep.subr.bf16.mxu0 0
  %3000 = vmatpush1.bf16.msra.mxu0 0
  %3001 = vmatprep.subr.bf16.mxu0 0
  %3002 = vmatpush1.bf16.msra.mxu0 0
  %3003 = vmatprep.mubr.bf16.mxu0 0
  %3004 = vmatmul.mubr.bf16.gmra.mrb[0].mxu0 %v2846
  %v3005 = vpop.f32.mrb[0].mxu0
  %v3006 = vadd.f32 %v2924, %v3005
  %v3007 = vpop.f32.mrb[0].mxu0
  %v3008 = vadd.f32 %v2926, %v3007
  %v3009 = vpop.f32.mrb[0].mxu0
  %v3010 = vpop.f32.mrb[0].mxu0
  %3011 = vdwg.mxu0
  %v3012 = vadd.f32 %v2965, %v1455
  %v3013 = vadd.f32 %v2967, %v1459
  %v3014 = vadd.f32 %v3006, %v1463
  %v3015 = vadd.f32 %v3008, %v1467
  %v3016 = vxor.u32 %v3012, 2147483648
  %v3017 = vmul.f32 %v3016, 1.442695
  %v3018 = vpow.pop %v3017
  %v3019 = vadd.f32 %v3018, 1.0
  %v3020 = vrcp.pop %v3019
  %v3021 = vmul.f32 1.0, %v3020
  %v3022 = vxor.u32 %v3013, 2147483648
  %v3023 = vmul.f32 %v3022, 1.442695
  %v3024 = vpow.pop %v3023
  %v3025 = vadd.f32 %v3024, 1.0
  %v3026 = vrcp.pop %v3025
  %v3027 = vmul.f32 1.0, %v3026
  %v3028 = vtanh.pop %v3014
  %v3029 = vxor.u32 %v3015, 2147483648
  %v3030 = vmul.f32 %v3029, 1.442695
  %v3031 = vpow.pop %v3030
  %v3032 = vadd.f32 %v3031, 1.0
  %v3033 = vrcp.pop %v3032
  %v3034 = vmul.f32 1.0, %v3033
  %v3035 = vmul.f32 %v3027, %v2729
  %v3036 = vmul.f32 %v3021, %v3028
  %v3037 = vadd.f32 %v3035, %v3036
  %v3038 = vtanh.pop %v3037
  %v3039 = vmul.f32 %v3034, %v3038
  %v3040 = vld [vmem:[#allocation2 + $0xc0] sm:$0xff]
  %v3041 = vld [vmem:[#allocation2 + $0xc8] sm:$0xff]
  %v3042 = vld [vmem:[#allocation2 + $0xd0] sm:$0xff]
  %v3043 = vld [vmem:[#allocation2 + $0xd8] sm:$0xff]
  %3044 = vmatprep.subr.bf16.mxu0 %v726
  %3045 = vmatpush1.bf16.msra.mxu0 %v725
  %3046 = vmatprep.subr.bf16.mxu0 %v730
  %3047 = vmatpush1.bf16.msra.mxu0 %v729
  %3048 = vmatprep.subr.bf16.mxu0 %v734
  %3049 = vmatpush1.bf16.msra.mxu0 %v733
  %3050 = vmatprep.subr.bf16.mxu0 %v738
  %3051 = vmatpush1.bf16.msra.mxu0 %v737
  %3052 = vmatprep.subr.bf16.mxu0 %v742
  %3053 = vmatpush1.bf16.msra.mxu0 %v741
  %3054 = vmatprep.subr.bf16.mxu0 %v746
  %3055 = vmatpush1.bf16.msra.mxu0 %v745
  %3056 = vmatprep.subr.bf16.mxu0 %v750
  %3057 = vmatpush1.bf16.msra.mxu0 %v749
  %3058 = vmatprep.subr.bf16.mxu0 %v754
  %3059 = vmatpush1.bf16.msra.mxu0 %v753
  %3060 = vmatprep.subr.bf16.mxu0 0
  %3061 = vmatpush1.bf16.msra.mxu0 0
  %3062 = vmatprep.subr.bf16.mxu0 0
  %3063 = vmatpush1.bf16.msra.mxu0 0
  %3064 = vmatprep.subr.bf16.mxu0 0
  %3065 = vmatpush1.bf16.msra.mxu0 0
  %3066 = vmatprep.subr.bf16.mxu0 0
  %3067 = vmatpush1.bf16.msra.mxu0 0
  %3068 = vmatprep.subr.bf16.mxu0 0
  %3069 = vmatpush1.bf16.msra.mxu0 0
  %3070 = vmatprep.subr.bf16.mxu0 0
  %3071 = vmatpush1.bf16.msra.mxu0 0
  %3072 = vmatprep.subr.bf16.mxu0 0
  %3073 = vmatpush1.bf16.msra.mxu0 0
  %3074 = vmatprep.subr.bf16.mxu0 0
  %3075 = vmatpush1.bf16.msra.mxu0 0
  %3076 = vmatprep.mubr.bf16.mxu0 0
  %3077 = vmatmul.mubr.bf16.gmra.mrb[0].mxu0 %v2846
  %v3078 = vpop.f32.mrb[0].mxu0
  %v3079 = vadd.f32 0.0, %v3078
  %v3080 = vpop.f32.mrb[0].mxu0
  %v3081 = vadd.f32 0.0, %v3080
  %v3082 = vpop.f32.mrb[0].mxu0
  %v3083 = vpop.f32.mrb[0].mxu0
  %3084 = vdwg.mxu0
  %3085 = vmatprep.subr.bf16.mxu0 %v728
  %3086 = vmatpush1.bf16.msra.mxu0 %v727
  %3087 = vmatprep.subr.bf16.mxu0 %v732
  %3088 = vmatpush1.bf16.msra.mxu0 %v731
  %3089 = vmatprep.subr.bf16.mxu0 %v736
  %3090 = vmatpush1.bf16.msra.mxu0 %v735
  %3091 = vmatprep.subr.bf16.mxu0 %v740
  %3092 = vmatpush1.bf16.msra.mxu0 %v739
  %3093 = vmatprep.subr.bf16.mxu0 %v744
  %3094 = vmatpush1.bf16.msra.mxu0 %v743
  %3095 = vmatprep.subr.bf16.mxu0 %v748
  %3096 = vmatpush1.bf16.msra.mxu0 %v747
  %3097 = vmatprep.subr.bf16.mxu0 %v752
  %3098 = vmatpush1.bf16.msra.mxu0 %v751
  %3099 = vmatprep.subr.bf16.mxu0 %v756
  %3100 = vmatpush1.bf16.msra.mxu0 %v755
  %3101 = vmatprep.subr.bf16.mxu0 0
  %3102 = vmatpush1.bf16.msra.mxu0 0
  %3103 = vmatprep.subr.bf16.mxu0 0
  %3104 = vmatpush1.bf16.msra.mxu0 0
  %3105 = vmatprep.subr.bf16.mxu0 0
  %3106 = vmatpush1.bf16.msra.mxu0 0
  %3107 = vmatprep.subr.bf16.mxu0 0
  %3108 = vmatpush1.bf16.msra.mxu0 0
  %3109 = vmatprep.subr.bf16.mxu0 0
  %3110 = vmatpush1.bf16.msra.mxu0 0
  %3111 = vmatprep.subr.bf16.mxu0 0
  %3112 = vmatpush1.bf16.msra.mxu0 0
  %3113 = vmatprep.subr.bf16.mxu0 0
  %3114 = vmatpush1.bf16.msra.mxu0 0
  %3115 = vmatprep.subr.bf16.mxu0 0
  %3116 = vmatpush1.bf16.msra.mxu0 0
  %3117 = vmatprep.mubr.bf16.mxu0 0
  %3118 = vmatmul.mubr.bf16.gmra.mrb[0].mxu0 %v2846
  %v3119 = vpop.f32.mrb[0].mxu0
  %v3120 = vadd.f32 0.0, %v3119
  %v3121 = vpop.f32.mrb[0].mxu0
  %v3122 = vadd.f32 0.0, %v3121
  %v3123 = vpop.f32.mrb[0].mxu0
  %v3124 = vpop.f32.mrb[0].mxu0
  %3125 = vdwg.mxu0
  %v3126 = vadd.f32 %v3040, %v3079
  %v3127 = vadd.f32 %v3041, %v3081
  %v3128 = vadd.f32 %v3042, %v3120
  %v3129 = vadd.f32 %v3043, %v3122
  %v3130 = vxor.u32 %v3126, 2147483648
  %v3131 = vmul.f32 %v3130, 1.442695
  %v3132 = vpow.pop %v3131
  %v3133 = vadd.f32 %v3132, 1.0
  %v3134 = vrcp.pop %v3133
  %v3135 = vmul.f32 1.0, %v3134
  %v3136 = vxor.u32 %v3127, 2147483648
  %v3137 = vmul.f32 %v3136, 1.442695
  %v3138 = vpow.pop %v3137
  %v3139 = vadd.f32 %v3138, 1.0
  %v3140 = vrcp.pop %v3139
  %v3141 = vmul.f32 1.0, %v3140
  %v3142 = vtanh.pop %v3128
  %v3143 = vxor.u32 %v3129, 2147483648
  %v3144 = vmul.f32 %v3143, 1.442695
  %v3145 = vpow.pop %v3144
  %v3146 = vadd.f32 %v3145, 1.0
  %v3147 = vrcp.pop %v3146
  %v3148 = vmul.f32 1.0, %v3147
  %v3149 = vmul.f32 %v3141, %v2843
  %v3150 = vmul.f32 %v3135, %v3142
  %v3151 = vadd.f32 %v3149, %v3150
  %v3152 = vtanh.pop %v3151
  %v3153 = vmul.f32 %v3148, %v3152
  %v3154 = vpack.c.bf16 %v3153, %v3153
  %v3155 = vpack.c.bf16 %v3039, %v3039
  %3156 = vmatprep.subr.bf16.mxu0 %v1062
  %3157 = vmatpush1.bf16.msra.mxu0 %v1061
  %3158 = vmatprep.subr.bf16.mxu0 %v1066
  %3159 = vmatpush1.bf16.msra.mxu0 %v1065
  %3160 = vmatprep.subr.bf16.mxu0 %v1070
  %3161 = vmatpush1.bf16.msra.mxu0 %v1069
  %3162 = vmatprep.subr.bf16.mxu0 %v1074
  %3163 = vmatpush1.bf16.msra.mxu0 %v1073
  %3164 = vmatprep.subr.bf16.mxu0 %v1078
  %3165 = vmatpush1.bf16.msra.mxu0 %v1077
  %3166 = vmatprep.subr.bf16.mxu0 %v1082
  %3167 = vmatpush1.bf16.msra.mxu0 %v1081
  %3168 = vmatprep.subr.bf16.mxu0 %v1086
  %3169 = vmatpush1.bf16.msra.mxu0 %v1085
  %3170 = vmatprep.subr.bf16.mxu0 %v1090
  %3171 = vmatpush1.bf16.msra.mxu0 %v1089
  %3172 = vmatprep.subr.bf16.mxu0 0
  %3173 = vmatpush1.bf16.msra.mxu0 0
  %3174 = vmatprep.subr.bf16.mxu0 0
  %3175 = vmatpush1.bf16.msra.mxu0 0
  %3176 = vmatprep.subr.bf16.mxu0 0
  %3177 = vmatpush1.bf16.msra.mxu0 0
  %3178 = vmatprep.subr.bf16.mxu0 0
  %3179 = vmatpush1.bf16.msra.mxu0 0
  %3180 = vmatprep.subr.bf16.mxu0 0
  %3181 = vmatpush1.bf16.msra.mxu0 0
  %3182 = vmatprep.subr.bf16.mxu0 0
  %3183 = vmatpush1.bf16.msra.mxu0 0
  %3184 = vmatprep.subr.bf16.mxu0 0
  %3185 = vmatpush1.bf16.msra.mxu0 0
  %3186 = vmatprep.subr.bf16.mxu0 0
  %3187 = vmatpush1.bf16.msra.mxu0 0
  %3188 = vmatprep.mubr.bf16.mxu0 0
  %3189 = vmatmul.mubr.bf16.gmra.mrb[0].mxu0 %v3155
  %v3190 = vpop.f32.mrb[0].mxu0
  %v3191 = vadd.f32 0.0, %v3190
  %v3192 = vpop.f32.mrb[0].mxu0
  %v3193 = vadd.f32 0.0, %v3192
  %v3194 = vpop.f32.mrb[0].mxu0
  %v3195 = vpop.f32.mrb[0].mxu0
  %3196 = vdwg.mxu0
  %3197 = vmatprep.subr.bf16.mxu0 %v1064
  %3198 = vmatpush1.bf16.msra.mxu0 %v1063
  %3199 = vmatprep.subr.bf16.mxu0 %v1068
  %3200 = vmatpush1.bf16.msra.mxu0 %v1067
  %3201 = vmatprep.subr.bf16.mxu0 %v1072
  %3202 = vmatpush1.bf16.msra.mxu0 %v1071
  %3203 = vmatprep.subr.bf16.mxu0 %v1076
  %3204 = vmatpush1.bf16.msra.mxu0 %v1075
  %3205 = vmatprep.subr.bf16.mxu0 %v1080
  %3206 = vmatpush1.bf16.msra.mxu0 %v1079
  %3207 = vmatprep.subr.bf16.mxu0 %v1084
  %3208 = vmatpush1.bf16.msra.mxu0 %v1083
  %3209 = vmatprep.subr.bf16.mxu0 %v1088
  %3210 = vmatpush1.bf16.msra.mxu0 %v1087
  %3211 = vmatprep.subr.bf16.mxu0 %v1092
  %3212 = vmatpush1.bf16.msra.mxu0 %v1091
  %3213 = vmatprep.subr.bf16.mxu0 0
  %3214 = vmatpush1.bf16.msra.mxu0 0
  %3215 = vmatprep.subr.bf16.mxu0 0
  %3216 = vmatpush1.bf16.msra.mxu0 0
  %3217 = vmatprep.subr.bf16.mxu0 0
  %3218 = vmatpush1.bf16.msra.mxu0 0
  %3219 = vmatprep.subr.bf16.mxu0 0
  %3220 = vmatpush1.bf16.msra.mxu0 0
  %3221 = vmatprep.subr.bf16.mxu0 0
  %3222 = vmatpush1.bf16.msra.mxu0 0
  %3223 = vmatprep.subr.bf16.mxu0 0
  %3224 = vmatpush1.bf16.msra.mxu0 0
  %3225 = vmatprep.subr.bf16.mxu0 0
  %3226 = vmatpush1.bf16.msra.mxu0 0
  %3227 = vmatprep.subr.bf16.mxu0 0
  %3228 = vmatpush1.bf16.msra.mxu0 0
  %3229 = vmatprep.mubr.bf16.mxu0 0
  %3230 = vmatmul.mubr.bf16.gmra.mrb[0].mxu0 %v3155
  %v3231 = vpop.f32.mrb[0].mxu0
  %v3232 = vadd.f32 0.0, %v3231
  %v3233 = vpop.f32.mrb[0].mxu0
  %v3234 = vadd.f32 0.0, %v3233
  %v3235 = vpop.f32.mrb[0].mxu0
  %v3236 = vpop.f32.mrb[0].mxu0
  %3237 = vdwg.mxu0
  %3238 = vmatprep.subr.bf16.mxu0 %v1304
  %3239 = vmatpush1.bf16.msra.mxu0 %v1303
  %3240 = vmatprep.subr.bf16.mxu0 %v1308
  %3241 = vmatpush1.bf16.msra.mxu0 %v1307
  %3242 = vmatprep.subr.bf16.mxu0 %v1312
  %3243 = vmatpush1.bf16.msra.mxu0 %v1311
  %3244 = vmatprep.subr.bf16.mxu0 %v1316
  %3245 = vmatpush1.bf16.msra.mxu0 %v1315
  %3246 = vmatprep.subr.bf16.mxu0 %v1320
  %3247 = vmatpush1.bf16.msra.mxu0 %v1319
  %3248 = vmatprep.subr.bf16.mxu0 %v1324
  %3249 = vmatpush1.bf16.msra.mxu0 %v1323
  %3250 = vmatprep.subr.bf16.mxu0 %v1328
  %3251 = vmatpush1.bf16.msra.mxu0 %v1327
  %3252 = vmatprep.subr.bf16.mxu0 %v1332
  %3253 = vmatpush1.bf16.msra.mxu0 %v1331
  %3254 = vmatprep.subr.bf16.mxu0 0
  %3255 = vmatpush1.bf16.msra.mxu0 0
  %3256 = vmatprep.subr.bf16.mxu0 0
  %3257 = vmatpush1.bf16.msra.mxu0 0
  %3258 = vmatprep.subr.bf16.mxu0 0
  %3259 = vmatpush1.bf16.msra.mxu0 0
  %3260 = vmatprep.subr.bf16.mxu0 0
  %3261 = vmatpush1.bf16.msra.mxu0 0
  %3262 = vmatprep.subr.bf16.mxu0 0
  %3263 = vmatpush1.bf16.msra.mxu0 0
  %3264 = vmatprep.subr.bf16.mxu0 0
  %3265 = vmatpush1.bf16.msra.mxu0 0
  %3266 = vmatprep.subr.bf16.mxu0 0
  %3267 = vmatpush1.bf16.msra.mxu0 0
  %3268 = vmatprep.subr.bf16.mxu0 0
  %3269 = vmatpush1.bf16.msra.mxu0 0
  %3270 = vmatprep.mubr.bf16.mxu0 0
  %3271 = vmatmul.mubr.bf16.gmra.mrb[0].mxu0 %v3154
  %v3272 = vpop.f32.mrb[0].mxu0
  %v3273 = vadd.f32 %v3191, %v3272
  %v3274 = vpop.f32.mrb[0].mxu0
  %v3275 = vadd.f32 %v3193, %v3274
  %v3276 = vpop.f32.mrb[0].mxu0
  %v3277 = vpop.f32.mrb[0].mxu0
  %3278 = vdwg.mxu0
  %3279 = vmatprep.subr.bf16.mxu0 %v1306
  %3280 = vmatpush1.bf16.msra.mxu0 %v1305
  %3281 = vmatprep.subr.bf16.mxu0 %v1310
  %3282 = vmatpush1.bf16.msra.mxu0 %v1309
  %3283 = vmatprep.subr.bf16.mxu0 %v1314
  %3284 = vmatpush1.bf16.msra.mxu0 %v1313
  %3285 = vmatprep.subr.bf16.mxu0 %v1318
  %3286 = vmatpush1.bf16.msra.mxu0 %v1317
  %3287 = vmatprep.subr.bf16.mxu0 %v1322
  %3288 = vmatpush1.bf16.msra.mxu0 %v1321
  %3289 = vmatprep.subr.bf16.mxu0 %v1326
  %3290 = vmatpush1.bf16.msra.mxu0 %v1325
  %3291 = vmatprep.subr.bf16.mxu0 %v1330
  %3292 = vmatpush1.bf16.msra.mxu0 %v1329
  %3293 = vmatprep.subr.bf16.mxu0 %v1334
  %3294 = vmatpush1.bf16.msra.mxu0 %v1333
  %3295 = vmatprep.subr.bf16.mxu0 0
  %3296 = vmatpush1.bf16.msra.mxu0 0
  %3297 = vmatprep.subr.bf16.mxu0 0
  %3298 = vmatpush1.bf16.msra.mxu0 0
  %3299 = vmatprep.subr.bf16.mxu0 0
  %3300 = vmatpush1.bf16.msra.mxu0 0
  %3301 = vmatprep.subr.bf16.mxu0 0
  %3302 = vmatpush1.bf16.msra.mxu0 0
  %3303 = vmatprep.subr.bf16.mxu0 0
  %3304 = vmatpush1.bf16.msra.mxu0 0
  %3305 = vmatprep.subr.bf16.mxu0 0
  %3306 = vmatpush1.bf16.msra.mxu0 0
  %3307 = vmatprep.subr.bf16.mxu0 0
  %3308 = vmatpush1.bf16.msra.mxu0 0
  %3309 = vmatprep.subr.bf16.mxu0 0
  %3310 = vmatpush1.bf16.msra.mxu0 0
  %3311 = vmatprep.mubr.bf16.mxu0 0
  %3312 = vmatmul.mubr.bf16.gmra.mrb[0].mxu0 %v3154
  %v3313 = vpop.f32.mrb[0].mxu0
  %v3314 = vadd.f32 %v3232, %v3313
  %v3315 = vpop.f32.mrb[0].mxu0
  %v3316 = vadd.f32 %v3234, %v3315
  %v3317 = vpop.f32.mrb[0].mxu0
  %v3318 = vpop.f32.mrb[0].mxu0
  %3319 = vdwg.mxu0
  %v3320 = vadd.f32 %v3273, %v1455
  %v3321 = vadd.f32 %v3275, %v1459
  %v3322 = vadd.f32 %v3314, %v1463
  %v3323 = vadd.f32 %v3316, %v1467
  %v3324 = vxor.u32 %v3320, 2147483648
  %v3325 = vmul.f32 %v3324, 1.442695
  %v3326 = vpow.pop %v3325
  %v3327 = vadd.f32 %v3326, 1.0
  %v3328 = vrcp.pop %v3327
  %v3329 = vmul.f32 1.0, %v3328
  %v3330 = vxor.u32 %v3321, 2147483648
  %v3331 = vmul.f32 %v3330, 1.442695
  %v3332 = vpow.pop %v3331
  %v3333 = vadd.f32 %v3332, 1.0
  %v3334 = vrcp.pop %v3333
  %v3335 = vmul.f32 1.0, %v3334
  %v3336 = vtanh.pop %v3322
  %v3337 = vxor.u32 %v3323, 2147483648
  %v3338 = vmul.f32 %v3337, 1.442695
  %v3339 = vpow.pop %v3338
  %v3340 = vadd.f32 %v3339, 1.0
  %v3341 = vrcp.pop %v3340
  %v3342 = vmul.f32 1.0, %v3341
  %v3343 = vmul.f32 %v3335, %v3037
  %v3344 = vmul.f32 %v3329, %v3336
  %v3345 = vadd.f32 %v3343, %v3344
  %v3346 = vtanh.pop %v3345
  %v3347 = vmul.f32 %v3342, %v3346
  %v3348 = vld [vmem:[#allocation2 + $0xe0] sm:$0xff]
  %v3349 = vld [vmem:[#allocation2 + $0xe8] sm:$0xff]
  %v3350 = vld [vmem:[#allocation2 + $0xf0] sm:$0xff]
  %v3351 = vld [vmem:[#allocation2 + $0xf8] sm:$0xff]
  %3352 = vmatprep.subr.bf16.mxu0 %v726
  %3353 = vmatpush1.bf16.msra.mxu0 %v725
  %3354 = vmatprep.subr.bf16.mxu0 %v730
  %3355 = vmatpush1.bf16.msra.mxu0 %v729
  %3356 = vmatprep.subr.bf16.mxu0 %v734
  %3357 = vmatpush1.bf16.msra.mxu0 %v733
  %3358 = vmatprep.subr.bf16.mxu0 %v738
  %3359 = vmatpush1.bf16.msra.mxu0 %v737
  %3360 = vmatprep.subr.bf16.mxu0 %v742
  %3361 = vmatpush1.bf16.msra.mxu0 %v741
  %3362 = vmatprep.subr.bf16.mxu0 %v746
  %3363 = vmatpush1.bf16.msra.mxu0 %v745
  %3364 = vmatprep.subr.bf16.mxu0 %v750
  %3365 = vmatpush1.bf16.msra.mxu0 %v749
  %3366 = vmatprep.subr.bf16.mxu0 %v754
  %3367 = vmatpush1.bf16.msra.mxu0 %v753
  %3368 = vmatprep.subr.bf16.mxu0 0
  %3369 = vmatpush1.bf16.msra.mxu0 0
  %3370 = vmatprep.subr.bf16.mxu0 0
  %3371 = vmatpush1.bf16.msra.mxu0 0
  %3372 = vmatprep.subr.bf16.mxu0 0
  %3373 = vmatpush1.bf16.msra.mxu0 0
  %3374 = vmatprep.subr.bf16.mxu0 0
  %3375 = vmatpush1.bf16.msra.mxu0 0
  %3376 = vmatprep.subr.bf16.mxu0 0
  %3377 = vmatpush1.bf16.msra.mxu0 0
  %3378 = vmatprep.subr.bf16.mxu0 0
  %3379 = vmatpush1.bf16.msra.mxu0 0
  %3380 = vmatprep.subr.bf16.mxu0 0
  %3381 = vmatpush1.bf16.msra.mxu0 0
  %3382 = vmatprep.subr.bf16.mxu0 0
  %3383 = vmatpush1.bf16.msra.mxu0 0
  %3384 = vmatprep.mubr.bf16.mxu0 0
  %3385 = vmatmul.mubr.bf16.gmra.mrb[0].mxu0 %v3154
  %v3386 = vpop.f32.mrb[0].mxu0
  %v3387 = vadd.f32 0.0, %v3386
  %v3388 = vpop.f32.mrb[0].mxu0
  %v3389 = vadd.f32 0.0, %v3388
  %v3390 = vpop.f32.mrb[0].mxu0
  %v3391 = vpop.f32.mrb[0].mxu0
  %3392 = vdwg.mxu0
  %3393 = vmatprep.subr.bf16.mxu0 %v728
  %3394 = vmatpush1.bf16.msra.mxu0 %v727
  %3395 = vmatprep.subr.bf16.mxu0 %v732
  %3396 = vmatpush1.bf16.msra.mxu0 %v731
  %3397 = vmatprep.subr.bf16.mxu0 %v736
  %3398 = vmatpush1.bf16.msra.mxu0 %v735
  %3399 = vmatprep.subr.bf16.mxu0 %v740
  %3400 = vmatpush1.bf16.msra.mxu0 %v739
  %3401 = vmatprep.subr.bf16.mxu0 %v744
  %3402 = vmatpush1.bf16.msra.mxu0 %v743
  %3403 = vmatprep.subr.bf16.mxu0 %v748
  %3404 = vmatpush1.bf16.msra.mxu0 %v747
  %3405 = vmatprep.subr.bf16.mxu0 %v752
  %3406 = vmatpush1.bf16.msra.mxu0 %v751
  %3407 = vmatprep.subr.bf16.mxu0 %v756
  %3408 = vmatpush1.bf16.msra.mxu0 %v755
  %3409 = vmatprep.subr.bf16.mxu0 0
  %3410 = vmatpush1.bf16.msra.mxu0 0
  %3411 = vmatprep.subr.bf16.mxu0 0
  %3412 = vmatpush1.bf16.msra.mxu0 0
  %3413 = vmatprep.subr.bf16.mxu0 0
  %3414 = vmatpush1.bf16.msra.mxu0 0
  %3415 = vmatprep.subr.bf16.mxu0 0
  %3416 = vmatpush1.bf16.msra.mxu0 0
  %3417 = vmatprep.subr.bf16.mxu0 0
  %3418 = vmatpush1.bf16.msra.mxu0 0
  %3419 = vmatprep.subr.bf16.mxu0 0
  %3420 = vmatpush1.bf16.msra.mxu0 0
  %3421 = vmatprep.subr.bf16.mxu0 0
  %3422 = vmatpush1.bf16.msra.mxu0 0
  %3423 = vmatprep.subr.bf16.mxu0 0
  %3424 = vmatpush1.bf16.msra.mxu0 0
  %3425 = vmatprep.mubr.bf16.mxu0 0
  %3426 = vmatmul.mubr.bf16.gmra.mrb[0].mxu0 %v3154
  %v3427 = vpop.f32.mrb[0].mxu0
  %v3428 = vadd.f32 0.0, %v3427
  %v3429 = vpop.f32.mrb[0].mxu0
  %v3430 = vadd.f32 0.0, %v3429
  %v3431 = vpop.f32.mrb[0].mxu0
  %v3432 = vpop.f32.mrb[0].mxu0
  %3433 = vdwg.mxu0
  %v3434 = vadd.f32 %v3348, %v3387
  %v3435 = vadd.f32 %v3349, %v3389
  %v3436 = vadd.f32 %v3350, %v3428
  %v3437 = vadd.f32 %v3351, %v3430
  %v3438 = vxor.u32 %v3434, 2147483648
  %v3439 = vmul.f32 %v3438, 1.442695
  %v3440 = vpow.pop %v3439
  %v3441 = vadd.f32 %v3440, 1.0
  %v3442 = vrcp.pop %v3441
  %v3443 = vmul.f32 1.0, %v3442
  %v3444 = vxor.u32 %v3435, 2147483648
  %v3445 = vmul.f32 %v3444, 1.442695
  %v3446 = vpow.pop %v3445
  %v3447 = vadd.f32 %v3446, 1.0
  %v3448 = vrcp.pop %v3447
  %v3449 = vmul.f32 1.0, %v3448
  %v3450 = vtanh.pop %v3436
  %v3451 = vxor.u32 %v3437, 2147483648
  %v3452 = vmul.f32 %v3451, 1.442695
  %v3453 = vpow.pop %v3452
  %v3454 = vadd.f32 %v3453, 1.0
  %v3455 = vrcp.pop %v3454
  %v3456 = vmul.f32 1.0, %v3455
  %v3457 = vmul.f32 %v3449, %v3151
  %v3458 = vmul.f32 %v3443, %v3450
  %v3459 = vadd.f32 %v3457, %v3458
  %v3460 = vtanh.pop %v3459
  %v3461 = vmul.f32 %v3456, %v3460
  %v3462 = vpack.c.bf16 %v3461, %v3461
  %v3463 = vpack.c.bf16 %v3347, %v3347
  %3464 = vmatprep.subr.bf16.mxu0 %v1062
  %3465 = vmatpush1.bf16.msra.mxu0 %v1061
  %3466 = vmatprep.subr.bf16.mxu0 %v1066
  %3467 = vmatpush1.bf16.msra.mxu0 %v1065
  %3468 = vmatprep.subr.bf16.mxu0 %v1070
  %3469 = vmatpush1.bf16.msra.mxu0 %v1069
  %3470 = vmatprep.subr.bf16.mxu0 %v1074
  %3471 = vmatpush1.bf16.msra.mxu0 %v1073
  %3472 = vmatprep.subr.bf16.mxu0 %v1078
  %3473 = vmatpush1.bf16.msra.mxu0 %v1077
  %3474 = vmatprep.subr.bf16.mxu0 %v1082
  %3475 = vmatpush1.bf16.msra.mxu0 %v1081
  %3476 = vmatprep.subr.bf16.mxu0 %v1086
  %3477 = vmatpush1.bf16.msra.mxu0 %v1085
  %3478 = vmatprep.subr.bf16.mxu0 %v1090
  %3479 = vmatpush1.bf16.msra.mxu0 %v1089
  %3480 = vmatprep.subr.bf16.mxu0 0
  %3481 = vmatpush1.bf16.msra.mxu0 0
  %3482 = vmatprep.subr.bf16.mxu0 0
  %3483 = vmatpush1.bf16.msra.mxu0 0
  %3484 = vmatprep.subr.bf16.mxu0 0
  %3485 = vmatpush1.bf16.msra.mxu0 0
  %3486 = vmatprep.subr.bf16.mxu0 0
  %3487 = vmatpush1.bf16.msra.mxu0 0
  %3488 = vmatprep.subr.bf16.mxu0 0
  %3489 = vmatpush1.bf16.msra.mxu0 0
  %3490 = vmatprep.subr.bf16.mxu0 0
  %3491 = vmatpush1.bf16.msra.mxu0 0
  %3492 = vmatprep.subr.bf16.mxu0 0
  %3493 = vmatpush1.bf16.msra.mxu0 0
  %3494 = vmatprep.subr.bf16.mxu0 0
  %3495 = vmatpush1.bf16.msra.mxu0 0
  %3496 = vmatprep.mubr.bf16.mxu0 0
  %3497 = vmatmul.mubr.bf16.gmra.mrb[0].mxu0 %v3463
  %v3498 = vpop.f32.mrb[0].mxu0
  %v3499 = vadd.f32 0.0, %v3498
  %v3500 = vpop.f32.mrb[0].mxu0
  %v3501 = vadd.f32 0.0, %v3500
  %v3502 = vpop.f32.mrb[0].mxu0
  %v3503 = vpop.f32.mrb[0].mxu0
  %3504 = vdwg.mxu0
  %3505 = vmatprep.subr.bf16.mxu0 %v1064
  %3506 = vmatpush1.bf16.msra.mxu0 %v1063
  %3507 = vmatprep.subr.bf16.mxu0 %v1068
  %3508 = vmatpush1.bf16.msra.mxu0 %v1067
  %3509 = vmatprep.subr.bf16.mxu0 %v1072
  %3510 = vmatpush1.bf16.msra.mxu0 %v1071
  %3511 = vmatprep.subr.bf16.mxu0 %v1076
  %3512 = vmatpush1.bf16.msra.mxu0 %v1075
  %3513 = vmatprep.subr.bf16.mxu0 %v1080
  %3514 = vmatpush1.bf16.msra.mxu0 %v1079
  %3515 = vmatprep.subr.bf16.mxu0 %v1084
  %3516 = vmatpush1.bf16.msra.mxu0 %v1083
  %3517 = vmatprep.subr.bf16.mxu0 %v1088
  %3518 = vmatpush1.bf16.msra.mxu0 %v1087
  %3519 = vmatprep.subr.bf16.mxu0 %v1092
  %3520 = vmatpush1.bf16.msra.mxu0 %v1091
  %3521 = vmatprep.subr.bf16.mxu0 0
  %3522 = vmatpush1.bf16.msra.mxu0 0
  %3523 = vmatprep.subr.bf16.mxu0 0
  %3524 = vmatpush1.bf16.msra.mxu0 0
  %3525 = vmatprep.subr.bf16.mxu0 0
  %3526 = vmatpush1.bf16.msra.mxu0 0
  %3527 = vmatprep.subr.bf16.mxu0 0
  %3528 = vmatpush1.bf16.msra.mxu0 0
  %3529 = vmatprep.subr.bf16.mxu0 0
  %3530 = vmatpush1.bf16.msra.mxu0 0
  %3531 = vmatprep.subr.bf16.mxu0 0
  %3532 = vmatpush1.bf16.msra.mxu0 0
  %3533 = vmatprep.subr.bf16.mxu0 0
  %3534 = vmatpush1.bf16.msra.mxu0 0
  %3535 = vmatprep.subr.bf16.mxu0 0
  %3536 = vmatpush1.bf16.msra.mxu0 0
  %3537 = vmatprep.mubr.bf16.mxu0 0
  %3538 = vmatmul.mubr.bf16.gmra.mrb[0].mxu0 %v3463
  %v3539 = vpop.f32.mrb[0].mxu0
  %v3540 = vadd.f32 0.0, %v3539
  %v3541 = vpop.f32.mrb[0].mxu0
  %v3542 = vadd.f32 0.0, %v3541
  %v3543 = vpop.f32.mrb[0].mxu0
  %v3544 = vpop.f32.mrb[0].mxu0
  %3545 = vdwg.mxu0
  %3546 = vmatprep.subr.bf16.mxu0 %v1304
  %3547 = vmatpush1.bf16.msra.mxu0 %v1303
  %3548 = vmatprep.subr.bf16.mxu0 %v1308
  %3549 = vmatpush1.bf16.msra.mxu0 %v1307
  %3550 = vmatprep.subr.bf16.mxu0 %v1312
  %3551 = vmatpush1.bf16.msra.mxu0 %v1311
  %3552 = vmatprep.subr.bf16.mxu0 %v1316
  %3553 = vmatpush1.bf16.msra.mxu0 %v1315
  %3554 = vmatprep.subr.bf16.mxu0 %v1320
  %3555 = vmatpush1.bf16.msra.mxu0 %v1319
  %3556 = vmatprep.subr.bf16.mxu0 %v1324
  %3557 = vmatpush1.bf16.msra.mxu0 %v1323
  %3558 = vmatprep.subr.bf16.mxu0 %v1328
  %3559 = vmatpush1.bf16.msra.mxu0 %v1327
  %3560 = vmatprep.subr.bf16.mxu0 %v1332
  %3561 = vmatpush1.bf16.msra.mxu0 %v1331
  %3562 = vmatprep.subr.bf16.mxu0 0
  %3563 = vmatpush1.bf16.msra.mxu0 0
  %3564 = vmatprep.subr.bf16.mxu0 0
  %3565 = vmatpush1.bf16.msra.mxu0 0
  %3566 = vmatprep.subr.bf16.mxu0 0
  %3567 = vmatpush1.bf16.msra.mxu0 0
  %3568 = vmatprep.subr.bf16.mxu0 0
  %3569 = vmatpush1.bf16.msra.mxu0 0
  %3570 = vmatprep.subr.bf16.mxu0 0
  %3571 = vmatpush1.bf16.msra.mxu0 0
  %3572 = vmatprep.subr.bf16.mxu0 0
  %3573 = vmatpush1.bf16.msra.mxu0 0
  %3574 = vmatprep.subr.bf16.mxu0 0
  %3575 = vmatpush1.bf16.msra.mxu0 0
  %3576 = vmatprep.subr.bf16.mxu0 0
  %3577 = vmatpush1.bf16.msra.mxu0 0
  %3578 = vmatprep.mubr.bf16.mxu0 0
  %3579 = vmatmul.mubr.bf16.gmra.mrb[0].mxu0 %v3462
  %v3580 = vpop.f32.mrb[0].mxu0
  %v3581 = vadd.f32 %v3499, %v3580
  %v3582 = vpop.f32.mrb[0].mxu0
  %v3583 = vadd.f32 %v3501, %v3582
  %v3584 = vpop.f32.mrb[0].mxu0
  %v3585 = vpop.f32.mrb[0].mxu0
  %3586 = vdwg.mxu0
  %3587 = vmatprep.subr.bf16.mxu0 %v1306
  %3588 = vmatpush1.bf16.msra.mxu0 %v1305
  %3589 = vmatprep.subr.bf16.mxu0 %v1310
  %3590 = vmatpush1.bf16.msra.mxu0 %v1309
  %3591 = vmatprep.subr.bf16.mxu0 %v1314
  %3592 = vmatpush1.bf16.msra.mxu0 %v1313
  %3593 = vmatprep.subr.bf16.mxu0 %v1318
  %3594 = vmatpush1.bf16.msra.mxu0 %v1317
  %3595 = vmatprep.subr.bf16.mxu0 %v1322
  %3596 = vmatpush1.bf16.msra.mxu0 %v1321
  %3597 = vmatprep.subr.bf16.mxu0 %v1326
  %3598 = vmatpush1.bf16.msra.mxu0 %v1325
  %3599 = vmatprep.subr.bf16.mxu0 %v1330
  %3600 = vmatpush1.bf16.msra.mxu0 %v1329
  %3601 = vmatprep.subr.bf16.mxu0 %v1334
  %3602 = vmatpush1.bf16.msra.mxu0 %v1333
  %3603 = vmatprep.subr.bf16.mxu0 0
  %3604 = vmatpush1.bf16.msra.mxu0 0
  %3605 = vmatprep.subr.bf16.mxu0 0
  %3606 = vmatpush1.bf16.msra.mxu0 0
  %3607 = vmatprep.subr.bf16.mxu0 0
  %3608 = vmatpush1.bf16.msra.mxu0 0
  %3609 = vmatprep.subr.bf16.mxu0 0
  %3610 = vmatpush1.bf16.msra.mxu0 0
  %3611 = vmatprep.subr.bf16.mxu0 0
  %3612 = vmatpush1.bf16.msra.mxu0 0
  %3613 = vmatprep.subr.bf16.mxu0 0
  %3614 = vmatpush1.bf16.msra.mxu0 0
  %3615 = vmatprep.subr.bf16.mxu0 0
  %3616 = vmatpush1.bf16.msra.mxu0 0
  %3617 = vmatprep.subr.bf16.mxu0 0
  %3618 = vmatpush1.bf16.msra.mxu0 0
  %3619 = vmatprep.mubr.bf16.mxu0 0
  %3620 = vmatmul.mubr.bf16.gmra.mrb[0].mxu0 %v3462
  %v3621 = vpop.f32.mrb[0].mxu0
  %v3622 = vadd.f32 %v3540, %v3621
  %v3623 = vpop.f32.mrb[0].mxu0
  %v3624 = vadd.f32 %v3542, %v3623
  %v3625 = vpop.f32.mrb[0].mxu0
  %v3626 = vpop.f32.mrb[0].mxu0
  %3627 = vdwg.mxu0
  %v3628 = vadd.f32 %v3581, %v1455
  %v3629 = vadd.f32 %v3583, %v1459
  %v3630 = vadd.f32 %v3622, %v1463
  %v3631 = vadd.f32 %v3624, %v1467
  %v3632 = vxor.u32 %v3628, 2147483648
  %v3633 = vmul.f32 %v3632, 1.442695
  %v3634 = vpow.pop %v3633
  %v3635 = vadd.f32 %v3634, 1.0
  %v3636 = vrcp.pop %v3635
  %v3637 = vmul.f32 1.0, %v3636
  %v3638 = vxor.u32 %v3629, 2147483648
  %v3639 = vmul.f32 %v3638, 1.442695
  %v3640 = vpow.pop %v3639
  %v3641 = vadd.f32 %v3640, 1.0
  %v3642 = vrcp.pop %v3641
  %v3643 = vmul.f32 1.0, %v3642
  %v3644 = vtanh.pop %v3630
  %v3645 = vxor.u32 %v3631, 2147483648
  %v3646 = vmul.f32 %v3645, 1.442695
  %v3647 = vpow.pop %v3646
  %v3648 = vadd.f32 %v3647, 1.0
  %v3649 = vrcp.pop %v3648
  %v3650 = vmul.f32 1.0, %v3649
  %v3651 = vmul.f32 %v3643, %v3345
  %v3652 = vmul.f32 %v3637, %v3644
  %v3653 = vadd.f32 %v3651, %v3652
  %v3654 = vtanh.pop %v3653
  %v3655 = vmul.f32 %v3650, %v3654
  %v3656 = vpack.c.bf16 %v3655, %v3655
  %v3657 = vld [vmem:[%s6] sm:$0xf]
  %v3658 = vld [vmem:[%s6 + $0x4] sm:$0xf]
  %v3659 = vld [vmem:[%s6 + $0x8] sm:$0xf]
  %v3660 = vld [vmem:[%s6 + $0xc] sm:$0xf]
  %v3661 = vld [vmem:[%s6 + $0x10] sm:$0xf]
  %v3662 = vld [vmem:[%s6 + $0x14] sm:$0xf]
  %v3663 = vld [vmem:[%s6 + $0x18] sm:$0xf]
  %v3664 = vld [vmem:[%s6 + $0x1c] sm:$0xf]
  %v3665 = vld [vmem:[%s6 + $0x20] sm:$0xf]
  %v3666 = vld [vmem:[%s6 + $0x24] sm:$0xf]
  %v3667 = vld [vmem:[%s6 + $0x28] sm:$0xf]
  %v3668 = vld [vmem:[%s6 + $0x2c] sm:$0xf]
  %v3669 = vld [vmem:[%s6 + $0x30] sm:$0xf]
  %v3670 = vld [vmem:[%s6 + $0x34] sm:$0xf]
  %v3671 = vld [vmem:[%s6 + $0x38] sm:$0xf]
  %v3672 = vld [vmem:[%s6 + $0x3c] sm:$0xf]
  %v3673 = vld [vmem:[%s7] sm:$0x1]
  %v3675 = vlaneseq
  %v3676 = vshrl.u32 %v3675, 7
  %v3677 = vsub.s32 0, %v3676
  %v3678 = vrot.slane %v3673, %v3677
  %v3696 = vunpack.c.l.b16 %v3657
  %v3697 = vunpack.c.l.b16 %v3658
  %v3698 = vunpack.c.l.b16 %v3659
  %v3699 = vunpack.c.l.b16 %v3660
  %v3700 = vunpack.c.l.b16 %v3661
  %v3701 = vunpack.c.l.b16 %v3662
  %v3702 = vunpack.c.l.b16 %v3663
  %v3703 = vunpack.c.l.b16 %v3664
  %v3704 = vunpack.c.l.b16 %v3665
  %v3705 = vunpack.c.l.b16 %v3666
  %v3706 = vunpack.c.l.b16 %v3667
  %v3707 = vunpack.c.l.b16 %v3668
  %v3708 = vunpack.c.l.b16 %v3669
  %v3709 = vunpack.c.l.b16 %v3670
  %v3710 = vunpack.c.l.b16 %v3671
  %v3711 = vunpack.c.l.b16 %v3672
  %v3712 = vpack.c.b16 %v3697, %v3696
  %v3713 = vpack.c.b16 %v3699, %v3698
  %v3714 = vpack.c.b16 %v3701, %v3700
  %v3715 = vpack.c.b16 %v3703, %v3702
  %v3716 = vpack.c.b16 %v3705, %v3704
  %v3717 = vpack.c.b16 %v3707, %v3706
  %v3718 = vpack.c.b16 %v3709, %v3708
  %v3719 = vpack.c.b16 %v3711, %v3710
  %3728 = vmatprep.subr.bf16.mxu0 0
  %3729 = vmatpush1.bf16.msra.mxu0 %v3712
  %3730 = vmatprep.subr.bf16.mxu0 0
  %3731 = vmatpush1.bf16.msra.mxu0 %v3713
  %3732 = vmatprep.subr.bf16.mxu0 0
  %3733 = vmatpush1.bf16.msra.mxu0 %v3714
  %3734 = vmatprep.subr.bf16.mxu0 0
  %3735 = vmatpush1.bf16.msra.mxu0 %v3715
  %3736 = vmatprep.subr.bf16.mxu0 0
  %3737 = vmatpush1.bf16.msra.mxu0 %v3716
  %3738 = vmatprep.subr.bf16.mxu0 0
  %3739 = vmatpush1.bf16.msra.mxu0 %v3717
  %3740 = vmatprep.subr.bf16.mxu0 0
  %3741 = vmatpush1.bf16.msra.mxu0 %v3718
  %3742 = vmatprep.subr.bf16.mxu0 0
  %3743 = vmatpush1.bf16.msra.mxu0 %v3719
  %3744 = vmatprep.subr.bf16.mxu0 0
  %3745 = vmatpush1.bf16.msra.mxu0 0
  %3746 = vmatprep.subr.bf16.mxu0 0
  %3747 = vmatpush1.bf16.msra.mxu0 0
  %3748 = vmatprep.subr.bf16.mxu0 0
  %3749 = vmatpush1.bf16.msra.mxu0 0
  %3750 = vmatprep.subr.bf16.mxu0 0
  %3751 = vmatpush1.bf16.msra.mxu0 0
  %3752 = vmatprep.subr.bf16.mxu0 0
  %3753 = vmatpush1.bf16.msra.mxu0 0
  %3754 = vmatprep.subr.bf16.mxu0 0
  %3755 = vmatpush1.bf16.msra.mxu0 0
  %3756 = vmatprep.subr.bf16.mxu0 0
  %3757 = vmatpush1.bf16.msra.mxu0 0
  %3758 = vmatprep.subr.bf16.mxu0 0
  %3759 = vmatpush1.bf16.msra.mxu0 0
  %3760 = vmatprep.mubr.bf16.mxu0 0
  %3761 = vmatmul.mubr.bf16.gmra.mrb[0].mxu0 %v3656
  %v3762 = vpop.f32.mrb[0].mxu0
  %v3763 = vadd.f32 %v3678, %v3762
  %v3764 = vpop.f32.mrb[0].mxu0
  %v3765 = vpop.f32.mrb[0].mxu0
  %v3766 = vpop.f32.mrb[0].mxu0
  %3767 = vdwg.mxu0
  %3768 = vst [vmem:[%s8] sm:$0xff] %v3763
  // Predicated region
  $region34: #{emojifier_forward.1} parent=0 // pred_check
    _
  $region35: #{emojifier_forward.1} parent=0 // pred_check_branch
    %3770 = sbr.rel (0) target = $region37
  $region36: #{emojifier_forward.1} parent=0 // pred_region
    _
  $region37: #{emojifier_forward.1} parent=0 // pred_fallthru
    _
  // Predicated region
  $region38: #{emojifier_forward.1} parent=0 // pred_check
    _
  $region39: #{emojifier_forward.1} parent=0 // pred_check_branch
    %3772 = sbr.rel (0) target = $region41
  $region40: #{emojifier_forward.1} parent=0 // pred_region
    _
  $region41: #{emojifier_forward.1} parent=0 // pred_fallthru
    _

</llo_original>
